<compile_context>
chip_gen: v7x
topology: tpu7x:2x2x1
jax: 0.10.0
libtpu: 0.0.40
codegen_flags: <defaults>
</compile_context>

<pallas_src>
import math

import numpy as np
import jax
import jax.numpy as jnp
from jax import lax
from jax.experimental import pallas as pl
from jax.experimental.pallas import tpu as pltpu

# Model configuration (PyTorch module with projection_dim=32, num_heads=4, ff_dim=64,
# num_trans_blocks=4, mlp_units=[256]).
EMBED_DIM = 32
NUM_HEADS = 4
HEAD_DIM = EMBED_DIM // NUM_HEADS
FF_DIM = 64
NUM_BLOCKS = 4
MLP_DIM = 256
SEQ = 8
BATCH = 2
LN_EPS = 1e-5

M = BATCH * SEQ                 # batch folded into the matmul M dimension = 16
BHS = BATCH * NUM_HEADS * SEQ   # batch+head expanded key/value rows = 64


def _layernorm(x, gamma, beta):
    # var = E[x^2] - mu^2: the two reductions are independent (pipeline on the XLU).
    mu = jnp.mean(x, axis=-1, keepdims=True)
    ms = jnp.mean(x * x, axis=-1, keepdims=True)
    var = ms - mu * mu
    return (x - mu) * lax.rsqrt(var + LN_EPS) * gamma + beta


# --------------------------------------------------------------------------------------------
# Fused kernel: projection -> 4x transformer block -> mean pool -> MLP head
# --------------------------------------------------------------------------------------------
def fused_tst_kernel(x_ref, wq_ref, wk_ref, wv_ref, wo_ref, w1_ref, w2_ref, vec_ref,
                     ex_ref, hm_ref, nm_ref, so_ref, pm_ref, ht_ref, o_ref):
    expand = ex_ref[...]      # (BHS, M)  row (b,h,j) selects flattened row b*S+j
    head_mask = hm_ref[...]   # (BHS, E)  zeroes channels outside head h of row (b,h,j)
    neg_mask = nm_ref[...]    # (M, BHS)  -1e9 on cross-batch score columns, 0 otherwise
    seg_ones = so_ref[...]    # (BHS, BHS) head-block-diagonal ones -> per-head softmax sums
    pool_mat = pm_ref[...]    # (B, M)    mean-over-sequence matrix

    ht = ht_ref[...]                                       # (E+4, MLP) head/tail slab
    wm1 = ht[0:EMBED_DIM, :]                               # (E, MLP)  mlp Linear1 weight.T
    bm1 = ht[EMBED_DIM:EMBED_DIM + 1, :]                   # (1, MLP)
    wm2 = ht[EMBED_DIM + 1:EMBED_DIM + 2, :]               # (1, MLP)  mlp Linear2 weight row
    wp = ht[EMBED_DIM + 2:EMBED_DIM + 3, 0:EMBED_DIM]      # (1, E)    projection Linear(1,E) w
    bm2 = ht[EMBED_DIM + 2:EMBED_DIM + 3, EMBED_DIM:EMBED_DIM + 1]   # (1, 1)
    bp = ht[EMBED_DIM + 3:EMBED_DIM + 4, 0:EMBED_DIM]      # (1, E)

    # ---- input projection: Linear(1, E) == broadcast scale + shift --------------------------
    h = x_ref[...] * wp + bp                               # (M, E)

    # ---- transformer blocks (statically unrolled; all weights VMEM-resident) ----------------
    for l in range(NUM_BLOCKS):
        vec = vec_ref[l]                                   # (10, 64) bias / LN slab
        bq = vec[0:1, 0:EMBED_DIM]
        bk = vec[1:2, 0:EMBED_DIM]
        bv = vec[2:3, 0:EMBED_DIM]
        bo = vec[3:4, 0:EMBED_DIM]
        b1 = vec[4:5, 0:FF_DIM]
        b2 = vec[5:6, 0:EMBED_DIM]
        g1 = vec[6:7, 0:EMBED_DIM]
        bt1 = vec[7:8, 0:EMBED_DIM]
        g2 = vec[8:9, 0:EMBED_DIM]
        bt2 = vec[9:10, 0:EMBED_DIM]

        # ---- multi-head self-attention, fully batch+head flattened (2-D ops only) -----------
        q = jnp.dot(h, wq_ref[l], preferred_element_type=jnp.float32) + bq      # (M, E), scaled
        he = jnp.dot(expand, h, preferred_element_type=jnp.float32)             # (BHS, E)
        ke = (jnp.dot(he, wk_ref[l], preferred_element_type=jnp.float32) + bk) * head_mask
        ve = (jnp.dot(he, wv_ref[l], preferred_element_type=jnp.float32) + bv) * head_mask

        # Scores: one NT matmul over all batches/heads; cross-batch columns masked additively.
        s = lax.dot_general(q, ke, (((1,), (1,)), ((), ())),
                            preferred_element_type=jnp.float32) + neg_mask      # (M, BHS)
        # Row-global max is shift-invariant per head segment; masked columns underflow to 0.
        p = jnp.exp(s - jnp.max(s, axis=-1, keepdims=True))
        denom = jnp.dot(p, seg_ones, preferred_element_type=jnp.float32)        # per-head sums
        pn = p * pl.reciprocal(denom, approx=True)                              # EUP divide
        a = jnp.dot(pn, ve, preferred_element_type=jnp.float32)                 # (M, E)
        attn = jnp.dot(a, wo_ref[l], preferred_element_type=jnp.float32) + bo

        h = _layernorm(h + attn, g1, bt1)

        # ---- feed-forward: Conv1d(k=1) -> ReLU -> Conv1d(k=1) == two pointwise NN matmuls ----
        ff = jnp.maximum(jnp.dot(h, w1_ref[l], preferred_element_type=jnp.float32) + b1, 0.0)
        ff = jnp.dot(ff, w2_ref[l], preferred_element_type=jnp.float32) + b2    # (M, E)
        h = _layernorm(h + ff, g2, bt2)

    # ---- global average pool over sequence (as a tiny matmul) + MLP head --------------------
    pooled = jnp.dot(pool_mat, h, preferred_element_type=jnp.float32)           # (B, E)
    z = jnp.maximum(jnp.dot(pooled, wm1, preferred_element_type=jnp.float32) + bm1, 0.0)
    o_ref[...] = jnp.sum(z * wm2, axis=-1, keepdims=True) + bm2                 # (B, 1)


@jax.jit
def tst_forward(x, packed):
    """x: (B, S, 1) -> (B, 1). Entire module in one grid-less pallas_call, operands in VMEM."""
    x2 = x.reshape(BATCH * SEQ, 1)    # fold batch into the matmul M dimension (wrapper glue)
    n_in = 1 + len(packed)
    return pl.pallas_call(
        fused_tst_kernel,
        out_shape=jax.ShapeDtypeStruct((BATCH, 1), jnp.float32),
        in_specs=[pl.BlockSpec(memory_space=pltpu.MemorySpace.VMEM) for _ in range(n_in)],
        out_specs=pl.BlockSpec(memory_space=pltpu.MemorySpace.VMEM),
    )(x2, *packed)


# --------------------------------------------------------------------------------------------
# Parameter construction / packing (host-side glue, not the hot path)
# --------------------------------------------------------------------------------------------
def init_raw_params(key):
    """Deterministic synthetic parameters with the PyTorch module's shapes."""
    sc = 0.05
    keys = jax.random.split(key, 6 + NUM_BLOCKS)
    raw = {
        'proj_w': sc * jax.random.normal(keys[0], (EMBED_DIM, 1), jnp.float32),  # Linear(1,E).weight
        'proj_b': sc * jax.random.normal(keys[1], (EMBED_DIM,), jnp.float32),
        'mlp1_w': sc * jax.random.normal(keys[2], (MLP_DIM, EMBED_DIM), jnp.float32),
        'mlp1_b': sc * jax.random.normal(keys[3], (MLP_DIM,), jnp.float32),
        'mlp2_w': sc * jax.random.normal(keys[4], (1, MLP_DIM), jnp.float32),
        'mlp2_b': sc * jax.random.normal(keys[5], (1,), jnp.float32),
    }
    blocks = []
    for l in range(NUM_BLOCKS):
        bk = jax.random.split(keys[6 + l], 8)
        blocks.append(dict(
            in_proj_weight=sc * jax.random.normal(bk[0], (3 * EMBED_DIM, EMBED_DIM), jnp.float32),
            in_proj_bias=sc * jax.random.normal(bk[1], (3 * EMBED_DIM,), jnp.float32),
            out_proj_weight=sc * jax.random.normal(bk[2], (EMBED_DIM, EMBED_DIM), jnp.float32),
            out_proj_bias=sc * jax.random.normal(bk[3], (EMBED_DIM,), jnp.float32),
            conv1_w=sc * jax.random.normal(bk[4], (FF_DIM, EMBED_DIM, 1), jnp.float32),
            conv1_b=sc * jax.random.normal(bk[5], (FF_DIM,), jnp.float32),
            conv2_w=sc * jax.random.normal(bk[6], (EMBED_DIM, FF_DIM, 1), jnp.float32),
            conv2_b=sc * jax.random.normal(bk[7], (EMBED_DIM,), jnp.float32),
            ln1_g=jnp.ones((EMBED_DIM,), jnp.float32),
            ln1_b=jnp.zeros((EMBED_DIM,), jnp.float32),
            ln2_g=jnp.ones((EMBED_DIM,), jnp.float32),
            ln2_b=jnp.zeros((EMBED_DIM,), jnp.float32),
        ))
    raw['blocks'] = blocks
    return raw


def pack_params(raw):
    """Pack parameters into separate well-shaped slabs; fold the attention scale into Q."""
    scale = 1.0 / math.sqrt(HEAD_DIM)

    wq = np.zeros((NUM_BLOCKS, EMBED_DIM, EMBED_DIM), np.float32)
    wk = np.zeros_like(wq)
    wv = np.zeros_like(wq)
    wo = np.zeros_like(wq)
    w1 = np.zeros((NUM_BLOCKS, EMBED_DIM, FF_DIM), np.float32)
    w2 = np.zeros((NUM_BLOCKS, FF_DIM, EMBED_DIM), np.float32)   # conv2 stored untransposed (F, E)
    vecs = np.zeros((NUM_BLOCKS, 10, FF_DIM), np.float32)
    for l, p in enumerate(raw['blocks']):
        ipw = np.asarray(p['in_proj_weight'])     # (3E, E)
        ipb = np.asarray(p['in_proj_bias'])       # (3E,)
        wq[l] = ipw[0:EMBED_DIM].T * scale        # fold 1/sqrt(Hd) into Q weight
        wk[l] = ipw[EMBED_DIM:2 * EMBED_DIM].T
        wv[l] = ipw[2 * EMBED_DIM:3 * EMBED_DIM].T
        wo[l] = np.asarray(p['out_proj_weight']).T
        w1[l] = np.asarray(p['conv1_w'])[:, :, 0].T   # (E, F)
        w2[l] = np.asarray(p['conv2_w'])[:, :, 0].T   # (F, E) -> plain NN matmul in kernel
        vecs[l, 0, :EMBED_DIM] = ipb[0:EMBED_DIM] * scale   # fold scale into Q bias too
        vecs[l, 1, :EMBED_DIM] = ipb[EMBED_DIM:2 * EMBED_DIM]
        vecs[l, 2, :EMBED_DIM] = ipb[2 * EMBED_DIM:3 * EMBED_DIM]
        vecs[l, 3, :EMBED_DIM] = np.asarray(p['out_proj_bias'])
        vecs[l, 4, :FF_DIM] = np.asarray(p['conv1_b'])
        vecs[l, 5, :EMBED_DIM] = np.asarray(p['conv2_b'])
        vecs[l, 6, :EMBED_DIM] = np.asarray(p['ln1_g'])
        vecs[l, 7, :EMBED_DIM] = np.asarray(p['ln1_b'])
        vecs[l, 8, :EMBED_DIM] = np.asarray(p['ln2_g'])
        vecs[l, 9, :EMBED_DIM] = np.asarray(p['ln2_b'])

    # Attention constants for the batch+head-flattened formulation.
    c = np.arange(BHS)
    d = np.arange(EMBED_DIM)
    m = np.arange(M)
    head_of_c = (c // SEQ) % NUM_HEADS
    batch_of_c = c // (NUM_HEADS * SEQ)
    seq_of_c = c % SEQ

    expand = ((batch_of_c[:, None] == (m[None, :] // SEQ)) &
              (seq_of_c[:, None] == (m[None, :] % SEQ))).astype(np.float32)         # (BHS, M)
    head_mask = (head_of_c[:, None] == (d[None, :] // HEAD_DIM)).astype(np.float32)  # (BHS, E)
    neg_mask = np.where((m[:, None] // SEQ) == batch_of_c[None, :],
                        0.0, -1e9).astype(np.float32)                                # (M, BHS)
    seg_ones = (head_of_c[:, None] == head_of_c[None, :]).astype(np.float32)         # (BHS, BHS)
    pool_mat = ((m[None, :] // SEQ) ==
                np.arange(BATCH)[:, None]).astype(np.float32) / SEQ                  # (B, M)

    # Head/tail slab: projection + MLP parameters.
    ht = np.zeros((EMBED_DIM + 4, MLP_DIM), np.float32)
    ht[0:EMBED_DIM, :] = np.asarray(raw['mlp1_w']).T                # (E, MLP)
    ht[EMBED_DIM, :] = np.asarray(raw['mlp1_b'])
    ht[EMBED_DIM + 1, :] = np.asarray(raw['mlp2_w'])[0]
    ht[EMBED_DIM + 2, 0:EMBED_DIM] = np.asarray(raw['proj_w'])[:, 0]
    ht[EMBED_DIM + 2, EMBED_DIM] = float(np.asarray(raw['mlp2_b'])[0])
    ht[EMBED_DIM + 3, 0:EMBED_DIM] = np.asarray(raw['proj_b'])

    arrays = (wq, wk, wv, wo, w1, w2, vecs,
              expand, head_mask, neg_mask, seg_ones, pool_mat, ht)
    return tuple(jnp.asarray(a) for a in arrays)


# --------------------------------------------------------------------------------------------
# Pure-JAX reference (PyTorch eval-mode semantics) for a numerical cross-check
# --------------------------------------------------------------------------------------------
def reference_forward(x, raw):
    scale = 1.0 / math.sqrt(HEAD_DIM)
    h = x @ raw['proj_w'].T + raw['proj_b']                       # (B, S, E)
    B_, S_, E_ = h.shape
    for p in raw['blocks']:
        h2 = h.reshape(B_ * S_, E_)
        qkv = h2 @ p['in_proj_weight'].T + p['in_proj_bias']
        q, k, v = jnp.split(qkv, 3, axis=-1)
        q = q * scale

        def heads(t):
            return t.reshape(B_, S_, NUM_HEADS, HEAD_DIM).transpose(0, 2, 1, 3)

        qh, kh, vh = heads(q), heads(k), heads(v)
        s = jnp.einsum('bhqd,bhkd->bhqk', qh, kh)
        attnw = jax.nn.softmax(s, axis=-1)
        o = jnp.einsum('bhqk,bhkd->bhqd', attnw, vh)
        o = o.transpose(0, 2, 1, 3).reshape(B_ * S_, E_)
        attn = o @ p['out_proj_weight'].T + p['out_proj_bias']
        h2 = _layernorm(h2 + attn, p['ln1_g'], p['ln1_b'])
        ff = jnp.maximum(h2 @ p['conv1_w'][:, :, 0].T + p['conv1_b'], 0.0)
        ff = ff @ p['conv2_w'][:, :, 0].T + p['conv2_b']
        h2 = _layernorm(h2 + ff, p['ln2_g'], p['ln2_b'])
        h = h2.reshape(B_, S_, E_)
    pooled = jnp.mean(h, axis=1)                                  # (B, E)
    z = jnp.maximum(pooled @ raw['mlp1_w'].T + raw['mlp1_b'], 0.0)
    return z @ raw['mlp2_w'].T + raw['mlp2_b']                    # (B, 1)


if __name__ == "__main__":
    key = jax.random.PRNGKey(0)
    kx, kp = jax.random.split(key)
    x = jax.random.normal(kx, (BATCH, SEQ, 1), jnp.float32)       # (B, S, 1) time series
    raw = init_raw_params(kp)
    packed = pack_params(raw)

    out = tst_forward(x, packed)
    jax.block_until_ready(out)
    assert out.shape == (BATCH, 1)

    # Cross-check vs. pure-JAX reference (tolerance covers the approx softmax reciprocal).
    with jax.default_matmul_precision("highest"):
        ref = reference_forward(x, raw)
    np.testing.assert_allclose(np.asarray(out), np.asarray(ref), atol=2e-2, rtol=2e-2)

    print("KERNEL_OK")
</pallas_src>

<mosaic_0001>
module attributes {stable_mosaic.version = 11 : i64} {
  func.func @fused_tst_kernel(%arg0: memref<16x1xf32, #tpu.memory_space<vmem>>, %arg1: memref<4x32x32xf32, #tpu.memory_space<vmem>>, %arg2: memref<4x32x32xf32, #tpu.memory_space<vmem>>, %arg3: memref<4x32x32xf32, #tpu.memory_space<vmem>>, %arg4: memref<4x32x32xf32, #tpu.memory_space<vmem>>, %arg5: memref<4x32x64xf32, #tpu.memory_space<vmem>>, %arg6: memref<4x64x32xf32, #tpu.memory_space<vmem>>, %arg7: memref<4x10x64xf32, #tpu.memory_space<vmem>>, %arg8: memref<64x16xf32, #tpu.memory_space<vmem>>, %arg9: memref<64x32xf32, #tpu.memory_space<vmem>>, %arg10: memref<16x64xf32, #tpu.memory_space<vmem>>, %arg11: memref<64x64xf32, #tpu.memory_space<vmem>>, %arg12: memref<2x16xf32, #tpu.memory_space<vmem>>, %arg13: memref<36x256xf32, #tpu.memory_space<vmem>>, %arg14: memref<2x1xf32, #tpu.memory_space<vmem>>) attributes {dimension_semantics = [], scalar_prefetch = 0 : i64, scratch_operands = 0 : i64, tpu.core_type = #tpu.core_type<tc>} {
    %c0 = arith.constant 0 : index
    %c0_0 = arith.constant 0 : index
    %0 = vector.load %arg8[%c0, %c0_0] : memref<64x16xf32, #tpu.memory_space<vmem>>, vector<64x16xf32>
    %c0_1 = arith.constant 0 : index
    %c0_2 = arith.constant 0 : index
    %1 = vector.load %arg9[%c0_1, %c0_2] : memref<64x32xf32, #tpu.memory_space<vmem>>, vector<64x32xf32>
    %c0_3 = arith.constant 0 : index
    %c0_4 = arith.constant 0 : index
    %2 = vector.load %arg10[%c0_3, %c0_4] : memref<16x64xf32, #tpu.memory_space<vmem>>, vector<16x64xf32>
    %c0_5 = arith.constant 0 : index
    %c0_6 = arith.constant 0 : index
    %3 = vector.load %arg11[%c0_5, %c0_6] : memref<64x64xf32, #tpu.memory_space<vmem>>, vector<64x64xf32>
    %c0_7 = arith.constant 0 : index
    %c0_8 = arith.constant 0 : index
    %4 = vector.load %arg12[%c0_7, %c0_8] : memref<2x16xf32, #tpu.memory_space<vmem>>, vector<2x16xf32>
    %c0_9 = arith.constant 0 : index
    %c0_10 = arith.constant 0 : index
    %5 = vector.load %arg13[%c0_9, %c0_10] : memref<36x256xf32, #tpu.memory_space<vmem>>, vector<36x256xf32>
    %6 = vector.extract_strided_slice %5 {offsets = [0, 0], sizes = [32, 256], strides = [1, 1]} : vector<36x256xf32> to vector<32x256xf32>
    %7 = vector.extract_strided_slice %5 {offsets = [32, 0], sizes = [1, 256], strides = [1, 1]} : vector<36x256xf32> to vector<1x256xf32>
    %8 = vector.extract_strided_slice %5 {offsets = [33, 0], sizes = [1, 256], strides = [1, 1]} : vector<36x256xf32> to vector<1x256xf32>
    %9 = vector.extract_strided_slice %5 {offsets = [34, 0], sizes = [1, 32], strides = [1, 1]} : vector<36x256xf32> to vector<1x32xf32>
    %10 = vector.extract_strided_slice %5 {offsets = [34, 32], sizes = [1, 1], strides = [1, 1]} : vector<36x256xf32> to vector<1x1xf32>
    %11 = vector.extract_strided_slice %5 {offsets = [35, 0], sizes = [1, 32], strides = [1, 1]} : vector<36x256xf32> to vector<1x32xf32>
    %c0_11 = arith.constant 0 : index
    %c0_12 = arith.constant 0 : index
    %12 = vector.load %arg0[%c0_11, %c0_12] : memref<16x1xf32, #tpu.memory_space<vmem>>, vector<16x1xf32>
    %13 = vector.broadcast %12 : vector<16x1xf32> to vector<16x32xf32>
    %14 = vector.broadcast %9 : vector<1x32xf32> to vector<16x32xf32>
    %15 = arith.mulf %13, %14 : vector<16x32xf32>
    %16 = vector.broadcast %11 : vector<1x32xf32> to vector<16x32xf32>
    %17 = arith.addf %15, %16 : vector<16x32xf32>
    %c0_13 = arith.constant 0 : index
    %c0_14 = arith.constant 0 : index
    %c0_15 = arith.constant 0 : index
    %18 = vector.load %arg7[%c0_13, %c0_14, %c0_15] : memref<4x10x64xf32, #tpu.memory_space<vmem>>, vector<1x10x64xf32>
    %19 = vector.shape_cast %18 : vector<1x10x64xf32> to vector<10x64xf32>
    %20 = vector.extract_strided_slice %19 {offsets = [0, 0], sizes = [1, 32], strides = [1, 1]} : vector<10x64xf32> to vector<1x32xf32>
    %21 = vector.extract_strided_slice %19 {offsets = [1, 0], sizes = [1, 32], strides = [1, 1]} : vector<10x64xf32> to vector<1x32xf32>
    %22 = vector.extract_strided_slice %19 {offsets = [2, 0], sizes = [1, 32], strides = [1, 1]} : vector<10x64xf32> to vector<1x32xf32>
    %23 = vector.extract_strided_slice %19 {offsets = [3, 0], sizes = [1, 32], strides = [1, 1]} : vector<10x64xf32> to vector<1x32xf32>
    %24 = vector.extract_strided_slice %19 {offsets = [4, 0], sizes = [1, 64], strides = [1, 1]} : vector<10x64xf32> to vector<1x64xf32>
    %25 = vector.extract_strided_slice %19 {offsets = [5, 0], sizes = [1, 32], strides = [1, 1]} : vector<10x64xf32> to vector<1x32xf32>
    %26 = vector.extract_strided_slice %19 {offsets = [6, 0], sizes = [1, 32], strides = [1, 1]} : vector<10x64xf32> to vector<1x32xf32>
    %27 = vector.extract_strided_slice %19 {offsets = [7, 0], sizes = [1, 32], strides = [1, 1]} : vector<10x64xf32> to vector<1x32xf32>
    %28 = vector.extract_strided_slice %19 {offsets = [8, 0], sizes = [1, 32], strides = [1, 1]} : vector<10x64xf32> to vector<1x32xf32>
    %29 = vector.extract_strided_slice %19 {offsets = [9, 0], sizes = [1, 32], strides = [1, 1]} : vector<10x64xf32> to vector<1x32xf32>
    %c0_16 = arith.constant 0 : index
    %c0_17 = arith.constant 0 : index
    %c0_18 = arith.constant 0 : index
    %30 = vector.load %arg1[%c0_16, %c0_17, %c0_18] : memref<4x32x32xf32, #tpu.memory_space<vmem>>, vector<1x32x32xf32>
    %31 = vector.shape_cast %30 : vector<1x32x32xf32> to vector<32x32xf32>
    %cst = arith.constant dense<0.000000e+00> : vector<16x32xf32>
    %32 = tpu.matmul %17, %31, %cst {dimension_numbers = #tpu.dot_dimension_numbers<[1], [0], [0], [1], [0, 0, 1, 1], [], []>} : vector<16x32xf32>, vector<32x32xf32>, vector<16x32xf32> -> vector<16x32xf32>
    %33 = vector.broadcast %20 : vector<1x32xf32> to vector<16x32xf32>
    %34 = arith.addf %32, %33 : vector<16x32xf32>
    %cst_19 = arith.constant dense<0.000000e+00> : vector<64x32xf32>
    %35 = tpu.matmul %0, %17, %cst_19 {dimension_numbers = #tpu.dot_dimension_numbers<[1], [0], [0], [1], [0, 0, 1, 1], [], []>} : vector<64x16xf32>, vector<16x32xf32>, vector<64x32xf32> -> vector<64x32xf32>
    %c0_20 = arith.constant 0 : index
    %c0_21 = arith.constant 0 : index
    %c0_22 = arith.constant 0 : index
    %36 = vector.load %arg2[%c0_20, %c0_21, %c0_22] : memref<4x32x32xf32, #tpu.memory_space<vmem>>, vector<1x32x32xf32>
    %37 = vector.shape_cast %36 : vector<1x32x32xf32> to vector<32x32xf32>
    %cst_23 = arith.constant dense<0.000000e+00> : vector<64x32xf32>
    %38 = tpu.matmul %35, %37, %cst_23 {dimension_numbers = #tpu.dot_dimension_numbers<[1], [0], [0], [1], [0, 0, 1, 1], [], []>} : vector<64x32xf32>, vector<32x32xf32>, vector<64x32xf32> -> vector<64x32xf32>
    %39 = vector.broadcast %21 : vector<1x32xf32> to vector<64x32xf32>
    %40 = arith.addf %38, %39 : vector<64x32xf32>
    %41 = arith.mulf %40, %1 : vector<64x32xf32>
    %c0_24 = arith.constant 0 : index
    %c0_25 = arith.constant 0 : index
    %c0_26 = arith.constant 0 : index
    %42 = vector.load %arg3[%c0_24, %c0_25, %c0_26] : memref<4x32x32xf32, #tpu.memory_space<vmem>>, vector<1x32x32xf32>
    %43 = vector.shape_cast %42 : vector<1x32x32xf32> to vector<32x32xf32>
    %cst_27 = arith.constant dense<0.000000e+00> : vector<64x32xf32>
    %44 = tpu.matmul %35, %43, %cst_27 {dimension_numbers = #tpu.dot_dimension_numbers<[1], [0], [0], [1], [0, 0, 1, 1], [], []>} : vector<64x32xf32>, vector<32x32xf32>, vector<64x32xf32> -> vector<64x32xf32>
    %45 = vector.broadcast %22 : vector<1x32xf32> to vector<64x32xf32>
    %46 = arith.addf %44, %45 : vector<64x32xf32>
    %47 = arith.mulf %46, %1 : vector<64x32xf32>
    %cst_28 = arith.constant dense<0.000000e+00> : vector<16x64xf32>
    %48 = tpu.matmul %34, %41, %cst_28 {dimension_numbers = #tpu.dot_dimension_numbers<[1], [1], [0], [0], [0, 0, 1, 0], [], []>} : vector<16x32xf32>, vector<64x32xf32>, vector<16x64xf32> -> vector<16x64xf32>
    %49 = arith.addf %48, %2 : vector<16x64xf32>
    %cst_29 = arith.constant dense<0xFF800000> : vector<16xf32>
    %50 = vector.multi_reduction <maximumf>, %49, %cst_29 [1] : vector<16x64xf32> to vector<16xf32>
    %51 = vector.shape_cast %50 : vector<16xf32> to vector<16x1xf32>
    %52 = vector.broadcast %51 : vector<16x1xf32> to vector<16x64xf32>
    %53 = arith.subf %49, %52 : vector<16x64xf32>
    %54 = math.exp %53 : vector<16x64xf32>
    %cst_30 = arith.constant dense<0.000000e+00> : vector<16x64xf32>
    %55 = tpu.matmul %54, %3, %cst_30 {dimension_numbers = #tpu.dot_dimension_numbers<[1], [0], [0], [1], [0, 0, 1, 1], [], []>} : vector<16x64xf32>, vector<64x64xf32>, vector<16x64xf32> -> vector<16x64xf32>
    %56 = tpu.reciprocal %55 {approx = true} : vector<16x64xf32> -> vector<16x64xf32>
    %57 = arith.mulf %54, %56 : vector<16x64xf32>
    %cst_31 = arith.constant dense<0.000000e+00> : vector<16x32xf32>
    %58 = tpu.matmul %57, %47, %cst_31 {dimension_numbers = #tpu.dot_dimension_numbers<[1], [0], [0], [1], [0, 0, 1, 1], [], []>} : vector<16x64xf32>, vector<64x32xf32>, vector<16x32xf32> -> vector<16x32xf32>
    %c0_32 = arith.constant 0 : index
    %c0_33 = arith.constant 0 : index
    %c0_34 = arith.constant 0 : index
    %59 = vector.load %arg4[%c0_32, %c0_33, %c0_34] : memref<4x32x32xf32, #tpu.memory_space<vmem>>, vector<1x32x32xf32>
    %60 = vector.shape_cast %59 : vector<1x32x32xf32> to vector<32x32xf32>
    %cst_35 = arith.constant dense<0.000000e+00> : vector<16x32xf32>
    %61 = tpu.matmul %58, %60, %cst_35 {dimension_numbers = #tpu.dot_dimension_numbers<[1], [0], [0], [1], [0, 0, 1, 1], [], []>} : vector<16x32xf32>, vector<32x32xf32>, vector<16x32xf32> -> vector<16x32xf32>
    %62 = vector.broadcast %23 : vector<1x32xf32> to vector<16x32xf32>
    %63 = arith.addf %61, %62 : vector<16x32xf32>
    %64 = arith.addf %17, %63 : vector<16x32xf32>
    %cst_36 = arith.constant dense<0.000000e+00> : vector<16xf32>
    %65 = vector.multi_reduction <add>, %64, %cst_36 [1] : vector<16x32xf32> to vector<16xf32>
    %66 = vector.shape_cast %65 : vector<16xf32> to vector<16x1xf32>
    %cst_37 = arith.constant 3.200000e+01 : f32
    %67 = vector.broadcast %cst_37 : f32 to vector<16x1xf32>
    %68 = arith.divf %66, %67 : vector<16x1xf32>
    %69 = arith.mulf %64, %64 : vector<16x32xf32>
    %cst_38 = arith.constant dense<0.000000e+00> : vector<16xf32>
    %70 = vector.multi_reduction <add>, %69, %cst_38 [1] : vector<16x32xf32> to vector<16xf32>
    %71 = vector.shape_cast %70 : vector<16xf32> to vector<16x1xf32>
    %cst_39 = arith.constant 3.200000e+01 : f32
    %72 = vector.broadcast %cst_39 : f32 to vector<16x1xf32>
    %73 = arith.divf %71, %72 : vector<16x1xf32>
    %74 = arith.mulf %68, %68 : vector<16x1xf32>
    %75 = arith.subf %73, %74 : vector<16x1xf32>
    %76 = vector.broadcast %68 : vector<16x1xf32> to vector<16x32xf32>
    %77 = arith.subf %64, %76 : vector<16x32xf32>
    %cst_40 = arith.constant 9.99999974E-6 : f32
    %78 = vector.broadcast %cst_40 : f32 to vector<16x1xf32>
    %79 = arith.addf %75, %78 : vector<16x1xf32>
    %80 = math.rsqrt %79 : vector<16x1xf32>
    %81 = vector.broadcast %80 : vector<16x1xf32> to vector<16x32xf32>
    %82 = arith.mulf %77, %81 : vector<16x32xf32>
    %83 = vector.broadcast %26 : vector<1x32xf32> to vector<16x32xf32>
    %84 = arith.mulf %82, %83 : vector<16x32xf32>
    %85 = vector.broadcast %27 : vector<1x32xf32> to vector<16x32xf32>
    %86 = arith.addf %84, %85 : vector<16x32xf32>
    %c0_41 = arith.constant 0 : index
    %c0_42 = arith.constant 0 : index
    %c0_43 = arith.constant 0 : index
    %87 = vector.load %arg5[%c0_41, %c0_42, %c0_43] : memref<4x32x64xf32, #tpu.memory_space<vmem>>, vector<1x32x64xf32>
    %88 = vector.shape_cast %87 : vector<1x32x64xf32> to vector<32x64xf32>
    %cst_44 = arith.constant dense<0.000000e+00> : vector<16x64xf32>
    %89 = tpu.matmul %86, %88, %cst_44 {dimension_numbers = #tpu.dot_dimension_numbers<[1], [0], [0], [1], [0, 0, 1, 1], [], []>} : vector<16x32xf32>, vector<32x64xf32>, vector<16x64xf32> -> vector<16x64xf32>
    %90 = vector.broadcast %24 : vector<1x64xf32> to vector<16x64xf32>
    %91 = arith.addf %89, %90 : vector<16x64xf32>
    %cst_45 = arith.constant 0.000000e+00 : f32
    %92 = vector.broadcast %cst_45 : f32 to vector<16x64xf32>
    %93 = arith.maximumf %91, %92 : vector<16x64xf32>
    %c0_46 = arith.constant 0 : index
    %c0_47 = arith.constant 0 : index
    %c0_48 = arith.constant 0 : index
    %94 = vector.load %arg6[%c0_46, %c0_47, %c0_48] : memref<4x64x32xf32, #tpu.memory_space<vmem>>, vector<1x64x32xf32>
    %95 = vector.shape_cast %94 : vector<1x64x32xf32> to vector<64x32xf32>
    %cst_49 = arith.constant dense<0.000000e+00> : vector<16x32xf32>
    %96 = tpu.matmul %93, %95, %cst_49 {dimension_numbers = #tpu.dot_dimension_numbers<[1], [0], [0], [1], [0, 0, 1, 1], [], []>} : vector<16x64xf32>, vector<64x32xf32>, vector<16x32xf32> -> vector<16x32xf32>
    %97 = vector.broadcast %25 : vector<1x32xf32> to vector<16x32xf32>
    %98 = arith.addf %96, %97 : vector<16x32xf32>
    %99 = arith.addf %86, %98 : vector<16x32xf32>
    %cst_50 = arith.constant dense<0.000000e+00> : vector<16xf32>
    %100 = vector.multi_reduction <add>, %99, %cst_50 [1] : vector<16x32xf32> to vector<16xf32>
    %101 = vector.shape_cast %100 : vector<16xf32> to vector<16x1xf32>
    %cst_51 = arith.constant 3.200000e+01 : f32
    %102 = vector.broadcast %cst_51 : f32 to vector<16x1xf32>
    %103 = arith.divf %101, %102 : vector<16x1xf32>
    %104 = arith.mulf %99, %99 : vector<16x32xf32>
    %cst_52 = arith.constant dense<0.000000e+00> : vector<16xf32>
    %105 = vector.multi_reduction <add>, %104, %cst_52 [1] : vector<16x32xf32> to vector<16xf32>
    %106 = vector.shape_cast %105 : vector<16xf32> to vector<16x1xf32>
    %cst_53 = arith.constant 3.200000e+01 : f32
    %107 = vector.broadcast %cst_53 : f32 to vector<16x1xf32>
    %108 = arith.divf %106, %107 : vector<16x1xf32>
    %109 = arith.mulf %103, %103 : vector<16x1xf32>
    %110 = arith.subf %108, %109 : vector<16x1xf32>
    %111 = vector.broadcast %103 : vector<16x1xf32> to vector<16x32xf32>
    %112 = arith.subf %99, %111 : vector<16x32xf32>
    %cst_54 = arith.constant 9.99999974E-6 : f32
    %113 = vector.broadcast %cst_54 : f32 to vector<16x1xf32>
    %114 = arith.addf %110, %113 : vector<16x1xf32>
    %115 = math.rsqrt %114 : vector<16x1xf32>
    %116 = vector.broadcast %115 : vector<16x1xf32> to vector<16x32xf32>
    %117 = arith.mulf %112, %116 : vector<16x32xf32>
    %118 = vector.broadcast %28 : vector<1x32xf32> to vector<16x32xf32>
    %119 = arith.mulf %117, %118 : vector<16x32xf32>
    %120 = vector.broadcast %29 : vector<1x32xf32> to vector<16x32xf32>
    %121 = arith.addf %119, %120 : vector<16x32xf32>
    %c1 = arith.constant 1 : index
    %c0_55 = arith.constant 0 : index
    %c0_56 = arith.constant 0 : index
    %122 = vector.load %arg7[%c1, %c0_55, %c0_56] : memref<4x10x64xf32, #tpu.memory_space<vmem>>, vector<1x10x64xf32>
    %123 = vector.shape_cast %122 : vector<1x10x64xf32> to vector<10x64xf32>
    %124 = vector.extract_strided_slice %123 {offsets = [0, 0], sizes = [1, 32], strides = [1, 1]} : vector<10x64xf32> to vector<1x32xf32>
    %125 = vector.extract_strided_slice %123 {offsets = [1, 0], sizes = [1, 32], strides = [1, 1]} : vector<10x64xf32> to vector<1x32xf32>
    %126 = vector.extract_strided_slice %123 {offsets = [2, 0], sizes = [1, 32], strides = [1, 1]} : vector<10x64xf32> to vector<1x32xf32>
    %127 = vector.extract_strided_slice %123 {offsets = [3, 0], sizes = [1, 32], strides = [1, 1]} : vector<10x64xf32> to vector<1x32xf32>
    %128 = vector.extract_strided_slice %123 {offsets = [4, 0], sizes = [1, 64], strides = [1, 1]} : vector<10x64xf32> to vector<1x64xf32>
    %129 = vector.extract_strided_slice %123 {offsets = [5, 0], sizes = [1, 32], strides = [1, 1]} : vector<10x64xf32> to vector<1x32xf32>
    %130 = vector.extract_strided_slice %123 {offsets = [6, 0], sizes = [1, 32], strides = [1, 1]} : vector<10x64xf32> to vector<1x32xf32>
    %131 = vector.extract_strided_slice %123 {offsets = [7, 0], sizes = [1, 32], strides = [1, 1]} : vector<10x64xf32> to vector<1x32xf32>
    %132 = vector.extract_strided_slice %123 {offsets = [8, 0], sizes = [1, 32], strides = [1, 1]} : vector<10x64xf32> to vector<1x32xf32>
    %133 = vector.extract_strided_slice %123 {offsets = [9, 0], sizes = [1, 32], strides = [1, 1]} : vector<10x64xf32> to vector<1x32xf32>
    %c1_57 = arith.constant 1 : index
    %c0_58 = arith.constant 0 : index
    %c0_59 = arith.constant 0 : index
    %134 = vector.load %arg1[%c1_57, %c0_58, %c0_59] : memref<4x32x32xf32, #tpu.memory_space<vmem>>, vector<1x32x32xf32>
    %135 = vector.shape_cast %134 : vector<1x32x32xf32> to vector<32x32xf32>
    %cst_60 = arith.constant dense<0.000000e+00> : vector<16x32xf32>
    %136 = tpu.matmul %121, %135, %cst_60 {dimension_numbers = #tpu.dot_dimension_numbers<[1], [0], [0], [1], [0, 0, 1, 1], [], []>} : vector<16x32xf32>, vector<32x32xf32>, vector<16x32xf32> -> vector<16x32xf32>
    %137 = vector.broadcast %124 : vector<1x32xf32> to vector<16x32xf32>
    %138 = arith.addf %136, %137 : vector<16x32xf32>
    %cst_61 = arith.constant dense<0.000000e+00> : vector<64x32xf32>
    %139 = tpu.matmul %0, %121, %cst_61 {dimension_numbers = #tpu.dot_dimension_numbers<[1], [0], [0], [1], [0, 0, 1, 1], [], []>} : vector<64x16xf32>, vector<16x32xf32>, vector<64x32xf32> -> vector<64x32xf32>
    %c1_62 = arith.constant 1 : index
    %c0_63 = arith.constant 0 : index
    %c0_64 = arith.constant 0 : index
    %140 = vector.load %arg2[%c1_62, %c0_63, %c0_64] : memref<4x32x32xf32, #tpu.memory_space<vmem>>, vector<1x32x32xf32>
    %141 = vector.shape_cast %140 : vector<1x32x32xf32> to vector<32x32xf32>
    %cst_65 = arith.constant dense<0.000000e+00> : vector<64x32xf32>
    %142 = tpu.matmul %139, %141, %cst_65 {dimension_numbers = #tpu.dot_dimension_numbers<[1], [0], [0], [1], [0, 0, 1, 1], [], []>} : vector<64x32xf32>, vector<32x32xf32>, vector<64x32xf32> -> vector<64x32xf32>
    %143 = vector.broadcast %125 : vector<1x32xf32> to vector<64x32xf32>
    %144 = arith.addf %142, %143 : vector<64x32xf32>
    %145 = arith.mulf %144, %1 : vector<64x32xf32>
    %c1_66 = arith.constant 1 : index
    %c0_67 = arith.constant 0 : index
    %c0_68 = arith.constant 0 : index
    %146 = vector.load %arg3[%c1_66, %c0_67, %c0_68] : memref<4x32x32xf32, #tpu.memory_space<vmem>>, vector<1x32x32xf32>
    %147 = vector.shape_cast %146 : vector<1x32x32xf32> to vector<32x32xf32>
    %cst_69 = arith.constant dense<0.000000e+00> : vector<64x32xf32>
    %148 = tpu.matmul %139, %147, %cst_69 {dimension_numbers = #tpu.dot_dimension_numbers<[1], [0], [0], [1], [0, 0, 1, 1], [], []>} : vector<64x32xf32>, vector<32x32xf32>, vector<64x32xf32> -> vector<64x32xf32>
    %149 = vector.broadcast %126 : vector<1x32xf32> to vector<64x32xf32>
    %150 = arith.addf %148, %149 : vector<64x32xf32>
    %151 = arith.mulf %150, %1 : vector<64x32xf32>
    %cst_70 = arith.constant dense<0.000000e+00> : vector<16x64xf32>
    %152 = tpu.matmul %138, %145, %cst_70 {dimension_numbers = #tpu.dot_dimension_numbers<[1], [1], [0], [0], [0, 0, 1, 0], [], []>} : vector<16x32xf32>, vector<64x32xf32>, vector<16x64xf32> -> vector<16x64xf32>
    %153 = arith.addf %152, %2 : vector<16x64xf32>
    %cst_71 = arith.constant dense<0xFF800000> : vector<16xf32>
    %154 = vector.multi_reduction <maximumf>, %153, %cst_71 [1] : vector<16x64xf32> to vector<16xf32>
    %155 = vector.shape_cast %154 : vector<16xf32> to vector<16x1xf32>
    %156 = vector.broadcast %155 : vector<16x1xf32> to vector<16x64xf32>
    %157 = arith.subf %153, %156 : vector<16x64xf32>
    %158 = math.exp %157 : vector<16x64xf32>
    %cst_72 = arith.constant dense<0.000000e+00> : vector<16x64xf32>
    %159 = tpu.matmul %158, %3, %cst_72 {dimension_numbers = #tpu.dot_dimension_numbers<[1], [0], [0], [1], [0, 0, 1, 1], [], []>} : vector<16x64xf32>, vector<64x64xf32>, vector<16x64xf32> -> vector<16x64xf32>
    %160 = tpu.reciprocal %159 {approx = true} : vector<16x64xf32> -> vector<16x64xf32>
    %161 = arith.mulf %158, %160 : vector<16x64xf32>
    %cst_73 = arith.constant dense<0.000000e+00> : vector<16x32xf32>
    %162 = tpu.matmul %161, %151, %cst_73 {dimension_numbers = #tpu.dot_dimension_numbers<[1], [0], [0], [1], [0, 0, 1, 1], [], []>} : vector<16x64xf32>, vector<64x32xf32>, vector<16x32xf32> -> vector<16x32xf32>
    %c1_74 = arith.constant 1 : index
    %c0_75 = arith.constant 0 : index
    %c0_76 = arith.constant 0 : index
    %163 = vector.load %arg4[%c1_74, %c0_75, %c0_76] : memref<4x32x32xf32, #tpu.memory_space<vmem>>, vector<1x32x32xf32>
    %164 = vector.shape_cast %163 : vector<1x32x32xf32> to vector<32x32xf32>
    %cst_77 = arith.constant dense<0.000000e+00> : vector<16x32xf32>
    %165 = tpu.matmul %162, %164, %cst_77 {dimension_numbers = #tpu.dot_dimension_numbers<[1], [0], [0], [1], [0, 0, 1, 1], [], []>} : vector<16x32xf32>, vector<32x32xf32>, vector<16x32xf32> -> vector<16x32xf32>
    %166 = vector.broadcast %127 : vector<1x32xf32> to vector<16x32xf32>
    %167 = arith.addf %165, %166 : vector<16x32xf32>
    %168 = arith.addf %121, %167 : vector<16x32xf32>
    %cst_78 = arith.constant dense<0.000000e+00> : vector<16xf32>
    %169 = vector.multi_reduction <add>, %168, %cst_78 [1] : vector<16x32xf32> to vector<16xf32>
    %170 = vector.shape_cast %169 : vector<16xf32> to vector<16x1xf32>
    %cst_79 = arith.constant 3.200000e+01 : f32
    %171 = vector.broadcast %cst_79 : f32 to vector<16x1xf32>
    %172 = arith.divf %170, %171 : vector<16x1xf32>
    %173 = arith.mulf %168, %168 : vector<16x32xf32>
    %cst_80 = arith.constant dense<0.000000e+00> : vector<16xf32>
    %174 = vector.multi_reduction <add>, %173, %cst_80 [1] : vector<16x32xf32> to vector<16xf32>
    %175 = vector.shape_cast %174 : vector<16xf32> to vector<16x1xf32>
    %cst_81 = arith.constant 3.200000e+01 : f32
    %176 = vector.broadcast %cst_81 : f32 to vector<16x1xf32>
    %177 = arith.divf %175, %176 : vector<16x1xf32>
    %178 = arith.mulf %172, %172 : vector<16x1xf32>
    %179 = arith.subf %177, %178 : vector<16x1xf32>
    %180 = vector.broadcast %172 : vector<16x1xf32> to vector<16x32xf32>
    %181 = arith.subf %168, %180 : vector<16x32xf32>
    %cst_82 = arith.constant 9.99999974E-6 : f32
    %182 = vector.broadcast %cst_82 : f32 to vector<16x1xf32>
    %183 = arith.addf %179, %182 : vector<16x1xf32>
    %184 = math.rsqrt %183 : vector<16x1xf32>
    %185 = vector.broadcast %184 : vector<16x1xf32> to vector<16x32xf32>
    %186 = arith.mulf %181, %185 : vector<16x32xf32>
    %187 = vector.broadcast %130 : vector<1x32xf32> to vector<16x32xf32>
    %188 = arith.mulf %186, %187 : vector<16x32xf32>
    %189 = vector.broadcast %131 : vector<1x32xf32> to vector<16x32xf32>
    %190 = arith.addf %188, %189 : vector<16x32xf32>
    %c1_83 = arith.constant 1 : index
    %c0_84 = arith.constant 0 : index
    %c0_85 = arith.constant 0 : index
    %191 = vector.load %arg5[%c1_83, %c0_84, %c0_85] : memref<4x32x64xf32, #tpu.memory_space<vmem>>, vector<1x32x64xf32>
    %192 = vector.shape_cast %191 : vector<1x32x64xf32> to vector<32x64xf32>
    %cst_86 = arith.constant dense<0.000000e+00> : vector<16x64xf32>
    %193 = tpu.matmul %190, %192, %cst_86 {dimension_numbers = #tpu.dot_dimension_numbers<[1], [0], [0], [1], [0, 0, 1, 1], [], []>} : vector<16x32xf32>, vector<32x64xf32>, vector<16x64xf32> -> vector<16x64xf32>
    %194 = vector.broadcast %128 : vector<1x64xf32> to vector<16x64xf32>
    %195 = arith.addf %193, %194 : vector<16x64xf32>
    %cst_87 = arith.constant 0.000000e+00 : f32
    %196 = vector.broadcast %cst_87 : f32 to vector<16x64xf32>
    %197 = arith.maximumf %195, %196 : vector<16x64xf32>
    %c1_88 = arith.constant 1 : index
    %c0_89 = arith.constant 0 : index
    %c0_90 = arith.constant 0 : index
    %198 = vector.load %arg6[%c1_88, %c0_89, %c0_90] : memref<4x64x32xf32, #tpu.memory_space<vmem>>, vector<1x64x32xf32>
    %199 = vector.shape_cast %198 : vector<1x64x32xf32> to vector<64x32xf32>
    %cst_91 = arith.constant dense<0.000000e+00> : vector<16x32xf32>
    %200 = tpu.matmul %197, %199, %cst_91 {dimension_numbers = #tpu.dot_dimension_numbers<[1], [0], [0], [1], [0, 0, 1, 1], [], []>} : vector<16x64xf32>, vector<64x32xf32>, vector<16x32xf32> -> vector<16x32xf32>
    %201 = vector.broadcast %129 : vector<1x32xf32> to vector<16x32xf32>
    %202 = arith.addf %200, %201 : vector<16x32xf32>
    %203 = arith.addf %190, %202 : vector<16x32xf32>
    %cst_92 = arith.constant dense<0.000000e+00> : vector<16xf32>
    %204 = vector.multi_reduction <add>, %203, %cst_92 [1] : vector<16x32xf32> to vector<16xf32>
    %205 = vector.shape_cast %204 : vector<16xf32> to vector<16x1xf32>
    %cst_93 = arith.constant 3.200000e+01 : f32
    %206 = vector.broadcast %cst_93 : f32 to vector<16x1xf32>
    %207 = arith.divf %205, %206 : vector<16x1xf32>
    %208 = arith.mulf %203, %203 : vector<16x32xf32>
    %cst_94 = arith.constant dense<0.000000e+00> : vector<16xf32>
    %209 = vector.multi_reduction <add>, %208, %cst_94 [1] : vector<16x32xf32> to vector<16xf32>
    %210 = vector.shape_cast %209 : vector<16xf32> to vector<16x1xf32>
    %cst_95 = arith.constant 3.200000e+01 : f32
    %211 = vector.broadcast %cst_95 : f32 to vector<16x1xf32>
    %212 = arith.divf %210, %211 : vector<16x1xf32>
    %213 = arith.mulf %207, %207 : vector<16x1xf32>
    %214 = arith.subf %212, %213 : vector<16x1xf32>
    %215 = vector.broadcast %207 : vector<16x1xf32> to vector<16x32xf32>
    %216 = arith.subf %203, %215 : vector<16x32xf32>
    %cst_96 = arith.constant 9.99999974E-6 : f32
    %217 = vector.broadcast %cst_96 : f32 to vector<16x1xf32>
    %218 = arith.addf %214, %217 : vector<16x1xf32>
    %219 = math.rsqrt %218 : vector<16x1xf32>
    %220 = vector.broadcast %219 : vector<16x1xf32> to vector<16x32xf32>
    %221 = arith.mulf %216, %220 : vector<16x32xf32>
    %222 = vector.broadcast %132 : vector<1x32xf32> to vector<16x32xf32>
    %223 = arith.mulf %221, %222 : vector<16x32xf32>
    %224 = vector.broadcast %133 : vector<1x32xf32> to vector<16x32xf32>
    %225 = arith.addf %223, %224 : vector<16x32xf32>
    %c2 = arith.constant 2 : index
    %c0_97 = arith.constant 0 : index
    %c0_98 = arith.constant 0 : index
    %226 = vector.load %arg7[%c2, %c0_97, %c0_98] : memref<4x10x64xf32, #tpu.memory_space<vmem>>, vector<1x10x64xf32>
    %227 = vector.shape_cast %226 : vector<1x10x64xf32> to vector<10x64xf32>
    %228 = vector.extract_strided_slice %227 {offsets = [0, 0], sizes = [1, 32], strides = [1, 1]} : vector<10x64xf32> to vector<1x32xf32>
    %229 = vector.extract_strided_slice %227 {offsets = [1, 0], sizes = [1, 32], strides = [1, 1]} : vector<10x64xf32> to vector<1x32xf32>
    %230 = vector.extract_strided_slice %227 {offsets = [2, 0], sizes = [1, 32], strides = [1, 1]} : vector<10x64xf32> to vector<1x32xf32>
    %231 = vector.extract_strided_slice %227 {offsets = [3, 0], sizes = [1, 32], strides = [1, 1]} : vector<10x64xf32> to vector<1x32xf32>
    %232 = vector.extract_strided_slice %227 {offsets = [4, 0], sizes = [1, 64], strides = [1, 1]} : vector<10x64xf32> to vector<1x64xf32>
    %233 = vector.extract_strided_slice %227 {offsets = [5, 0], sizes = [1, 32], strides = [1, 1]} : vector<10x64xf32> to vector<1x32xf32>
    %234 = vector.extract_strided_slice %227 {offsets = [6, 0], sizes = [1, 32], strides = [1, 1]} : vector<10x64xf32> to vector<1x32xf32>
    %235 = vector.extract_strided_slice %227 {offsets = [7, 0], sizes = [1, 32], strides = [1, 1]} : vector<10x64xf32> to vector<1x32xf32>
    %236 = vector.extract_strided_slice %227 {offsets = [8, 0], sizes = [1, 32], strides = [1, 1]} : vector<10x64xf32> to vector<1x32xf32>
    %237 = vector.extract_strided_slice %227 {offsets = [9, 0], sizes = [1, 32], strides = [1, 1]} : vector<10x64xf32> to vector<1x32xf32>
    %c2_99 = arith.constant 2 : index
    %c0_100 = arith.constant 0 : index
    %c0_101 = arith.constant 0 : index
    %238 = vector.load %arg1[%c2_99, %c0_100, %c0_101] : memref<4x32x32xf32, #tpu.memory_space<vmem>>, vector<1x32x32xf32>
    %239 = vector.shape_cast %238 : vector<1x32x32xf32> to vector<32x32xf32>
    %cst_102 = arith.constant dense<0.000000e+00> : vector<16x32xf32>
    %240 = tpu.matmul %225, %239, %cst_102 {dimension_numbers = #tpu.dot_dimension_numbers<[1], [0], [0], [1], [0, 0, 1, 1], [], []>} : vector<16x32xf32>, vector<32x32xf32>, vector<16x32xf32> -> vector<16x32xf32>
    %241 = vector.broadcast %228 : vector<1x32xf32> to vector<16x32xf32>
    %242 = arith.addf %240, %241 : vector<16x32xf32>
    %cst_103 = arith.constant dense<0.000000e+00> : vector<64x32xf32>
    %243 = tpu.matmul %0, %225, %cst_103 {dimension_numbers = #tpu.dot_dimension_numbers<[1], [0], [0], [1], [0, 0, 1, 1], [], []>} : vector<64x16xf32>, vector<16x32xf32>, vector<64x32xf32> -> vector<64x32xf32>
    %c2_104 = arith.constant 2 : index
    %c0_105 = arith.constant 0 : index
    %c0_106 = arith.constant 0 : index
    %244 = vector.load %arg2[%c2_104, %c0_105, %c0_106] : memref<4x32x32xf32, #tpu.memory_space<vmem>>, vector<1x32x32xf32>
    %245 = vector.shape_cast %244 : vector<1x32x32xf32> to vector<32x32xf32>
    %cst_107 = arith.constant dense<0.000000e+00> : vector<64x32xf32>
    %246 = tpu.matmul %243, %245, %cst_107 {dimension_numbers = #tpu.dot_dimension_numbers<[1], [0], [0], [1], [0, 0, 1, 1], [], []>} : vector<64x32xf32>, vector<32x32xf32>, vector<64x32xf32> -> vector<64x32xf32>
    %247 = vector.broadcast %229 : vector<1x32xf32> to vector<64x32xf32>
    %248 = arith.addf %246, %247 : vector<64x32xf32>
    %249 = arith.mulf %248, %1 : vector<64x32xf32>
    %c2_108 = arith.constant 2 : index
    %c0_109 = arith.constant 0 : index
    %c0_110 = arith.constant 0 : index
    %250 = vector.load %arg3[%c2_108, %c0_109, %c0_110] : memref<4x32x32xf32, #tpu.memory_space<vmem>>, vector<1x32x32xf32>
    %251 = vector.shape_cast %250 : vector<1x32x32xf32> to vector<32x32xf32>
    %cst_111 = arith.constant dense<0.000000e+00> : vector<64x32xf32>
    %252 = tpu.matmul %243, %251, %cst_111 {dimension_numbers = #tpu.dot_dimension_numbers<[1], [0], [0], [1], [0, 0, 1, 1], [], []>} : vector<64x32xf32>, vector<32x32xf32>, vector<64x32xf32> -> vector<64x32xf32>
    %253 = vector.broadcast %230 : vector<1x32xf32> to vector<64x32xf32>
    %254 = arith.addf %252, %253 : vector<64x32xf32>
    %255 = arith.mulf %254, %1 : vector<64x32xf32>
    %cst_112 = arith.constant dense<0.000000e+00> : vector<16x64xf32>
    %256 = tpu.matmul %242, %249, %cst_112 {dimension_numbers = #tpu.dot_dimension_numbers<[1], [1], [0], [0], [0, 0, 1, 0], [], []>} : vector<16x32xf32>, vector<64x32xf32>, vector<16x64xf32> -> vector<16x64xf32>
    %257 = arith.addf %256, %2 : vector<16x64xf32>
    %cst_113 = arith.constant dense<0xFF800000> : vector<16xf32>
    %258 = vector.multi_reduction <maximumf>, %257, %cst_113 [1] : vector<16x64xf32> to vector<16xf32>
    %259 = vector.shape_cast %258 : vector<16xf32> to vector<16x1xf32>
    %260 = vector.broadcast %259 : vector<16x1xf32> to vector<16x64xf32>
    %261 = arith.subf %257, %260 : vector<16x64xf32>
    %262 = math.exp %261 : vector<16x64xf32>
    %cst_114 = arith.constant dense<0.000000e+00> : vector<16x64xf32>
    %263 = tpu.matmul %262, %3, %cst_114 {dimension_numbers = #tpu.dot_dimension_numbers<[1], [0], [0], [1], [0, 0, 1, 1], [], []>} : vector<16x64xf32>, vector<64x64xf32>, vector<16x64xf32> -> vector<16x64xf32>
    %264 = tpu.reciprocal %263 {approx = true} : vector<16x64xf32> -> vector<16x64xf32>
    %265 = arith.mulf %262, %264 : vector<16x64xf32>
    %cst_115 = arith.constant dense<0.000000e+00> : vector<16x32xf32>
    %266 = tpu.matmul %265, %255, %cst_115 {dimension_numbers = #tpu.dot_dimension_numbers<[1], [0], [0], [1], [0, 0, 1, 1], [], []>} : vector<16x64xf32>, vector<64x32xf32>, vector<16x32xf32> -> vector<16x32xf32>
    %c2_116 = arith.constant 2 : index
    %c0_117 = arith.constant 0 : index
    %c0_118 = arith.constant 0 : index
    %267 = vector.load %arg4[%c2_116, %c0_117, %c0_118] : memref<4x32x32xf32, #tpu.memory_space<vmem>>, vector<1x32x32xf32>
    %268 = vector.shape_cast %267 : vector<1x32x32xf32> to vector<32x32xf32>
    %cst_119 = arith.constant dense<0.000000e+00> : vector<16x32xf32>
    %269 = tpu.matmul %266, %268, %cst_119 {dimension_numbers = #tpu.dot_dimension_numbers<[1], [0], [0], [1], [0, 0, 1, 1], [], []>} : vector<16x32xf32>, vector<32x32xf32>, vector<16x32xf32> -> vector<16x32xf32>
    %270 = vector.broadcast %231 : vector<1x32xf32> to vector<16x32xf32>
    %271 = arith.addf %269, %270 : vector<16x32xf32>
    %272 = arith.addf %225, %271 : vector<16x32xf32>
    %cst_120 = arith.constant dense<0.000000e+00> : vector<16xf32>
    %273 = vector.multi_reduction <add>, %272, %cst_120 [1] : vector<16x32xf32> to vector<16xf32>
    %274 = vector.shape_cast %273 : vector<16xf32> to vector<16x1xf32>
    %cst_121 = arith.constant 3.200000e+01 : f32
    %275 = vector.broadcast %cst_121 : f32 to vector<16x1xf32>
    %276 = arith.divf %274, %275 : vector<16x1xf32>
    %277 = arith.mulf %272, %272 : vector<16x32xf32>
    %cst_122 = arith.constant dense<0.000000e+00> : vector<16xf32>
    %278 = vector.multi_reduction <add>, %277, %cst_122 [1] : vector<16x32xf32> to vector<16xf32>
    %279 = vector.shape_cast %278 : vector<16xf32> to vector<16x1xf32>
    %cst_123 = arith.constant 3.200000e+01 : f32
    %280 = vector.broadcast %cst_123 : f32 to vector<16x1xf32>
    %281 = arith.divf %279, %280 : vector<16x1xf32>
    %282 = arith.mulf %276, %276 : vector<16x1xf32>
    %283 = arith.subf %281, %282 : vector<16x1xf32>
    %284 = vector.broadcast %276 : vector<16x1xf32> to vector<16x32xf32>
    %285 = arith.subf %272, %284 : vector<16x32xf32>
    %cst_124 = arith.constant 9.99999974E-6 : f32
    %286 = vector.broadcast %cst_124 : f32 to vector<16x1xf32>
    %287 = arith.addf %283, %286 : vector<16x1xf32>
    %288 = math.rsqrt %287 : vector<16x1xf32>
    %289 = vector.broadcast %288 : vector<16x1xf32> to vector<16x32xf32>
    %290 = arith.mulf %285, %289 : vector<16x32xf32>
    %291 = vector.broadcast %234 : vector<1x32xf32> to vector<16x32xf32>
    %292 = arith.mulf %290, %291 : vector<16x32xf32>
    %293 = vector.broadcast %235 : vector<1x32xf32> to vector<16x32xf32>
    %294 = arith.addf %292, %293 : vector<16x32xf32>
    %c2_125 = arith.constant 2 : index
    %c0_126 = arith.constant 0 : index
    %c0_127 = arith.constant 0 : index
    %295 = vector.load %arg5[%c2_125, %c0_126, %c0_127] : memref<4x32x64xf32, #tpu.memory_space<vmem>>, vector<1x32x64xf32>
    %296 = vector.shape_cast %295 : vector<1x32x64xf32> to vector<32x64xf32>
    %cst_128 = arith.constant dense<0.000000e+00> : vector<16x64xf32>
    %297 = tpu.matmul %294, %296, %cst_128 {dimension_numbers = #tpu.dot_dimension_numbers<[1], [0], [0], [1], [0, 0, 1, 1], [], []>} : vector<16x32xf32>, vector<32x64xf32>, vector<16x64xf32> -> vector<16x64xf32>
    %298 = vector.broadcast %232 : vector<1x64xf32> to vector<16x64xf32>
    %299 = arith.addf %297, %298 : vector<16x64xf32>
    %cst_129 = arith.constant 0.000000e+00 : f32
    %300 = vector.broadcast %cst_129 : f32 to vector<16x64xf32>
    %301 = arith.maximumf %299, %300 : vector<16x64xf32>
    %c2_130 = arith.constant 2 : index
    %c0_131 = arith.constant 0 : index
    %c0_132 = arith.constant 0 : index
    %302 = vector.load %arg6[%c2_130, %c0_131, %c0_132] : memref<4x64x32xf32, #tpu.memory_space<vmem>>, vector<1x64x32xf32>
    %303 = vector.shape_cast %302 : vector<1x64x32xf32> to vector<64x32xf32>
    %cst_133 = arith.constant dense<0.000000e+00> : vector<16x32xf32>
    %304 = tpu.matmul %301, %303, %cst_133 {dimension_numbers = #tpu.dot_dimension_numbers<[1], [0], [0], [1], [0, 0, 1, 1], [], []>} : vector<16x64xf32>, vector<64x32xf32>, vector<16x32xf32> -> vector<16x32xf32>
    %305 = vector.broadcast %233 : vector<1x32xf32> to vector<16x32xf32>
    %306 = arith.addf %304, %305 : vector<16x32xf32>
    %307 = arith.addf %294, %306 : vector<16x32xf32>
    %cst_134 = arith.constant dense<0.000000e+00> : vector<16xf32>
    %308 = vector.multi_reduction <add>, %307, %cst_134 [1] : vector<16x32xf32> to vector<16xf32>
    %309 = vector.shape_cast %308 : vector<16xf32> to vector<16x1xf32>
    %cst_135 = arith.constant 3.200000e+01 : f32
    %310 = vector.broadcast %cst_135 : f32 to vector<16x1xf32>
    %311 = arith.divf %309, %310 : vector<16x1xf32>
    %312 = arith.mulf %307, %307 : vector<16x32xf32>
    %cst_136 = arith.constant dense<0.000000e+00> : vector<16xf32>
    %313 = vector.multi_reduction <add>, %312, %cst_136 [1] : vector<16x32xf32> to vector<16xf32>
    %314 = vector.shape_cast %313 : vector<16xf32> to vector<16x1xf32>
    %cst_137 = arith.constant 3.200000e+01 : f32
    %315 = vector.broadcast %cst_137 : f32 to vector<16x1xf32>
    %316 = arith.divf %314, %315 : vector<16x1xf32>
    %317 = arith.mulf %311, %311 : vector<16x1xf32>
    %318 = arith.subf %316, %317 : vector<16x1xf32>
    %319 = vector.broadcast %311 : vector<16x1xf32> to vector<16x32xf32>
    %320 = arith.subf %307, %319 : vector<16x32xf32>
    %cst_138 = arith.constant 9.99999974E-6 : f32
    %321 = vector.broadcast %cst_138 : f32 to vector<16x1xf32>
    %322 = arith.addf %318, %321 : vector<16x1xf32>
    %323 = math.rsqrt %322 : vector<16x1xf32>
    %324 = vector.broadcast %323 : vector<16x1xf32> to vector<16x32xf32>
    %325 = arith.mulf %320, %324 : vector<16x32xf32>
    %326 = vector.broadcast %236 : vector<1x32xf32> to vector<16x32xf32>
    %327 = arith.mulf %325, %326 : vector<16x32xf32>
    %328 = vector.broadcast %237 : vector<1x32xf32> to vector<16x32xf32>
    %329 = arith.addf %327, %328 : vector<16x32xf32>
    %c3 = arith.constant 3 : index
    %c0_139 = arith.constant 0 : index
    %c0_140 = arith.constant 0 : index
    %330 = vector.load %arg7[%c3, %c0_139, %c0_140] : memref<4x10x64xf32, #tpu.memory_space<vmem>>, vector<1x10x64xf32>
    %331 = vector.shape_cast %330 : vector<1x10x64xf32> to vector<10x64xf32>
    %332 = vector.extract_strided_slice %331 {offsets = [0, 0], sizes = [1, 32], strides = [1, 1]} : vector<10x64xf32> to vector<1x32xf32>
    %333 = vector.extract_strided_slice %331 {offsets = [1, 0], sizes = [1, 32], strides = [1, 1]} : vector<10x64xf32> to vector<1x32xf32>
    %334 = vector.extract_strided_slice %331 {offsets = [2, 0], sizes = [1, 32], strides = [1, 1]} : vector<10x64xf32> to vector<1x32xf32>
    %335 = vector.extract_strided_slice %331 {offsets = [3, 0], sizes = [1, 32], strides = [1, 1]} : vector<10x64xf32> to vector<1x32xf32>
    %336 = vector.extract_strided_slice %331 {offsets = [4, 0], sizes = [1, 64], strides = [1, 1]} : vector<10x64xf32> to vector<1x64xf32>
    %337 = vector.extract_strided_slice %331 {offsets = [5, 0], sizes = [1, 32], strides = [1, 1]} : vector<10x64xf32> to vector<1x32xf32>
    %338 = vector.extract_strided_slice %331 {offsets = [6, 0], sizes = [1, 32], strides = [1, 1]} : vector<10x64xf32> to vector<1x32xf32>
    %339 = vector.extract_strided_slice %331 {offsets = [7, 0], sizes = [1, 32], strides = [1, 1]} : vector<10x64xf32> to vector<1x32xf32>
    %340 = vector.extract_strided_slice %331 {offsets = [8, 0], sizes = [1, 32], strides = [1, 1]} : vector<10x64xf32> to vector<1x32xf32>
    %341 = vector.extract_strided_slice %331 {offsets = [9, 0], sizes = [1, 32], strides = [1, 1]} : vector<10x64xf32> to vector<1x32xf32>
    %c3_141 = arith.constant 3 : index
    %c0_142 = arith.constant 0 : index
    %c0_143 = arith.constant 0 : index
    %342 = vector.load %arg1[%c3_141, %c0_142, %c0_143] : memref<4x32x32xf32, #tpu.memory_space<vmem>>, vector<1x32x32xf32>
    %343 = vector.shape_cast %342 : vector<1x32x32xf32> to vector<32x32xf32>
    %cst_144 = arith.constant dense<0.000000e+00> : vector<16x32xf32>
    %344 = tpu.matmul %329, %343, %cst_144 {dimension_numbers = #tpu.dot_dimension_numbers<[1], [0], [0], [1], [0, 0, 1, 1], [], []>} : vector<16x32xf32>, vector<32x32xf32>, vector<16x32xf32> -> vector<16x32xf32>
    %345 = vector.broadcast %332 : vector<1x32xf32> to vector<16x32xf32>
    %346 = arith.addf %344, %345 : vector<16x32xf32>
    %cst_145 = arith.constant dense<0.000000e+00> : vector<64x32xf32>
    %347 = tpu.matmul %0, %329, %cst_145 {dimension_numbers = #tpu.dot_dimension_numbers<[1], [0], [0], [1], [0, 0, 1, 1], [], []>} : vector<64x16xf32>, vector<16x32xf32>, vector<64x32xf32> -> vector<64x32xf32>
    %c3_146 = arith.constant 3 : index
    %c0_147 = arith.constant 0 : index
    %c0_148 = arith.constant 0 : index
    %348 = vector.load %arg2[%c3_146, %c0_147, %c0_148] : memref<4x32x32xf32, #tpu.memory_space<vmem>>, vector<1x32x32xf32>
    %349 = vector.shape_cast %348 : vector<1x32x32xf32> to vector<32x32xf32>
    %cst_149 = arith.constant dense<0.000000e+00> : vector<64x32xf32>
    %350 = tpu.matmul %347, %349, %cst_149 {dimension_numbers = #tpu.dot_dimension_numbers<[1], [0], [0], [1], [0, 0, 1, 1], [], []>} : vector<64x32xf32>, vector<32x32xf32>, vector<64x32xf32> -> vector<64x32xf32>
    %351 = vector.broadcast %333 : vector<1x32xf32> to vector<64x32xf32>
    %352 = arith.addf %350, %351 : vector<64x32xf32>
    %353 = arith.mulf %352, %1 : vector<64x32xf32>
    %c3_150 = arith.constant 3 : index
    %c0_151 = arith.constant 0 : index
    %c0_152 = arith.constant 0 : index
    %354 = vector.load %arg3[%c3_150, %c0_151, %c0_152] : memref<4x32x32xf32, #tpu.memory_space<vmem>>, vector<1x32x32xf32>
    %355 = vector.shape_cast %354 : vector<1x32x32xf32> to vector<32x32xf32>
    %cst_153 = arith.constant dense<0.000000e+00> : vector<64x32xf32>
    %356 = tpu.matmul %347, %355, %cst_153 {dimension_numbers = #tpu.dot_dimension_numbers<[1], [0], [0], [1], [0, 0, 1, 1], [], []>} : vector<64x32xf32>, vector<32x32xf32>, vector<64x32xf32> -> vector<64x32xf32>
    %357 = vector.broadcast %334 : vector<1x32xf32> to vector<64x32xf32>
    %358 = arith.addf %356, %357 : vector<64x32xf32>
    %359 = arith.mulf %358, %1 : vector<64x32xf32>
    %cst_154 = arith.constant dense<0.000000e+00> : vector<16x64xf32>
    %360 = tpu.matmul %346, %353, %cst_154 {dimension_numbers = #tpu.dot_dimension_numbers<[1], [1], [0], [0], [0, 0, 1, 0], [], []>} : vector<16x32xf32>, vector<64x32xf32>, vector<16x64xf32> -> vector<16x64xf32>
    %361 = arith.addf %360, %2 : vector<16x64xf32>
    %cst_155 = arith.constant dense<0xFF800000> : vector<16xf32>
    %362 = vector.multi_reduction <maximumf>, %361, %cst_155 [1] : vector<16x64xf32> to vector<16xf32>
    %363 = vector.shape_cast %362 : vector<16xf32> to vector<16x1xf32>
    %364 = vector.broadcast %363 : vector<16x1xf32> to vector<16x64xf32>
    %365 = arith.subf %361, %364 : vector<16x64xf32>
    %366 = math.exp %365 : vector<16x64xf32>
    %cst_156 = arith.constant dense<0.000000e+00> : vector<16x64xf32>
    %367 = tpu.matmul %366, %3, %cst_156 {dimension_numbers = #tpu.dot_dimension_numbers<[1], [0], [0], [1], [0, 0, 1, 1], [], []>} : vector<16x64xf32>, vector<64x64xf32>, vector<16x64xf32> -> vector<16x64xf32>
    %368 = tpu.reciprocal %367 {approx = true} : vector<16x64xf32> -> vector<16x64xf32>
    %369 = arith.mulf %366, %368 : vector<16x64xf32>
    %cst_157 = arith.constant dense<0.000000e+00> : vector<16x32xf32>
    %370 = tpu.matmul %369, %359, %cst_157 {dimension_numbers = #tpu.dot_dimension_numbers<[1], [0], [0], [1], [0, 0, 1, 1], [], []>} : vector<16x64xf32>, vector<64x32xf32>, vector<16x32xf32> -> vector<16x32xf32>
    %c3_158 = arith.constant 3 : index
    %c0_159 = arith.constant 0 : index
    %c0_160 = arith.constant 0 : index
    %371 = vector.load %arg4[%c3_158, %c0_159, %c0_160] : memref<4x32x32xf32, #tpu.memory_space<vmem>>, vector<1x32x32xf32>
    %372 = vector.shape_cast %371 : vector<1x32x32xf32> to vector<32x32xf32>
    %cst_161 = arith.constant dense<0.000000e+00> : vector<16x32xf32>
    %373 = tpu.matmul %370, %372, %cst_161 {dimension_numbers = #tpu.dot_dimension_numbers<[1], [0], [0], [1], [0, 0, 1, 1], [], []>} : vector<16x32xf32>, vector<32x32xf32>, vector<16x32xf32> -> vector<16x32xf32>
    %374 = vector.broadcast %335 : vector<1x32xf32> to vector<16x32xf32>
    %375 = arith.addf %373, %374 : vector<16x32xf32>
    %376 = arith.addf %329, %375 : vector<16x32xf32>
    %cst_162 = arith.constant dense<0.000000e+00> : vector<16xf32>
    %377 = vector.multi_reduction <add>, %376, %cst_162 [1] : vector<16x32xf32> to vector<16xf32>
    %378 = vector.shape_cast %377 : vector<16xf32> to vector<16x1xf32>
    %cst_163 = arith.constant 3.200000e+01 : f32
    %379 = vector.broadcast %cst_163 : f32 to vector<16x1xf32>
    %380 = arith.divf %378, %379 : vector<16x1xf32>
    %381 = arith.mulf %376, %376 : vector<16x32xf32>
    %cst_164 = arith.constant dense<0.000000e+00> : vector<16xf32>
    %382 = vector.multi_reduction <add>, %381, %cst_164 [1] : vector<16x32xf32> to vector<16xf32>
    %383 = vector.shape_cast %382 : vector<16xf32> to vector<16x1xf32>
    %cst_165 = arith.constant 3.200000e+01 : f32
    %384 = vector.broadcast %cst_165 : f32 to vector<16x1xf32>
    %385 = arith.divf %383, %384 : vector<16x1xf32>
    %386 = arith.mulf %380, %380 : vector<16x1xf32>
    %387 = arith.subf %385, %386 : vector<16x1xf32>
    %388 = vector.broadcast %380 : vector<16x1xf32> to vector<16x32xf32>
    %389 = arith.subf %376, %388 : vector<16x32xf32>
    %cst_166 = arith.constant 9.99999974E-6 : f32
    %390 = vector.broadcast %cst_166 : f32 to vector<16x1xf32>
    %391 = arith.addf %387, %390 : vector<16x1xf32>
    %392 = math.rsqrt %391 : vector<16x1xf32>
    %393 = vector.broadcast %392 : vector<16x1xf32> to vector<16x32xf32>
    %394 = arith.mulf %389, %393 : vector<16x32xf32>
    %395 = vector.broadcast %338 : vector<1x32xf32> to vector<16x32xf32>
    %396 = arith.mulf %394, %395 : vector<16x32xf32>
    %397 = vector.broadcast %339 : vector<1x32xf32> to vector<16x32xf32>
    %398 = arith.addf %396, %397 : vector<16x32xf32>
    %c3_167 = arith.constant 3 : index
    %c0_168 = arith.constant 0 : index
    %c0_169 = arith.constant 0 : index
    %399 = vector.load %arg5[%c3_167, %c0_168, %c0_169] : memref<4x32x64xf32, #tpu.memory_space<vmem>>, vector<1x32x64xf32>
    %400 = vector.shape_cast %399 : vector<1x32x64xf32> to vector<32x64xf32>
    %cst_170 = arith.constant dense<0.000000e+00> : vector<16x64xf32>
    %401 = tpu.matmul %398, %400, %cst_170 {dimension_numbers = #tpu.dot_dimension_numbers<[1], [0], [0], [1], [0, 0, 1, 1], [], []>} : vector<16x32xf32>, vector<32x64xf32>, vector<16x64xf32> -> vector<16x64xf32>
    %402 = vector.broadcast %336 : vector<1x64xf32> to vector<16x64xf32>
    %403 = arith.addf %401, %402 : vector<16x64xf32>
    %cst_171 = arith.constant 0.000000e+00 : f32
    %404 = vector.broadcast %cst_171 : f32 to vector<16x64xf32>
    %405 = arith.maximumf %403, %404 : vector<16x64xf32>
    %c3_172 = arith.constant 3 : index
    %c0_173 = arith.constant 0 : index
    %c0_174 = arith.constant 0 : index
    %406 = vector.load %arg6[%c3_172, %c0_173, %c0_174] : memref<4x64x32xf32, #tpu.memory_space<vmem>>, vector<1x64x32xf32>
    %407 = vector.shape_cast %406 : vector<1x64x32xf32> to vector<64x32xf32>
    %cst_175 = arith.constant dense<0.000000e+00> : vector<16x32xf32>
    %408 = tpu.matmul %405, %407, %cst_175 {dimension_numbers = #tpu.dot_dimension_numbers<[1], [0], [0], [1], [0, 0, 1, 1], [], []>} : vector<16x64xf32>, vector<64x32xf32>, vector<16x32xf32> -> vector<16x32xf32>
    %409 = vector.broadcast %337 : vector<1x32xf32> to vector<16x32xf32>
    %410 = arith.addf %408, %409 : vector<16x32xf32>
    %411 = arith.addf %398, %410 : vector<16x32xf32>
    %cst_176 = arith.constant dense<0.000000e+00> : vector<16xf32>
    %412 = vector.multi_reduction <add>, %411, %cst_176 [1] : vector<16x32xf32> to vector<16xf32>
    %413 = vector.shape_cast %412 : vector<16xf32> to vector<16x1xf32>
    %cst_177 = arith.constant 3.200000e+01 : f32
    %414 = vector.broadcast %cst_177 : f32 to vector<16x1xf32>
    %415 = arith.divf %413, %414 : vector<16x1xf32>
    %416 = arith.mulf %411, %411 : vector<16x32xf32>
    %cst_178 = arith.constant dense<0.000000e+00> : vector<16xf32>
    %417 = vector.multi_reduction <add>, %416, %cst_178 [1] : vector<16x32xf32> to vector<16xf32>
    %418 = vector.shape_cast %417 : vector<16xf32> to vector<16x1xf32>
    %cst_179 = arith.constant 3.200000e+01 : f32
    %419 = vector.broadcast %cst_179 : f32 to vector<16x1xf32>
    %420 = arith.divf %418, %419 : vector<16x1xf32>
    %421 = arith.mulf %415, %415 : vector<16x1xf32>
    %422 = arith.subf %420, %421 : vector<16x1xf32>
    %423 = vector.broadcast %415 : vector<16x1xf32> to vector<16x32xf32>
    %424 = arith.subf %411, %423 : vector<16x32xf32>
    %cst_180 = arith.constant 9.99999974E-6 : f32
    %425 = vector.broadcast %cst_180 : f32 to vector<16x1xf32>
    %426 = arith.addf %422, %425 : vector<16x1xf32>
    %427 = math.rsqrt %426 : vector<16x1xf32>
    %428 = vector.broadcast %427 : vector<16x1xf32> to vector<16x32xf32>
    %429 = arith.mulf %424, %428 : vector<16x32xf32>
    %430 = vector.broadcast %340 : vector<1x32xf32> to vector<16x32xf32>
    %431 = arith.mulf %429, %430 : vector<16x32xf32>
    %432 = vector.broadcast %341 : vector<1x32xf32> to vector<16x32xf32>
    %433 = arith.addf %431, %432 : vector<16x32xf32>
    %cst_181 = arith.constant dense<0.000000e+00> : vector<2x32xf32>
    %434 = tpu.matmul %4, %433, %cst_181 {dimension_numbers = #tpu.dot_dimension_numbers<[1], [0], [0], [1], [0, 0, 1, 1], [], []>} : vector<2x16xf32>, vector<16x32xf32>, vector<2x32xf32> -> vector<2x32xf32>
    %cst_182 = arith.constant dense<0.000000e+00> : vector<2x256xf32>
    %435 = tpu.matmul %434, %6, %cst_182 {dimension_numbers = #tpu.dot_dimension_numbers<[1], [0], [0], [1], [0, 0, 1, 1], [], []>} : vector<2x32xf32>, vector<32x256xf32>, vector<2x256xf32> -> vector<2x256xf32>
    %436 = vector.broadcast %7 : vector<1x256xf32> to vector<2x256xf32>
    %437 = arith.addf %435, %436 : vector<2x256xf32>
    %cst_183 = arith.constant 0.000000e+00 : f32
    %438 = vector.broadcast %cst_183 : f32 to vector<2x256xf32>
    %439 = arith.maximumf %437, %438 : vector<2x256xf32>
    %440 = vector.broadcast %8 : vector<1x256xf32> to vector<2x256xf32>
    %441 = arith.mulf %439, %440 : vector<2x256xf32>
    %cst_184 = arith.constant dense<0.000000e+00> : vector<2xf32>
    %442 = vector.multi_reduction <add>, %441, %cst_184 [1] : vector<2x256xf32> to vector<2xf32>
    %443 = vector.shape_cast %442 : vector<2xf32> to vector<2x1xf32>
    %444 = vector.broadcast %10 : vector<1x1xf32> to vector<2x1xf32>
    %445 = arith.addf %443, %444 : vector<2x1xf32>
    %c0_185 = arith.constant 0 : index
    %c0_186 = arith.constant 0 : index
    %446 = vector.load %arg14[%c0_185, %c0_186] : memref<2x1xf32, #tpu.memory_space<vmem>>, vector<2x1xf32>
    tpu.vector_store %arg14[%c0_185, %c0_186], %445 {strides = array<i32>} : memref<2x1xf32, #tpu.memory_space<vmem>>, vector<2x1xf32>,
    return
  }
}

</mosaic_0001>

<llo_original>
// kernel: tst_forward.1
$region0: #{tst_forward.1}
  #allocation0 [shape = 'u32[]', space=smem, size = 0x4, offset = 0x4, fixed_abs, tag = 'smem constant byte address 0x4 - core index']
  #allocation1 [shape = 'u32[144,128]{1,0:T(1,128)}', space=vmem, size = 0x12000, scoped, tag = 'internal scratch']
  %s0 = inlined_call_operand.vmem [shape: f32[16,1], index: 0, kind: input, shape index: {}]
  %s1 = inlined_call_operand.vmem [shape: f32[4,32,32], index: 1, kind: input, shape index: {}]
  %s2 = inlined_call_operand.vmem [shape: f32[4,32,32], index: 2, kind: input, shape index: {}]
  %s3 = inlined_call_operand.vmem [shape: f32[4,32,32], index: 3, kind: input, shape index: {}]
  %s4 = inlined_call_operand.vmem [shape: f32[4,32,32], index: 4, kind: input, shape index: {}]
  %s5 = inlined_call_operand.hbm [shape: f32[4,32,64], index: 5, kind: input, shape index: {}]
  %s6 = inlined_call_operand.vmem [shape: f32[4,64,32], index: 6, kind: input, shape index: {}]
  %s7 = inlined_call_operand.vmem [shape: f32[4,10,64], index: 7, kind: input, shape index: {}]
  %s8 = inlined_call_operand.vmem [shape: f32[64,16], index: 8, kind: input, shape index: {}]
  %s9 = inlined_call_operand.vmem [shape: f32[64,32], index: 9, kind: input, shape index: {}]
  %s10 = inlined_call_operand.hbm [shape: f32[16,64], index: 10, kind: input, shape index: {}]
  %s11 = inlined_call_operand.hbm [shape: f32[64,64], index: 11, kind: input, shape index: {}]
  %s12 = inlined_call_operand.vmem [shape: f32[2,16], index: 12, kind: input, shape index: {}]
  %s13 = inlined_call_operand.vmem [shape: f32[36,256], index: 13, kind: input, shape index: {}]
  %s14 = inlined_call_operand.vmem [shape: f32[2,1], index: 14, kind: output, shape index: {}]
  %s15 = sld [smem:[#allocation0]]
  $region78: #{tst_forward.1} parent=0
    _
  %s17 = ssub.s32 1, %s15
  %s18 = scalar_select 0, %s17, %s15
  $region1: #{tst_forward.1} parent=0
    #allocation2 [shape = 'u8[65536]{0}', space=vmem, size = 0x10000, scoped, tag = 'input window, operand 5, single buffered']
    #allocation3 [shape = 's32[1]{0}', space=sflag, size = 0x4, scoped, tag = 'scoped memory for tst_forward.1']
    #allocation4 [shape = 'u8[8192]{0}', space=vmem, size = 0x2000, scoped, tag = 'input window, operand 10, single buffered']
    #allocation5 [shape = 's32[1]{0}', space=sflag, size = 0x4, scoped, tag = 'scoped memory for tst_forward.1']
    #allocation6 [shape = 'u8[32768]{0}', space=vmem, size = 0x8000, scoped, tag = 'input window, operand 11, single buffered']
    %19 = vsyncpa [#allocation3], 0
    %20 = vsyncpa [#allocation5], 0
    // Predicated region
    $region2: #{tst_forward.1} parent=1 // pred_check
      _
    $region3: #{tst_forward.1} parent=1 // pred_check_branch
      %22 = sbr.rel (0) target = $region5
    $region4: #{tst_forward.1} parent=1 // pred_region
      _
    $region5: #{tst_forward.1} parent=1 // pred_fallthru
      _
    // Predicated region
    $region6: #{tst_forward.1} parent=1 // pred_check
      _
    $region7: #{tst_forward.1} parent=1 // pred_check_branch
      %24 = sbr.rel (0) target = $region9
    $region8: #{tst_forward.1} parent=1 // pred_region
      _
    $region9: #{tst_forward.1} parent=1 // pred_fallthru
      _
    // Predicated region
    $region10: #{tst_forward.1} parent=1 // pred_check
      _
    $region11: #{tst_forward.1} parent=1 // pred_check_branch
      %26 = sbr.rel (0) target = $region13
    $region12: #{tst_forward.1} parent=1 // pred_region
      _
    $region13: #{tst_forward.1} parent=1 // pred_fallthru
      _
    // Predicated region
    $region14: #{tst_forward.1} parent=1 // pred_check
      _
    $region15: #{tst_forward.1} parent=1 // pred_check_branch
      %28 = sbr.rel (0) target = $region17
    $region16: #{tst_forward.1} parent=1 // pred_region
      _
    $region17: #{tst_forward.1} parent=1 // pred_fallthru
      _
    // Predicated region
    $region18: #{tst_forward.1} parent=1 // pred_check
      _
    $region19: #{tst_forward.1} parent=1 // pred_check_branch
      %30 = sbr.rel (0) target = $region21
    $region20: #{tst_forward.1} parent=1 // pred_region
      _
    $region21: #{tst_forward.1} parent=1 // pred_fallthru
      _
    // Predicated region
    $region22: #{tst_forward.1} parent=1 // pred_check
      _
    $region23: #{tst_forward.1} parent=1 // pred_check_branch
      %32 = sbr.rel (0) target = $region25
    $region24: #{tst_forward.1} parent=1 // pred_region
      %s34 = ssub.s32 2048, 2048
      %35 = vsyncadd [#allocation3], %s34
      %s36 = sshll.u32 [#allocation2], 4
      %s37 = int_to_ptr.vmem [resolvable:$true] %s36
      %42 = dma.hbm_to_vmem [thread:$0]  %s5, 2048, %s37, [#allocation3], 128, 128, 8
    $region25: #{tst_forward.1} parent=1 // pred_fallthru
      _
    // Predicated region
    $region26: #{tst_forward.1} parent=1 // pred_check
      _
    $region27: #{tst_forward.1} parent=1 // pred_check_branch
      %44 = sbr.rel (0) target = $region29
    $region28: #{tst_forward.1} parent=1 // pred_region
      _
    $region29: #{tst_forward.1} parent=1 // pred_fallthru
      _
    // Predicated region
    $region30: #{tst_forward.1} parent=1 // pred_check
      _
    $region31: #{tst_forward.1} parent=1 // pred_check_branch
      %46 = sbr.rel (0) target = $region33
    $region32: #{tst_forward.1} parent=1 // pred_region
      _
    $region33: #{tst_forward.1} parent=1 // pred_fallthru
      _
    // Predicated region
    $region34: #{tst_forward.1} parent=1 // pred_check
      _
    $region35: #{tst_forward.1} parent=1 // pred_check_branch
      %48 = sbr.rel (0) target = $region37
    $region36: #{tst_forward.1} parent=1 // pred_region
      _
    $region37: #{tst_forward.1} parent=1 // pred_fallthru
      _
    // Predicated region
    $region38: #{tst_forward.1} parent=1 // pred_check
      _
    $region39: #{tst_forward.1} parent=1 // pred_check_branch
      %50 = sbr.rel (0) target = $region41
    $region40: #{tst_forward.1} parent=1 // pred_region
      _
    $region41: #{tst_forward.1} parent=1 // pred_fallthru
      _
    // Predicated region
    $region42: #{tst_forward.1} parent=1 // pred_check
      _
    $region43: #{tst_forward.1} parent=1 // pred_check_branch
      %52 = sbr.rel (0) target = $region45
    $region44: #{tst_forward.1} parent=1 // pred_region
      %s54 = ssub.s32 256, 256
      %55 = vsyncadd [#allocation5], %s54
      %s56 = sshll.u32 [#allocation4], 4
      %s57 = int_to_ptr.vmem [resolvable:$true] %s56
      %62 = dma.hbm_to_vmem [thread:$0]  %s10, 256, %s57, [#allocation5], 128, 128, 8
    $region45: #{tst_forward.1} parent=1 // pred_fallthru
      _
    // Predicated region
    $region46: #{tst_forward.1} parent=1 // pred_check
      _
    $region47: #{tst_forward.1} parent=1 // pred_check_branch
      %64 = sbr.rel (0) target = $region49
    $region48: #{tst_forward.1} parent=1 // pred_region
      %s66 = ssub.s32 1024, 1024
      %67 = vsyncadd [#allocation5], %s66
      %s68 = sshll.u32 [#allocation6], 4
      %s69 = int_to_ptr.vmem [resolvable:$true] %s68
      %74 = dma.hbm_to_vmem [thread:$0]  %s11, 1024, %s69, [#allocation5], 128, 128, 8
    $region49: #{tst_forward.1} parent=1 // pred_fallthru
      _
    // Predicated region
    $region50: #{tst_forward.1} parent=1 // pred_check
      _
    $region51: #{tst_forward.1} parent=1 // pred_check_branch
      %76 = sbr.rel (0) target = $region53
    $region52: #{tst_forward.1} parent=1 // pred_region
      _
    $region53: #{tst_forward.1} parent=1 // pred_fallthru
      _
    // Predicated region
    $region54: #{tst_forward.1} parent=1 // pred_check
      _
    $region55: #{tst_forward.1} parent=1 // pred_check_branch
      %78 = sbr.rel (0) target = $region57
    $region56: #{tst_forward.1} parent=1 // pred_region
      _
    $region57: #{tst_forward.1} parent=1 // pred_fallthru
      _
    // Predicated region
    $region58: #{tst_forward.1} parent=1 // pred_check
      _
    $region59: #{tst_forward.1} parent=1 // pred_check_branch
      %80 = sbr.rel (0) target = $region61
    $region60: #{tst_forward.1} parent=1 // pred_region
      %81 = dma.done [#allocation3], 2048
    $region61: #{tst_forward.1} parent=1 // pred_fallthru
      _
    // Predicated region
    $region62: #{tst_forward.1} parent=1 // pred_check
      _
    $region63: #{tst_forward.1} parent=1 // pred_check_branch
      %83 = sbr.rel (0) target = $region65
    $region64: #{tst_forward.1} parent=1 // pred_region
      %84 = dma.done [#allocation5], 256
    $region65: #{tst_forward.1} parent=1 // pred_fallthru
      _
    // Predicated region
    $region66: #{tst_forward.1} parent=1 // pred_check
      _
    $region67: #{tst_forward.1} parent=1 // pred_check_branch
      %86 = sbr.rel (0) target = $region69
    $region68: #{tst_forward.1} parent=1 // pred_region
      %87 = dma.done [#allocation5], 1024
    $region69: #{tst_forward.1} parent=1 // pred_fallthru
      _
    %v88 = vld [vmem:[%s8] sm:$0xff]
    %v89 = vld [vmem:[%s8 + $0x8] sm:$0xff]
    %v90 = vld [vmem:[%s8 + $0x10] sm:$0xff]
    %v91 = vld [vmem:[%s8 + $0x18] sm:$0xff]
    %v92 = vld [vmem:[%s8 + $0x20] sm:$0xff]
    %v93 = vld [vmem:[%s8 + $0x28] sm:$0xff]
    %v94 = vld [vmem:[%s8 + $0x30] sm:$0xff]
    %v95 = vld [vmem:[%s8 + $0x38] sm:$0xff]
    %v96 = vld [vmem:[%s9] sm:$0xff]
    %v97 = vld [vmem:[%s9 + $0x8] sm:$0xff]
    %v98 = vld [vmem:[%s9 + $0x10] sm:$0xff]
    %v99 = vld [vmem:[%s9 + $0x18] sm:$0xff]
    %v100 = vld [vmem:[%s9 + $0x20] sm:$0xff]
    %v101 = vld [vmem:[%s9 + $0x28] sm:$0xff]
    %v102 = vld [vmem:[%s9 + $0x30] sm:$0xff]
    %v103 = vld [vmem:[%s9 + $0x38] sm:$0xff]
    %v104 = vld [vmem:[#allocation4] sm:$0xff]
    %v105 = vld [vmem:[#allocation4 + $0x8] sm:$0xff]
    %v106 = vld [vmem:[#allocation6] sm:$0xff]
    %v107 = vld [vmem:[#allocation6 + $0x8] sm:$0xff]
    %v108 = vld [vmem:[#allocation6 + $0x10] sm:$0xff]
    %v109 = vld [vmem:[#allocation6 + $0x18] sm:$0xff]
    %v110 = vld [vmem:[#allocation6 + $0x20] sm:$0xff]
    %v111 = vld [vmem:[#allocation6 + $0x28] sm:$0xff]
    %v112 = vld [vmem:[#allocation6 + $0x30] sm:$0xff]
    %v113 = vld [vmem:[#allocation6 + $0x38] sm:$0xff]
    %v114 = vld [vmem:[%s12] sm:$0x3]
    %v115 = vld [vmem:[%s13] sm:$0xff]
    %v116 = vld [vmem:[%s13 + $0x8] sm:$0xff]
    %v117 = vld [vmem:[%s13 + $0x10] sm:$0xff]
    %v118 = vld [vmem:[%s13 + $0x18] sm:$0xff]
    %v119 = vld [vmem:[%s13 + $0x20] sm:$0xff]
    %v120 = vld [vmem:[%s13 + $0x28] sm:$0xff]
    %v121 = vld [vmem:[%s13 + $0x30] sm:$0xff]
    %v122 = vld [vmem:[%s13 + $0x38] sm:$0xff]
    %v123 = vld [vmem:[%s13 + $0x40] sm:$0xf]
    %v124 = vld [vmem:[%s13 + $0x48] sm:$0xf]
    %v125 = vld [vmem:[%s0] sm:$0xff]
    %v126 = vld [vmem:[%s0 + $0x8] sm:$0xff]
    %128 = vset.pattern.permute.xlu0 0
    %129 = vperm.xlu0 %128, %v125
    %v130 = vpop.permute.xlu0 %129
    %133 = vset.pattern.permute.xlu0 0
    %134 = vperm.xlu0 %133, %v126
    %v135 = vpop.permute.xlu0 %134
    %v137 = vlaneseq
    %v138 = vshrl.u32 %v137, 7
    %v139 = vsub.s32 2, %v138
    %v140 = vrot.slane %v123, %v139
    %v141 = vmul.f32 %v130, %v140
    %v142 = vmul.f32 %v135, %v140
    %v143 = vlaneseq
    %v144 = vshrl.u32 %v143, 7
    %v145 = vsub.s32 3, %v144
    %v146 = vrot.slane %v123, %v145
    %v147 = vadd.f32 %v141, %v146
    %v148 = vadd.f32 %v142, %v146
    %v149 = vld [vmem:[%s7] sm:$0xff]
    %v150 = vld [vmem:[%s7 + $0x8] sm:$0x3]
    %v151 = vld [vmem:[%s1] sm:$0xff]
    %v152 = vld [vmem:[%s1 + $0x8] sm:$0xff]
    %v153 = vld [vmem:[%s1 + $0x10] sm:$0xff]
    %v154 = vld [vmem:[%s1 + $0x18] sm:$0xff]
    %v155 = vlaneseq
    %v156 = vshrl.u32 %v155, 7
    %v157 = vsub.s32 0, %v156
    %v158 = vrot.slane %v149, %v157
    %vm159 = vcmask 261120
    %v161 = vsel %vm159, %v147, 0
    %v164 = vsel %vm159, %v148, 0
    %166 = vmatprep.subr.mxu0 0.0
    %167 = vmatpush1.msra.mxu0 %v151
    %168 = vmatprep.subr.mxu0 0.0
    %169 = vmatpush1.msra.mxu0 %v152
    %170 = vmatprep.subr.mxu0 0.0
    %171 = vmatpush1.msra.mxu0 %v153
    %172 = vmatprep.subr.mxu0 0.0
    %173 = vmatpush1.msra.mxu0 %v154
    %174 = vmatprep.subr.mxu0 0.0
    %175 = vmatpush1.msra.mxu0 0.0
    %176 = vmatprep.subr.mxu0 0.0
    %177 = vmatpush1.msra.mxu0 0.0
    %178 = vmatprep.subr.mxu0 0.0
    %179 = vmatpush1.msra.mxu0 0.0
    %180 = vmatprep.subr.mxu0 0.0
    %181 = vmatpush1.msra.mxu0 0.0
    %182 = vmatprep.subr.mxu0 0.0
    %183 = vmatpush1.msra.mxu0 0.0
    %184 = vmatprep.subr.mxu0 0.0
    %185 = vmatpush1.msra.mxu0 0.0
    %186 = vmatprep.subr.mxu0 0.0
    %187 = vmatpush1.msra.mxu0 0.0
    %188 = vmatprep.subr.mxu0 0.0
    %189 = vmatpush1.msra.mxu0 0.0
    %190 = vmatprep.subr.mxu0 0.0
    %191 = vmatpush1.msra.mxu0 0.0
    %192 = vmatprep.subr.mxu0 0.0
    %193 = vmatpush1.msra.mxu0 0.0
    %194 = vmatprep.subr.mxu0 0.0
    %195 = vmatpush1.msra.mxu0 0.0
    %196 = vmatprep.subr.mxu0 0.0
    %197 = vmatpush1.msra.mxu0 0.0
    %198 = vmatprep.subr.mxu0 0.0
    %199 = vmatpush1.msra.mxu0 0.0
    %200 = vmatprep.subr.mxu0 0.0
    %201 = vmatpush1.msra.mxu0 0.0
    %202 = vmatprep.subr.mxu0 0.0
    %203 = vmatpush1.msra.mxu0 0.0
    %204 = vmatprep.subr.mxu0 0.0
    %205 = vmatpush1.msra.mxu0 0.0
    %206 = vmatprep.subr.mxu0 0.0
    %207 = vmatpush1.msra.mxu0 0.0
    %208 = vmatprep.subr.mxu0 0.0
    %209 = vmatpush1.msra.mxu0 0.0
    %210 = vmatprep.subr.mxu0 0.0
    %211 = vmatpush1.msra.mxu0 0.0
    %212 = vmatprep.subr.mxu0 0.0
    %213 = vmatpush1.msra.mxu0 0.0
    %214 = vmatprep.subr.mxu0 0.0
    %215 = vmatpush1.msra.mxu0 0.0
    %216 = vmatprep.subr.mxu0 0.0
    %217 = vmatpush1.msra.mxu0 0.0
    %218 = vmatprep.subr.mxu0 0.0
    %219 = vmatpush1.msra.mxu0 0.0
    %220 = vmatprep.subr.mxu0 0.0
    %221 = vmatpush1.msra.mxu0 0.0
    %222 = vmatprep.subr.mxu0 0.0
    %223 = vmatpush1.msra.mxu0 0.0
    %224 = vmatprep.subr.mxu0 0.0
    %225 = vmatpush1.msra.mxu0 0.0
    %226 = vmatprep.subr.mxu0 0.0
    %227 = vmatpush1.msra.mxu0 0.0
    %228 = vmatprep.subr.mxu0 0.0
    %229 = vmatpush1.msra.mxu0 0.0
    %230 = vmatprep.mubr.f32.mxu0 0.0
    %231 = vmatmul.mubr.f32.gmra.mrb[0].mxu0 %v161
    %v232 = vpop.f32.mrb[0].mxu0
    %v233 = vadd.f32 %v158, %v232
    %v234 = vpop.f32.mrb[0].mxu0
    %235 = vmatprep.mubr.f32.mxu0 0.0
    %236 = vmatmul.mubr.f32.gmra.mrb[0].mxu0 %v164
    %v237 = vpop.f32.mrb[0].mxu0
    %v238 = vadd.f32 %v158, %v237
    %v239 = vpop.f32.mrb[0].mxu0
    %240 = vdwg.mxu0
    %vm241 = vcmask 130048
    %v243 = vsel %vm241, %v88, 0
    %v246 = vsel %vm241, %v89, 0
    %v249 = vsel %vm241, %v90, 0
    %v252 = vsel %vm241, %v91, 0
    %v255 = vsel %vm241, %v92, 0
    %v258 = vsel %vm241, %v93, 0
    %v261 = vsel %vm241, %v94, 0
    %v264 = vsel %vm241, %v95, 0
    %266 = vmatprep.subr.mxu0 0.0
    %267 = vmatpush1.msra.mxu0 %v147
    %268 = vmatprep.subr.mxu0 0.0
    %269 = vmatpush1.msra.mxu0 %v148
    %270 = vmatprep.subr.mxu0 0.0
    %271 = vmatpush1.msra.mxu0 0.0
    %272 = vmatprep.subr.mxu0 0.0
    %273 = vmatpush1.msra.mxu0 0.0
    %274 = vmatprep.subr.mxu0 0.0
    %275 = vmatpush1.msra.mxu0 0.0
    %276 = vmatprep.subr.mxu0 0.0
    %277 = vmatpush1.msra.mxu0 0.0
    %278 = vmatprep.subr.mxu0 0.0
    %279 = vmatpush1.msra.mxu0 0.0
    %280 = vmatprep.subr.mxu0 0.0
    %281 = vmatpush1.msra.mxu0 0.0
    %282 = vmatprep.subr.mxu0 0.0
    %283 = vmatpush1.msra.mxu0 0.0
    %284 = vmatprep.subr.mxu0 0.0
    %285 = vmatpush1.msra.mxu0 0.0
    %286 = vmatprep.subr.mxu0 0.0
    %287 = vmatpush1.msra.mxu0 0.0
    %288 = vmatprep.subr.mxu0 0.0
    %289 = vmatpush1.msra.mxu0 0.0
    %290 = vmatprep.subr.mxu0 0.0
    %291 = vmatpush1.msra.mxu0 0.0
    %292 = vmatprep.subr.mxu0 0.0
    %293 = vmatpush1.msra.mxu0 0.0
    %294 = vmatprep.subr.mxu0 0.0
    %295 = vmatpush1.msra.mxu0 0.0
    %296 = vmatprep.subr.mxu0 0.0
    %297 = vmatpush1.msra.mxu0 0.0
    %298 = vmatprep.subr.mxu0 0.0
    %299 = vmatpush1.msra.mxu0 0.0
    %300 = vmatprep.subr.mxu0 0.0
    %301 = vmatpush1.msra.mxu0 0.0
    %302 = vmatprep.subr.mxu0 0.0
    %303 = vmatpush1.msra.mxu0 0.0
    %304 = vmatprep.subr.mxu0 0.0
    %305 = vmatpush1.msra.mxu0 0.0
    %306 = vmatprep.subr.mxu0 0.0
    %307 = vmatpush1.msra.mxu0 0.0
    %308 = vmatprep.subr.mxu0 0.0
    %309 = vmatpush1.msra.mxu0 0.0
    %310 = vmatprep.subr.mxu0 0.0
    %311 = vmatpush1.msra.mxu0 0.0
    %312 = vmatprep.subr.mxu0 0.0
    %313 = vmatpush1.msra.mxu0 0.0
    %314 = vmatprep.subr.mxu0 0.0
    %315 = vmatpush1.msra.mxu0 0.0
    %316 = vmatprep.subr.mxu0 0.0
    %317 = vmatpush1.msra.mxu0 0.0
    %318 = vmatprep.subr.mxu0 0.0
    %319 = vmatpush1.msra.mxu0 0.0
    %320 = vmatprep.subr.mxu0 0.0
    %321 = vmatpush1.msra.mxu0 0.0
    %322 = vmatprep.subr.mxu0 0.0
    %323 = vmatpush1.msra.mxu0 0.0
    %324 = vmatprep.subr.mxu0 0.0
    %325 = vmatpush1.msra.mxu0 0.0
    %326 = vmatprep.subr.mxu0 0.0
    %327 = vmatpush1.msra.mxu0 0.0
    %328 = vmatprep.subr.mxu0 0.0
    %329 = vmatpush1.msra.mxu0 0.0
    %330 = vmatprep.mubr.f32.mxu0 0.0
    %331 = vmatmul.mubr.f32.gmra.mrb[0].mxu0 %v243
    %v332 = vpop.f32.mrb[0].mxu0
    %v333 = vadd.f32 0.0, %v332
    %v334 = vpop.f32.mrb[0].mxu0
    %335 = vmatprep.mubr.f32.mxu0 0.0
    %336 = vmatmul.mubr.f32.gmra.mrb[0].mxu0 %v246
    %v337 = vpop.f32.mrb[0].mxu0
    %v338 = vadd.f32 0.0, %v337
    %v339 = vpop.f32.mrb[0].mxu0
    %340 = vmatprep.mubr.f32.mxu0 0.0
    %341 = vmatmul.mubr.f32.gmra.mrb[0].mxu0 %v249
    %v342 = vpop.f32.mrb[0].mxu0
    %v343 = vadd.f32 0.0, %v342
    %v344 = vpop.f32.mrb[0].mxu0
    %345 = vmatprep.mubr.f32.mxu0 0.0
    %346 = vmatmul.mubr.f32.gmra.mrb[0].mxu0 %v252
    %v347 = vpop.f32.mrb[0].mxu0
    %v348 = vadd.f32 0.0, %v347
    %v349 = vpop.f32.mrb[0].mxu0
    %350 = vmatprep.mubr.f32.mxu0 0.0
    %351 = vmatmul.mubr.f32.gmra.mrb[0].mxu0 %v255
    %v352 = vpop.f32.mrb[0].mxu0
    %v353 = vadd.f32 0.0, %v352
    %v354 = vpop.f32.mrb[0].mxu0
    %355 = vmatprep.mubr.f32.mxu0 0.0
    %356 = vmatmul.mubr.f32.gmra.mrb[0].mxu0 %v258
    %v357 = vpop.f32.mrb[0].mxu0
    %v358 = vadd.f32 0.0, %v357
    %v359 = vpop.f32.mrb[0].mxu0
    %360 = vmatprep.mubr.f32.mxu0 0.0
    %361 = vmatmul.mubr.f32.gmra.mrb[0].mxu0 %v261
    %v362 = vpop.f32.mrb[0].mxu0
    %v363 = vadd.f32 0.0, %v362
    %v364 = vpop.f32.mrb[0].mxu0
    %365 = vmatprep.mubr.f32.mxu0 0.0
    %366 = vmatmul.mubr.f32.gmra.mrb[0].mxu0 %v264
    %v367 = vpop.f32.mrb[0].mxu0
    %v368 = vadd.f32 0.0, %v367
    %v369 = vpop.f32.mrb[0].mxu0
    %370 = vdwg.mxu0
    %v371 = vld [vmem:[%s2] sm:$0xff]
    %v372 = vld [vmem:[%s2 + $0x8] sm:$0xff]
    %v373 = vld [vmem:[%s2 + $0x10] sm:$0xff]
    %v374 = vld [vmem:[%s2 + $0x18] sm:$0xff]
    %v375 = vlaneseq
    %v376 = vshrl.u32 %v375, 7
    %v377 = vsub.s32 1, %v376
    %v378 = vrot.slane %v149, %v377
    %v380 = vsel %vm159, %v333, 0
    %v383 = vsel %vm159, %v338, 0
    %v386 = vsel %vm159, %v343, 0
    %v389 = vsel %vm159, %v348, 0
    %v392 = vsel %vm159, %v353, 0
    %v395 = vsel %vm159, %v358, 0
    %v398 = vsel %vm159, %v363, 0
    %v401 = vsel %vm159, %v368, 0
    %403 = vmatprep.subr.mxu0 0.0
    %404 = vmatpush1.msra.mxu0 %v371
    %405 = vmatprep.subr.mxu0 0.0
    %406 = vmatpush1.msra.mxu0 %v372
    %407 = vmatprep.subr.mxu0 0.0
    %408 = vmatpush1.msra.mxu0 %v373
    %409 = vmatprep.subr.mxu0 0.0
    %410 = vmatpush1.msra.mxu0 %v374
    %411 = vmatprep.subr.mxu0 0.0
    %412 = vmatpush1.msra.mxu0 0.0
    %413 = vmatprep.subr.mxu0 0.0
    %414 = vmatpush1.msra.mxu0 0.0
    %415 = vmatprep.subr.mxu0 0.0
    %416 = vmatpush1.msra.mxu0 0.0
    %417 = vmatprep.subr.mxu0 0.0
    %418 = vmatpush1.msra.mxu0 0.0
    %419 = vmatprep.subr.mxu0 0.0
    %420 = vmatpush1.msra.mxu0 0.0
    %421 = vmatprep.subr.mxu0 0.0
    %422 = vmatpush1.msra.mxu0 0.0
    %423 = vmatprep.subr.mxu0 0.0
    %424 = vmatpush1.msra.mxu0 0.0
    %425 = vmatprep.subr.mxu0 0.0
    %426 = vmatpush1.msra.mxu0 0.0
    %427 = vmatprep.subr.mxu0 0.0
    %428 = vmatpush1.msra.mxu0 0.0
    %429 = vmatprep.subr.mxu0 0.0
    %430 = vmatpush1.msra.mxu0 0.0
    %431 = vmatprep.subr.mxu0 0.0
    %432 = vmatpush1.msra.mxu0 0.0
    %433 = vmatprep.subr.mxu0 0.0
    %434 = vmatpush1.msra.mxu0 0.0
    %435 = vmatprep.subr.mxu0 0.0
    %436 = vmatpush1.msra.mxu0 0.0
    %437 = vmatprep.subr.mxu0 0.0
    %438 = vmatpush1.msra.mxu0 0.0
    %439 = vmatprep.subr.mxu0 0.0
    %440 = vmatpush1.msra.mxu0 0.0
    %441 = vmatprep.subr.mxu0 0.0
    %442 = vmatpush1.msra.mxu0 0.0
    %443 = vmatprep.subr.mxu0 0.0
    %444 = vmatpush1.msra.mxu0 0.0
    %445 = vmatprep.subr.mxu0 0.0
    %446 = vmatpush1.msra.mxu0 0.0
    %447 = vmatprep.subr.mxu0 0.0
    %448 = vmatpush1.msra.mxu0 0.0
    %449 = vmatprep.subr.mxu0 0.0
    %450 = vmatpush1.msra.mxu0 0.0
    %451 = vmatprep.subr.mxu0 0.0
    %452 = vmatpush1.msra.mxu0 0.0
    %453 = vmatprep.subr.mxu0 0.0
    %454 = vmatpush1.msra.mxu0 0.0
    %455 = vmatprep.subr.mxu0 0.0
    %456 = vmatpush1.msra.mxu0 0.0
    %457 = vmatprep.subr.mxu0 0.0
    %458 = vmatpush1.msra.mxu0 0.0
    %459 = vmatprep.subr.mxu0 0.0
    %460 = vmatpush1.msra.mxu0 0.0
    %461 = vmatprep.subr.mxu0 0.0
    %462 = vmatpush1.msra.mxu0 0.0
    %463 = vmatprep.subr.mxu0 0.0
    %464 = vmatpush1.msra.mxu0 0.0
    %465 = vmatprep.subr.mxu0 0.0
    %466 = vmatpush1.msra.mxu0 0.0
    %467 = vmatprep.mubr.f32.mxu0 0.0
    %468 = vmatmul.mubr.f32.gmra.mrb[0].mxu0 %v380
    %v469 = vpop.f32.mrb[0].mxu0
    %v470 = vadd.f32 %v378, %v469
    %v471 = vpop.f32.mrb[0].mxu0
    %472 = vmatprep.mubr.f32.mxu0 0.0
    %473 = vmatmul.mubr.f32.gmra.mrb[0].mxu0 %v383
    %v474 = vpop.f32.mrb[0].mxu0
    %v475 = vadd.f32 %v378, %v474
    %v476 = vpop.f32.mrb[0].mxu0
    %477 = vmatprep.mubr.f32.mxu0 0.0
    %478 = vmatmul.mubr.f32.gmra.mrb[0].mxu0 %v386
    %v479 = vpop.f32.mrb[0].mxu0
    %v480 = vadd.f32 %v378, %v479
    %v481 = vpop.f32.mrb[0].mxu0
    %482 = vmatprep.mubr.f32.mxu0 0.0
    %483 = vmatmul.mubr.f32.gmra.mrb[0].mxu0 %v389
    %v484 = vpop.f32.mrb[0].mxu0
    %v485 = vadd.f32 %v378, %v484
    %v486 = vpop.f32.mrb[0].mxu0
    %487 = vmatprep.mubr.f32.mxu0 0.0
    %488 = vmatmul.mubr.f32.gmra.mrb[0].mxu0 %v392
    %v489 = vpop.f32.mrb[0].mxu0
    %v490 = vadd.f32 %v378, %v489
    %v491 = vpop.f32.mrb[0].mxu0
    %492 = vmatprep.mubr.f32.mxu0 0.0
    %493 = vmatmul.mubr.f32.gmra.mrb[0].mxu0 %v395
    %v494 = vpop.f32.mrb[0].mxu0
    %v495 = vadd.f32 %v378, %v494
    %v496 = vpop.f32.mrb[0].mxu0
    %497 = vmatprep.mubr.f32.mxu0 0.0
    %498 = vmatmul.mubr.f32.gmra.mrb[0].mxu0 %v398
    %v499 = vpop.f32.mrb[0].mxu0
    %v500 = vadd.f32 %v378, %v499
    %v501 = vpop.f32.mrb[0].mxu0
    %502 = vmatprep.mubr.f32.mxu0 0.0
    %503 = vmatmul.mubr.f32.gmra.mrb[0].mxu0 %v401
    %v504 = vpop.f32.mrb[0].mxu0
    %v505 = vadd.f32 %v378, %v504
    %v506 = vpop.f32.mrb[0].mxu0
    %507 = vdwg.mxu0
    %v508 = vmul.f32 %v470, %v96
    %v509 = vmul.f32 %v475, %v97
    %v510 = vmul.f32 %v480, %v98
    %v511 = vmul.f32 %v485, %v99
    %v512 = vmul.f32 %v490, %v100
    %v513 = vmul.f32 %v495, %v101
    %v514 = vmul.f32 %v500, %v102
    %v515 = vmul.f32 %v505, %v103
    %v516 = vld [vmem:[%s3] sm:$0xff]
    %v517 = vld [vmem:[%s3 + $0x8] sm:$0xff]
    %v518 = vld [vmem:[%s3 + $0x10] sm:$0xff]
    %v519 = vld [vmem:[%s3 + $0x18] sm:$0xff]
    %v520 = vlaneseq
    %v521 = vshrl.u32 %v520, 7
    %v522 = vsub.s32 2, %v521
    %v523 = vrot.slane %v149, %v522
    %524 = vmatprep.subr.mxu0 0.0
    %525 = vmatpush1.msra.mxu0 %v516
    %526 = vmatprep.subr.mxu0 0.0
    %527 = vmatpush1.msra.mxu0 %v517
    %528 = vmatprep.subr.mxu0 0.0
    %529 = vmatpush1.msra.mxu0 %v518
    %530 = vmatprep.subr.mxu0 0.0
    %531 = vmatpush1.msra.mxu0 %v519
    %532 = vmatprep.subr.mxu0 0.0
    %533 = vmatpush1.msra.mxu0 0.0
    %534 = vmatprep.subr.mxu0 0.0
    %535 = vmatpush1.msra.mxu0 0.0
    %536 = vmatprep.subr.mxu0 0.0
    %537 = vmatpush1.msra.mxu0 0.0
    %538 = vmatprep.subr.mxu0 0.0
    %539 = vmatpush1.msra.mxu0 0.0
    %540 = vmatprep.subr.mxu0 0.0
    %541 = vmatpush1.msra.mxu0 0.0
    %542 = vmatprep.subr.mxu0 0.0
    %543 = vmatpush1.msra.mxu0 0.0
    %544 = vmatprep.subr.mxu0 0.0
    %545 = vmatpush1.msra.mxu0 0.0
    %546 = vmatprep.subr.mxu0 0.0
    %547 = vmatpush1.msra.mxu0 0.0
    %548 = vmatprep.subr.mxu0 0.0
    %549 = vmatpush1.msra.mxu0 0.0
    %550 = vmatprep.subr.mxu0 0.0
    %551 = vmatpush1.msra.mxu0 0.0
    %552 = vmatprep.subr.mxu0 0.0
    %553 = vmatpush1.msra.mxu0 0.0
    %554 = vmatprep.subr.mxu0 0.0
    %555 = vmatpush1.msra.mxu0 0.0
    %556 = vmatprep.subr.mxu0 0.0
    %557 = vmatpush1.msra.mxu0 0.0
    %558 = vmatprep.subr.mxu0 0.0
    %559 = vmatpush1.msra.mxu0 0.0
    %560 = vmatprep.subr.mxu0 0.0
    %561 = vmatpush1.msra.mxu0 0.0
    %562 = vmatprep.subr.mxu0 0.0
    %563 = vmatpush1.msra.mxu0 0.0
    %564 = vmatprep.subr.mxu0 0.0
    %565 = vmatpush1.msra.mxu0 0.0
    %566 = vmatprep.subr.mxu0 0.0
    %567 = vmatpush1.msra.mxu0 0.0
    %568 = vmatprep.subr.mxu0 0.0
    %569 = vmatpush1.msra.mxu0 0.0
    %570 = vmatprep.subr.mxu0 0.0
    %571 = vmatpush1.msra.mxu0 0.0
    %572 = vmatprep.subr.mxu0 0.0
    %573 = vmatpush1.msra.mxu0 0.0
    %574 = vmatprep.subr.mxu0 0.0
    %575 = vmatpush1.msra.mxu0 0.0
    %576 = vmatprep.subr.mxu0 0.0
    %577 = vmatpush1.msra.mxu0 0.0
    %578 = vmatprep.subr.mxu0 0.0
    %579 = vmatpush1.msra.mxu0 0.0
    %580 = vmatprep.subr.mxu0 0.0
    %581 = vmatpush1.msra.mxu0 0.0
    %582 = vmatprep.subr.mxu0 0.0
    %583 = vmatpush1.msra.mxu0 0.0
    %584 = vmatprep.subr.mxu0 0.0
    %585 = vmatpush1.msra.mxu0 0.0
    %586 = vmatprep.subr.mxu0 0.0
    %587 = vmatpush1.msra.mxu0 0.0
    %588 = vmatprep.mubr.f32.mxu0 0.0
    %589 = vmatmul.mubr.f32.gmra.mrb[0].mxu0 %v380
    %v590 = vpop.f32.mrb[0].mxu0
    %v591 = vadd.f32 %v523, %v590
    %v592 = vpop.f32.mrb[0].mxu0
    %593 = vmatprep.mubr.f32.mxu0 0.0
    %594 = vmatmul.mubr.f32.gmra.mrb[0].mxu0 %v383
    %v595 = vpop.f32.mrb[0].mxu0
    %v596 = vadd.f32 %v523, %v595
    %v597 = vpop.f32.mrb[0].mxu0
    %598 = vmatprep.mubr.f32.mxu0 0.0
    %599 = vmatmul.mubr.f32.gmra.mrb[0].mxu0 %v386
    %v600 = vpop.f32.mrb[0].mxu0
    %v601 = vadd.f32 %v523, %v600
    %v602 = vpop.f32.mrb[0].mxu0
    %603 = vmatprep.mubr.f32.mxu0 0.0
    %604 = vmatmul.mubr.f32.gmra.mrb[0].mxu0 %v389
    %v605 = vpop.f32.mrb[0].mxu0
    %v606 = vadd.f32 %v523, %v605
    %v607 = vpop.f32.mrb[0].mxu0
    %608 = vmatprep.mubr.f32.mxu0 0.0
    %609 = vmatmul.mubr.f32.gmra.mrb[0].mxu0 %v392
    %v610 = vpop.f32.mrb[0].mxu0
    %v611 = vadd.f32 %v523, %v610
    %v612 = vpop.f32.mrb[0].mxu0
    %613 = vmatprep.mubr.f32.mxu0 0.0
    %614 = vmatmul.mubr.f32.gmra.mrb[0].mxu0 %v395
    %v615 = vpop.f32.mrb[0].mxu0
    %v616 = vadd.f32 %v523, %v615
    %v617 = vpop.f32.mrb[0].mxu0
    %618 = vmatprep.mubr.f32.mxu0 0.0
    %619 = vmatmul.mubr.f32.gmra.mrb[0].mxu0 %v398
    %v620 = vpop.f32.mrb[0].mxu0
    %v621 = vadd.f32 %v523, %v620
    %v622 = vpop.f32.mrb[0].mxu0
    %623 = vmatprep.mubr.f32.mxu0 0.0
    %624 = vmatmul.mubr.f32.gmra.mrb[0].mxu0 %v401
    %v625 = vpop.f32.mrb[0].mxu0
    %v626 = vadd.f32 %v523, %v625
    %v627 = vpop.f32.mrb[0].mxu0
    %628 = vdwg.mxu0
    %v629 = vmul.f32 %v591, %v96
    %v630 = vmul.f32 %v596, %v97
    %v631 = vmul.f32 %v601, %v98
    %v632 = vmul.f32 %v606, %v99
    %v633 = vmul.f32 %v611, %v100
    %v634 = vmul.f32 %v616, %v101
    %v635 = vmul.f32 %v621, %v102
    %v636 = vmul.f32 %v626, %v103
    %v638 = vsel %vm159, %v233, 0
    %v641 = vsel %vm159, %v238, 0
    %v644 = vsel %vm159, %v508, 0
    %v647 = vsel %vm159, %v509, 0
    %v650 = vsel %vm159, %v510, 0
    %v653 = vsel %vm159, %v511, 0
    %v656 = vsel %vm159, %v512, 0
    %v659 = vsel %vm159, %v513, 0
    %v662 = vsel %vm159, %v514, 0
    %v665 = vsel %vm159, %v515, 0
    %667 = vmatprep.subr.mxu0 0.0
    %668 = vmatpush1.xpose.msra.mxu0 %v644
    %669 = vmatprep.subr.mxu0 0.0
    %670 = vmatpush1.xpose.msra.mxu0 %v647
    %671 = vmatprep.subr.mxu0 0.0
    %672 = vmatpush1.xpose.msra.mxu0 %v650
    %673 = vmatprep.subr.mxu0 0.0
    %674 = vmatpush1.xpose.msra.mxu0 %v653
    %675 = vmatprep.subr.mxu0 0.0
    %676 = vmatpush1.xpose.msra.mxu0 %v656
    %677 = vmatprep.subr.mxu0 0.0
    %678 = vmatpush1.xpose.msra.mxu0 %v659
    %679 = vmatprep.subr.mxu0 0.0
    %680 = vmatpush1.xpose.msra.mxu0 %v662
    %681 = vmatprep.subr.mxu0 0.0
    %682 = vmatpush1.xpose.msra.mxu0 %v665
    %683 = vmatprep.subr.mxu0 0.0
    %684 = vmatpush1.xpose.msra.mxu0 0.0
    %685 = vmatprep.subr.mxu0 0.0
    %686 = vmatpush1.xpose.msra.mxu0 0.0
    %687 = vmatprep.subr.mxu0 0.0
    %688 = vmatpush1.xpose.msra.mxu0 0.0
    %689 = vmatprep.subr.mxu0 0.0
    %690 = vmatpush1.xpose.msra.mxu0 0.0
    %691 = vmatprep.subr.mxu0 0.0
    %692 = vmatpush1.xpose.msra.mxu0 0.0
    %693 = vmatprep.subr.mxu0 0.0
    %694 = vmatpush1.xpose.msra.mxu0 0.0
    %695 = vmatprep.subr.mxu0 0.0
    %696 = vmatpush1.xpose.msra.mxu0 0.0
    %697 = vmatprep.subr.mxu0 0.0
    %698 = vmatpush1.xpose.msra.mxu0 0.0
    %699 = vmatprep.subr.mxu0 0.0
    %700 = vmatpush1.xpose.msra.mxu0 0.0
    %701 = vmatprep.subr.mxu0 0.0
    %702 = vmatpush1.xpose.msra.mxu0 0.0
    %703 = vmatprep.subr.mxu0 0.0
    %704 = vmatpush1.xpose.msra.mxu0 0.0
    %705 = vmatprep.subr.mxu0 0.0
    %706 = vmatpush1.xpose.msra.mxu0 0.0
    %707 = vmatprep.subr.mxu0 0.0
    %708 = vmatpush1.xpose.msra.mxu0 0.0
    %709 = vmatprep.subr.mxu0 0.0
    %710 = vmatpush1.xpose.msra.mxu0 0.0
    %711 = vmatprep.subr.mxu0 0.0
    %712 = vmatpush1.xpose.msra.mxu0 0.0
    %713 = vmatprep.subr.mxu0 0.0
    %714 = vmatpush1.xpose.msra.mxu0 0.0
    %715 = vmatprep.subr.mxu0 0.0
    %716 = vmatpush1.xpose.msra.mxu0 0.0
    %717 = vmatprep.subr.mxu0 0.0
    %718 = vmatpush1.xpose.msra.mxu0 0.0
    %719 = vmatprep.subr.mxu0 0.0
    %720 = vmatpush1.xpose.msra.mxu0 0.0
    %721 = vmatprep.subr.mxu0 0.0
    %722 = vmatpush1.xpose.msra.mxu0 0.0
    %723 = vmatprep.subr.mxu0 0.0
    %724 = vmatpush1.xpose.msra.mxu0 0.0
    %725 = vmatprep.subr.mxu0 0.0
    %726 = vmatpush1.xpose.msra.mxu0 0.0
    %727 = vmatprep.subr.mxu0 0.0
    %728 = vmatpush1.xpose.msra.mxu0 0.0
    %729 = vmatprep.subr.mxu0 0.0
    %730 = vmatpush1.xpose.msra.mxu0 0.0
    %731 = vmatprep.mubr.f32.mxu0 0.0
    %732 = vmatmul.mubr.f32.gmra.mrb[0].mxu0 %v638
    %v733 = vpop.f32.mrb[0].mxu0
    %v734 = vadd.f32 %v104, %v733
    %v735 = vpop.f32.mrb[0].mxu0
    %736 = vmatprep.mubr.f32.mxu0 0.0
    %737 = vmatmul.mubr.f32.gmra.mrb[0].mxu0 %v641
    %v738 = vpop.f32.mrb[0].mxu0
    %v739 = vadd.f32 %v105, %v738
    %v740 = vpop.f32.mrb[0].mxu0
    %741 = vdwg.mxu0
    %vm742 = vcmask 523264
    %v743 = vsel %vm742, %v734, -inf
    %744 = vmax.xlane.f32.xlu0 %v743
    %v745 = vpop.xlane.xlu0 %744
    %v746 = vsel %vm742, %v739, -inf
    %747 = vmax.xlane.f32.xlu0 %v746
    %v748 = vpop.xlane.xlu0 %747
    %v749 = vsub.f32 %v734, %v745
    %v750 = vsub.f32 %v739, %v748
    %v751 = vmul.f32 %v749, 1.442695
    %v752 = vpow.pop %v751
    %v753 = vmul.f32 %v750, 1.442695
    %v754 = vpow.pop %v753
    %v756 = vsel %vm742, %v752, 0
    %v759 = vsel %vm742, %v754, 0
    %761 = vmatprep.subr.mxu0 0.0
    %762 = vmatpush1.msra.mxu0 %v106
    %763 = vmatprep.subr.mxu0 0.0
    %764 = vmatpush1.msra.mxu0 %v107
    %765 = vmatprep.subr.mxu0 0.0
    %766 = vmatpush1.msra.mxu0 %v108
    %767 = vmatprep.subr.mxu0 0.0
    %768 = vmatpush1.msra.mxu0 %v109
    %769 = vmatprep.subr.mxu0 0.0
    %770 = vmatpush1.msra.mxu0 %v110
    %771 = vmatprep.subr.mxu0 0.0
    %772 = vmatpush1.msra.mxu0 %v111
    %773 = vmatprep.subr.mxu0 0.0
    %774 = vmatpush1.msra.mxu0 %v112
    %775 = vmatprep.subr.mxu0 0.0
    %776 = vmatpush1.msra.mxu0 %v113
    %777 = vmatprep.subr.mxu0 0.0
    %778 = vmatpush1.msra.mxu0 0.0
    %779 = vmatprep.subr.mxu0 0.0
    %780 = vmatpush1.msra.mxu0 0.0
    %781 = vmatprep.subr.mxu0 0.0
    %782 = vmatpush1.msra.mxu0 0.0
    %783 = vmatprep.subr.mxu0 0.0
    %784 = vmatpush1.msra.mxu0 0.0
    %785 = vmatprep.subr.mxu0 0.0
    %786 = vmatpush1.msra.mxu0 0.0
    %787 = vmatprep.subr.mxu0 0.0
    %788 = vmatpush1.msra.mxu0 0.0
    %789 = vmatprep.subr.mxu0 0.0
    %790 = vmatpush1.msra.mxu0 0.0
    %791 = vmatprep.subr.mxu0 0.0
    %792 = vmatpush1.msra.mxu0 0.0
    %793 = vmatprep.subr.mxu0 0.0
    %794 = vmatpush1.msra.mxu0 0.0
    %795 = vmatprep.subr.mxu0 0.0
    %796 = vmatpush1.msra.mxu0 0.0
    %797 = vmatprep.subr.mxu0 0.0
    %798 = vmatpush1.msra.mxu0 0.0
    %799 = vmatprep.subr.mxu0 0.0
    %800 = vmatpush1.msra.mxu0 0.0
    %801 = vmatprep.subr.mxu0 0.0
    %802 = vmatpush1.msra.mxu0 0.0
    %803 = vmatprep.subr.mxu0 0.0
    %804 = vmatpush1.msra.mxu0 0.0
    %805 = vmatprep.subr.mxu0 0.0
    %806 = vmatpush1.msra.mxu0 0.0
    %807 = vmatprep.subr.mxu0 0.0
    %808 = vmatpush1.msra.mxu0 0.0
    %809 = vmatprep.subr.mxu0 0.0
    %810 = vmatpush1.msra.mxu0 0.0
    %811 = vmatprep.subr.mxu0 0.0
    %812 = vmatpush1.msra.mxu0 0.0
    %813 = vmatprep.subr.mxu0 0.0
    %814 = vmatpush1.msra.mxu0 0.0
    %815 = vmatprep.subr.mxu0 0.0
    %816 = vmatpush1.msra.mxu0 0.0
    %817 = vmatprep.subr.mxu0 0.0
    %818 = vmatpush1.msra.mxu0 0.0
    %819 = vmatprep.subr.mxu0 0.0
    %820 = vmatpush1.msra.mxu0 0.0
    %821 = vmatprep.subr.mxu0 0.0
    %822 = vmatpush1.msra.mxu0 0.0
    %823 = vmatprep.subr.mxu0 0.0
    %824 = vmatpush1.msra.mxu0 0.0
    %825 = vmatprep.mubr.f32.mxu0 0.0
    %826 = vmatmul.mubr.f32.gmra.mrb[0].mxu0 %v756
    %v827 = vpop.f32.mrb[0].mxu0
    %v828 = vadd.f32 0.0, %v827
    %v829 = vpop.f32.mrb[0].mxu0
    %830 = vmatprep.mubr.f32.mxu0 0.0
    %831 = vmatmul.mubr.f32.gmra.mrb[0].mxu0 %v759
    %v832 = vpop.f32.mrb[0].mxu0
    %v833 = vadd.f32 0.0, %v832
    %v834 = vpop.f32.mrb[0].mxu0
    %835 = vdwg.mxu0
    %v836 = vrcp.pop %v828
    %v837 = vrcp.pop %v833
    %v838 = vmul.f32 %v752, %v836
    %v839 = vmul.f32 %v754, %v837
    %v841 = vsel %vm742, %v838, 0
    %v844 = vsel %vm742, %v839, 0
    %846 = vmatprep.subr.mxu0 0.0
    %847 = vmatpush1.msra.mxu0 %v629
    %848 = vmatprep.subr.mxu0 0.0
    %849 = vmatpush1.msra.mxu0 %v630
    %850 = vmatprep.subr.mxu0 0.0
    %851 = vmatpush1.msra.mxu0 %v631
    %852 = vmatprep.subr.mxu0 0.0
    %853 = vmatpush1.msra.mxu0 %v632
    %854 = vmatprep.subr.mxu0 0.0
    %855 = vmatpush1.msra.mxu0 %v633
    %856 = vmatprep.subr.mxu0 0.0
    %857 = vmatpush1.msra.mxu0 %v634
    %858 = vmatprep.subr.mxu0 0.0
    %859 = vmatpush1.msra.mxu0 %v635
    %860 = vmatprep.subr.mxu0 0.0
    %861 = vmatpush1.msra.mxu0 %v636
    %862 = vmatprep.subr.mxu0 0.0
    %863 = vmatpush1.msra.mxu0 0.0
    %864 = vmatprep.subr.mxu0 0.0
    %865 = vmatpush1.msra.mxu0 0.0
    %866 = vmatprep.subr.mxu0 0.0
    %867 = vmatpush1.msra.mxu0 0.0
    %868 = vmatprep.subr.mxu0 0.0
    %869 = vmatpush1.msra.mxu0 0.0
    %870 = vmatprep.subr.mxu0 0.0
    %871 = vmatpush1.msra.mxu0 0.0
    %872 = vmatprep.subr.mxu0 0.0
    %873 = vmatpush1.msra.mxu0 0.0
    %874 = vmatprep.subr.mxu0 0.0
    %875 = vmatpush1.msra.mxu0 0.0
    %876 = vmatprep.subr.mxu0 0.0
    %877 = vmatpush1.msra.mxu0 0.0
    %878 = vmatprep.subr.mxu0 0.0
    %879 = vmatpush1.msra.mxu0 0.0
    %880 = vmatprep.subr.mxu0 0.0
    %881 = vmatpush1.msra.mxu0 0.0
    %882 = vmatprep.subr.mxu0 0.0
    %883 = vmatpush1.msra.mxu0 0.0
    %884 = vmatprep.subr.mxu0 0.0
    %885 = vmatpush1.msra.mxu0 0.0
    %886 = vmatprep.subr.mxu0 0.0
    %887 = vmatpush1.msra.mxu0 0.0
    %888 = vmatprep.subr.mxu0 0.0
    %889 = vmatpush1.msra.mxu0 0.0
    %890 = vmatprep.subr.mxu0 0.0
    %891 = vmatpush1.msra.mxu0 0.0
    %892 = vmatprep.subr.mxu0 0.0
    %893 = vmatpush1.msra.mxu0 0.0
    %894 = vmatprep.subr.mxu0 0.0
    %895 = vmatpush1.msra.mxu0 0.0
    %896 = vmatprep.subr.mxu0 0.0
    %897 = vmatpush1.msra.mxu0 0.0
    %898 = vmatprep.subr.mxu0 0.0
    %899 = vmatpush1.msra.mxu0 0.0
    %900 = vmatprep.subr.mxu0 0.0
    %901 = vmatpush1.msra.mxu0 0.0
    %902 = vmatprep.subr.mxu0 0.0
    %903 = vmatpush1.msra.mxu0 0.0
    %904 = vmatprep.subr.mxu0 0.0
    %905 = vmatpush1.msra.mxu0 0.0
    %906 = vmatprep.subr.mxu0 0.0
    %907 = vmatpush1.msra.mxu0 0.0
    %908 = vmatprep.subr.mxu0 0.0
    %909 = vmatpush1.msra.mxu0 0.0
    %910 = vmatprep.mubr.f32.mxu0 0.0
    %911 = vmatmul.mubr.f32.gmra.mrb[0].mxu0 %v841
    %v912 = vpop.f32.mrb[0].mxu0
    %v913 = vadd.f32 0.0, %v912
    %v914 = vpop.f32.mrb[0].mxu0
    %915 = vmatprep.mubr.f32.mxu0 0.0
    %916 = vmatmul.mubr.f32.gmra.mrb[0].mxu0 %v844
    %v917 = vpop.f32.mrb[0].mxu0
    %v918 = vadd.f32 0.0, %v917
    %v919 = vpop.f32.mrb[0].mxu0
    %920 = vdwg.mxu0
    %v921 = vld [vmem:[%s4] sm:$0xff]
    %v922 = vld [vmem:[%s4 + $0x8] sm:$0xff]
    %v923 = vld [vmem:[%s4 + $0x10] sm:$0xff]
    %v924 = vld [vmem:[%s4 + $0x18] sm:$0xff]
    %v925 = vlaneseq
    %v926 = vshrl.u32 %v925, 7
    %v927 = vsub.s32 3, %v926
    %v928 = vrot.slane %v149, %v927
    %v930 = vsel %vm159, %v913, 0
    %v933 = vsel %vm159, %v918, 0
    %935 = vmatprep.subr.mxu0 0.0
    %936 = vmatpush1.msra.mxu0 %v921
    %937 = vmatprep.subr.mxu0 0.0
    %938 = vmatpush1.msra.mxu0 %v922
    %939 = vmatprep.subr.mxu0 0.0
    %940 = vmatpush1.msra.mxu0 %v923
    %941 = vmatprep.subr.mxu0 0.0
    %942 = vmatpush1.msra.mxu0 %v924
    %943 = vmatprep.subr.mxu0 0.0
    %944 = vmatpush1.msra.mxu0 0.0
    %945 = vmatprep.subr.mxu0 0.0
    %946 = vmatpush1.msra.mxu0 0.0
    %947 = vmatprep.subr.mxu0 0.0
    %948 = vmatpush1.msra.mxu0 0.0
    %949 = vmatprep.subr.mxu0 0.0
    %950 = vmatpush1.msra.mxu0 0.0
    %951 = vmatprep.subr.mxu0 0.0
    %952 = vmatpush1.msra.mxu0 0.0
    %953 = vmatprep.subr.mxu0 0.0
    %954 = vmatpush1.msra.mxu0 0.0
    %955 = vmatprep.subr.mxu0 0.0
    %956 = vmatpush1.msra.mxu0 0.0
    %957 = vmatprep.subr.mxu0 0.0
    %958 = vmatpush1.msra.mxu0 0.0
    %959 = vmatprep.subr.mxu0 0.0
    %960 = vmatpush1.msra.mxu0 0.0
    %961 = vmatprep.subr.mxu0 0.0
    %962 = vmatpush1.msra.mxu0 0.0
    %963 = vmatprep.subr.mxu0 0.0
    %964 = vmatpush1.msra.mxu0 0.0
    %965 = vmatprep.subr.mxu0 0.0
    %966 = vmatpush1.msra.mxu0 0.0
    %967 = vmatprep.subr.mxu0 0.0
    %968 = vmatpush1.msra.mxu0 0.0
    %969 = vmatprep.subr.mxu0 0.0
    %970 = vmatpush1.msra.mxu0 0.0
    %971 = vmatprep.subr.mxu0 0.0
    %972 = vmatpush1.msra.mxu0 0.0
    %973 = vmatprep.subr.mxu0 0.0
    %974 = vmatpush1.msra.mxu0 0.0
    %975 = vmatprep.subr.mxu0 0.0
    %976 = vmatpush1.msra.mxu0 0.0
    %977 = vmatprep.subr.mxu0 0.0
    %978 = vmatpush1.msra.mxu0 0.0
    %979 = vmatprep.subr.mxu0 0.0
    %980 = vmatpush1.msra.mxu0 0.0
    %981 = vmatprep.subr.mxu0 0.0
    %982 = vmatpush1.msra.mxu0 0.0
    %983 = vmatprep.subr.mxu0 0.0
    %984 = vmatpush1.msra.mxu0 0.0
    %985 = vmatprep.subr.mxu0 0.0
    %986 = vmatpush1.msra.mxu0 0.0
    %987 = vmatprep.subr.mxu0 0.0
    %988 = vmatpush1.msra.mxu0 0.0
    %989 = vmatprep.subr.mxu0 0.0
    %990 = vmatpush1.msra.mxu0 0.0
    %991 = vmatprep.subr.mxu0 0.0
    %992 = vmatpush1.msra.mxu0 0.0
    %993 = vmatprep.subr.mxu0 0.0
    %994 = vmatpush1.msra.mxu0 0.0
    %995 = vmatprep.subr.mxu0 0.0
    %996 = vmatpush1.msra.mxu0 0.0
    %997 = vmatprep.subr.mxu0 0.0
    %998 = vmatpush1.msra.mxu0 0.0
    %999 = vmatprep.mubr.f32.mxu0 0.0
    %1000 = vmatmul.mubr.f32.gmra.mrb[0].mxu0 %v930
    %v1001 = vpop.f32.mrb[0].mxu0
    %v1002 = vadd.f32 %v928, %v1001
    %v1003 = vpop.f32.mrb[0].mxu0
    %1004 = vmatprep.mubr.f32.mxu0 0.0
    %1005 = vmatmul.mubr.f32.gmra.mrb[0].mxu0 %v933
    %v1006 = vpop.f32.mrb[0].mxu0
    %v1007 = vadd.f32 %v928, %v1006
    %v1008 = vpop.f32.mrb[0].mxu0
    %1009 = vdwg.mxu0
    %v1010 = vadd.f32 %v147, %v1002
    %v1011 = vadd.f32 %v148, %v1007
    %v1012 = vsel %vm159, %v1010, 0.0
    %1013 = vadd.xlane.f32.xlu0 %v1012
    %v1014 = vpop.xlane.xlu0 %1013
    %v1015 = vsel %vm159, %v1011, 0.0
    %1016 = vadd.xlane.f32.xlu0 %v1015
    %v1017 = vpop.xlane.xlu0 %1016
    %v1018 = vrcp.pop 32.0
    %v1019 = vmul.f32 %v1014, %v1018
    %v1020 = vmul.f32 %v1017, %v1018
    %v1021 = vmul.f32 %v1010, %v1010
    %v1022 = vmul.f32 %v1011, %v1011
    %v1023 = vsel %vm159, %v1021, 0.0
    %1024 = vadd.xlane.f32.xlu0 %v1023
    %v1025 = vpop.xlane.xlu0 %1024
    %v1026 = vsel %vm159, %v1022, 0.0
    %1027 = vadd.xlane.f32.xlu0 %v1026
    %v1028 = vpop.xlane.xlu0 %1027
    %v1029 = vmul.f32 %v1025, %v1018
    %v1030 = vmul.f32 %v1028, %v1018
    %v1031 = vmul.f32 %v1019, %v1019
    %v1032 = vmul.f32 %v1020, %v1020
    %v1033 = vsub.f32 %v1029, %v1031
    %v1034 = vsub.f32 %v1030, %v1032
    %v1035 = vsub.f32 %v1010, %v1019
    %v1036 = vsub.f32 %v1011, %v1020
    %v1037 = vadd.f32 %v1033, 1e-05
    %v1038 = vadd.f32 %v1034, 1e-05
    %v1039 = vrsqrt.pop %v1037
    %v1040 = vrsqrt.pop %v1038
    %v1041 = vmul.f32 %v1035, %v1039
    %v1042 = vmul.f32 %v1036, %v1040
    %v1043 = vlaneseq
    %v1044 = vshrl.u32 %v1043, 7
    %v1045 = vsub.s32 6, %v1044
    %v1046 = vrot.slane %v149, %v1045
    %v1047 = vmul.f32 %v1041, %v1046
    %v1048 = vmul.f32 %v1042, %v1046
    %v1049 = vlaneseq
    %v1050 = vshrl.u32 %v1049, 7
    %v1051 = vsub.s32 7, %v1050
    %v1052 = vrot.slane %v149, %v1051
    %v1053 = vadd.f32 %v1047, %v1052
    %v1054 = vadd.f32 %v1048, %v1052
    %v1055 = vld [vmem:[#allocation2] sm:$0xff]
    %v1056 = vld [vmem:[#allocation2 + $0x8] sm:$0xff]
    %v1057 = vld [vmem:[#allocation2 + $0x10] sm:$0xff]
    %v1058 = vld [vmem:[#allocation2 + $0x18] sm:$0xff]
    %v1059 = vlaneseq
    %v1060 = vshrl.u32 %v1059, 7
    %v1061 = vsub.s32 4, %v1060
    %v1062 = vrot.slane %v149, %v1061
    %v1064 = vsel %vm159, %v1053, 0
    %v1067 = vsel %vm159, %v1054, 0
    %1069 = vmatprep.subr.mxu0 0.0
    %1070 = vmatpush1.msra.mxu0 %v1055
    %1071 = vmatprep.subr.mxu0 0.0
    %1072 = vmatpush1.msra.mxu0 %v1056
    %1073 = vmatprep.subr.mxu0 0.0
    %1074 = vmatpush1.msra.mxu0 %v1057
    %1075 = vmatprep.subr.mxu0 0.0
    %1076 = vmatpush1.msra.mxu0 %v1058
    %1077 = vmatprep.subr.mxu0 0.0
    %1078 = vmatpush1.msra.mxu0 0.0
    %1079 = vmatprep.subr.mxu0 0.0
    %1080 = vmatpush1.msra.mxu0 0.0
    %1081 = vmatprep.subr.mxu0 0.0
    %1082 = vmatpush1.msra.mxu0 0.0
    %1083 = vmatprep.subr.mxu0 0.0
    %1084 = vmatpush1.msra.mxu0 0.0
    %1085 = vmatprep.subr.mxu0 0.0
    %1086 = vmatpush1.msra.mxu0 0.0
    %1087 = vmatprep.subr.mxu0 0.0
    %1088 = vmatpush1.msra.mxu0 0.0
    %1089 = vmatprep.subr.mxu0 0.0
    %1090 = vmatpush1.msra.mxu0 0.0
    %1091 = vmatprep.subr.mxu0 0.0
    %1092 = vmatpush1.msra.mxu0 0.0
    %1093 = vmatprep.subr.mxu0 0.0
    %1094 = vmatpush1.msra.mxu0 0.0
    %1095 = vmatprep.subr.mxu0 0.0
    %1096 = vmatpush1.msra.mxu0 0.0
    %1097 = vmatprep.subr.mxu0 0.0
    %1098 = vmatpush1.msra.mxu0 0.0
    %1099 = vmatprep.subr.mxu0 0.0
    %1100 = vmatpush1.msra.mxu0 0.0
    %1101 = vmatprep.subr.mxu0 0.0
    %1102 = vmatpush1.msra.mxu0 0.0
    %1103 = vmatprep.subr.mxu0 0.0
    %1104 = vmatpush1.msra.mxu0 0.0
    %1105 = vmatprep.subr.mxu0 0.0
    %1106 = vmatpush1.msra.mxu0 0.0
    %1107 = vmatprep.subr.mxu0 0.0
    %1108 = vmatpush1.msra.mxu0 0.0
    %1109 = vmatprep.subr.mxu0 0.0
    %1110 = vmatpush1.msra.mxu0 0.0
    %1111 = vmatprep.subr.mxu0 0.0
    %1112 = vmatpush1.msra.mxu0 0.0
    %1113 = vmatprep.subr.mxu0 0.0
    %1114 = vmatpush1.msra.mxu0 0.0
    %1115 = vmatprep.subr.mxu0 0.0
    %1116 = vmatpush1.msra.mxu0 0.0
    %1117 = vmatprep.subr.mxu0 0.0
    %1118 = vmatpush1.msra.mxu0 0.0
    %1119 = vmatprep.subr.mxu0 0.0
    %1120 = vmatpush1.msra.mxu0 0.0
    %1121 = vmatprep.subr.mxu0 0.0
    %1122 = vmatpush1.msra.mxu0 0.0
    %1123 = vmatprep.subr.mxu0 0.0
    %1124 = vmatpush1.msra.mxu0 0.0
    %1125 = vmatprep.subr.mxu0 0.0
    %1126 = vmatpush1.msra.mxu0 0.0
    %1127 = vmatprep.subr.mxu0 0.0
    %1128 = vmatpush1.msra.mxu0 0.0
    %1129 = vmatprep.subr.mxu0 0.0
    %1130 = vmatpush1.msra.mxu0 0.0
    %1131 = vmatprep.subr.mxu0 0.0
    %1132 = vmatpush1.msra.mxu0 0.0
    %1133 = vmatprep.mubr.f32.mxu0 0.0
    %1134 = vmatmul.mubr.f32.gmra.mrb[0].mxu0 %v1064
    %v1135 = vpop.f32.mrb[0].mxu0
    %v1136 = vadd.f32 %v1062, %v1135
    %v1137 = vpop.f32.mrb[0].mxu0
    %1138 = vmatprep.mubr.f32.mxu0 0.0
    %1139 = vmatmul.mubr.f32.gmra.mrb[0].mxu0 %v1067
    %v1140 = vpop.f32.mrb[0].mxu0
    %v1141 = vadd.f32 %v1062, %v1140
    %v1142 = vpop.f32.mrb[0].mxu0
    %1143 = vdwg.mxu0
    %v1144 = vmax.f32 %v1136, 0.0
    %v1145 = vmax.f32 %v1141, 0.0
    %v1146 = vld [vmem:[%s6] sm:$0xff]
    %v1147 = vld [vmem:[%s6 + $0x8] sm:$0xff]
    %v1148 = vld [vmem:[%s6 + $0x10] sm:$0xff]
    %v1149 = vld [vmem:[%s6 + $0x18] sm:$0xff]
    %v1150 = vld [vmem:[%s6 + $0x20] sm:$0xff]
    %v1151 = vld [vmem:[%s6 + $0x28] sm:$0xff]
    %v1152 = vld [vmem:[%s6 + $0x30] sm:$0xff]
    %v1153 = vld [vmem:[%s6 + $0x38] sm:$0xff]
    %v1154 = vlaneseq
    %v1155 = vshrl.u32 %v1154, 7
    %v1156 = vsub.s32 5, %v1155
    %v1157 = vrot.slane %v149, %v1156
    %v1159 = vsel %vm742, %v1144, 0
    %v1162 = vsel %vm742, %v1145, 0
    %1164 = vmatprep.subr.mxu0 0.0
    %1165 = vmatpush1.msra.mxu0 %v1146
    %1166 = vmatprep.subr.mxu0 0.0
    %1167 = vmatpush1.msra.mxu0 %v1147
    %1168 = vmatprep.subr.mxu0 0.0
    %1169 = vmatpush1.msra.mxu0 %v1148
    %1170 = vmatprep.subr.mxu0 0.0
    %1171 = vmatpush1.msra.mxu0 %v1149
    %1172 = vmatprep.subr.mxu0 0.0
    %1173 = vmatpush1.msra.mxu0 %v1150
    %1174 = vmatprep.subr.mxu0 0.0
    %1175 = vmatpush1.msra.mxu0 %v1151
    %1176 = vmatprep.subr.mxu0 0.0
    %1177 = vmatpush1.msra.mxu0 %v1152
    %1178 = vmatprep.subr.mxu0 0.0
    %1179 = vmatpush1.msra.mxu0 %v1153
    %1180 = vmatprep.subr.mxu0 0.0
    %1181 = vmatpush1.msra.mxu0 0.0
    %1182 = vmatprep.subr.mxu0 0.0
    %1183 = vmatpush1.msra.mxu0 0.0
    %1184 = vmatprep.subr.mxu0 0.0
    %1185 = vmatpush1.msra.mxu0 0.0
    %1186 = vmatprep.subr.mxu0 0.0
    %1187 = vmatpush1.msra.mxu0 0.0
    %1188 = vmatprep.subr.mxu0 0.0
    %1189 = vmatpush1.msra.mxu0 0.0
    %1190 = vmatprep.subr.mxu0 0.0
    %1191 = vmatpush1.msra.mxu0 0.0
    %1192 = vmatprep.subr.mxu0 0.0
    %1193 = vmatpush1.msra.mxu0 0.0
    %1194 = vmatprep.subr.mxu0 0.0
    %1195 = vmatpush1.msra.mxu0 0.0
    %1196 = vmatprep.subr.mxu0 0.0
    %1197 = vmatpush1.msra.mxu0 0.0
    %1198 = vmatprep.subr.mxu0 0.0
    %1199 = vmatpush1.msra.mxu0 0.0
    %1200 = vmatprep.subr.mxu0 0.0
    %1201 = vmatpush1.msra.mxu0 0.0
    %1202 = vmatprep.subr.mxu0 0.0
    %1203 = vmatpush1.msra.mxu0 0.0
    %1204 = vmatprep.subr.mxu0 0.0
    %1205 = vmatpush1.msra.mxu0 0.0
    %1206 = vmatprep.subr.mxu0 0.0
    %1207 = vmatpush1.msra.mxu0 0.0
    %1208 = vmatprep.subr.mxu0 0.0
    %1209 = vmatpush1.msra.mxu0 0.0
    %1210 = vmatprep.subr.mxu0 0.0
    %1211 = vmatpush1.msra.mxu0 0.0
    %1212 = vmatprep.subr.mxu0 0.0
    %1213 = vmatpush1.msra.mxu0 0.0
    %1214 = vmatprep.subr.mxu0 0.0
    %1215 = vmatpush1.msra.mxu0 0.0
    %1216 = vmatprep.subr.mxu0 0.0
    %1217 = vmatpush1.msra.mxu0 0.0
    %1218 = vmatprep.subr.mxu0 0.0
    %1219 = vmatpush1.msra.mxu0 0.0
    %1220 = vmatprep.subr.mxu0 0.0
    %1221 = vmatpush1.msra.mxu0 0.0
    %1222 = vmatprep.subr.mxu0 0.0
    %1223 = vmatpush1.msra.mxu0 0.0
    %1224 = vmatprep.subr.mxu0 0.0
    %1225 = vmatpush1.msra.mxu0 0.0
    %1226 = vmatprep.subr.mxu0 0.0
    %1227 = vmatpush1.msra.mxu0 0.0
    %1228 = vmatprep.mubr.f32.mxu0 0.0
    %1229 = vmatmul.mubr.f32.gmra.mrb[0].mxu0 %v1159
    %v1230 = vpop.f32.mrb[0].mxu0
    %v1231 = vadd.f32 %v1157, %v1230
    %v1232 = vpop.f32.mrb[0].mxu0
    %1233 = vmatprep.mubr.f32.mxu0 0.0
    %1234 = vmatmul.mubr.f32.gmra.mrb[0].mxu0 %v1162
    %v1235 = vpop.f32.mrb[0].mxu0
    %v1236 = vadd.f32 %v1157, %v1235
    %v1237 = vpop.f32.mrb[0].mxu0
    %1238 = vdwg.mxu0
    %v1239 = vadd.f32 %v1053, %v1231
    %v1240 = vadd.f32 %v1054, %v1236
    %v1241 = vsel %vm159, %v1239, 0.0
    %1242 = vadd.xlane.f32.xlu0 %v1241
    %v1243 = vpop.xlane.xlu0 %1242
    %v1244 = vsel %vm159, %v1240, 0.0
    %1245 = vadd.xlane.f32.xlu0 %v1244
    %v1246 = vpop.xlane.xlu0 %1245
    %v1247 = vmul.f32 %v1243, %v1018
    %v1248 = vmul.f32 %v1246, %v1018
    %v1249 = vmul.f32 %v1239, %v1239
    %v1250 = vmul.f32 %v1240, %v1240
    %v1251 = vsel %vm159, %v1249, 0.0
    %1252 = vadd.xlane.f32.xlu0 %v1251
    %v1253 = vpop.xlane.xlu0 %1252
    %v1254 = vsel %vm159, %v1250, 0.0
    %1255 = vadd.xlane.f32.xlu0 %v1254
    %v1256 = vpop.xlane.xlu0 %1255
    %v1257 = vmul.f32 %v1253, %v1018
    %v1258 = vmul.f32 %v1256, %v1018
    %v1259 = vmul.f32 %v1247, %v1247
    %v1260 = vmul.f32 %v1248, %v1248
    %v1261 = vsub.f32 %v1257, %v1259
    %v1262 = vsub.f32 %v1258, %v1260
    %v1263 = vsub.f32 %v1239, %v1247
    %v1264 = vsub.f32 %v1240, %v1248
    %v1265 = vadd.f32 %v1261, 1e-05
    %v1266 = vadd.f32 %v1262, 1e-05
    %v1267 = vrsqrt.pop %v1265
    %v1268 = vrsqrt.pop %v1266
    %v1269 = vmul.f32 %v1263, %v1267
    %v1270 = vmul.f32 %v1264, %v1268
    %v1271 = vlaneseq
    %v1272 = vshrl.u32 %v1271, 7
    %v1273 = vsub.s32 0, %v1272
    %v1274 = vrot.slane %v150, %v1273
    %v1275 = vmul.f32 %v1269, %v1274
    %v1276 = vmul.f32 %v1270, %v1274
    %v1277 = vlaneseq
    %v1278 = vshrl.u32 %v1277, 7
    %v1279 = vsub.s32 1, %v1278
    %v1280 = vrot.slane %v150, %v1279
    %v1281 = vadd.f32 %v1275, %v1280
    %v1282 = vadd.f32 %v1276, %v1280
    %s1283 = scalar_lea.vmem %s7, 16
    %v1284 = vld [vmem:[%s1283] sm:$0xff]
    %v1285 = vld [vmem:[%s1283 + $0x8] sm:$0x3]
    %s1286 = scalar_lea.vmem %s1, 32
    %v1287 = vld [vmem:[%s1286] sm:$0xff]
    %v1288 = vld [vmem:[%s1286 + $0x8] sm:$0xff]
    %v1289 = vld [vmem:[%s1286 + $0x10] sm:$0xff]
    %v1290 = vld [vmem:[%s1286 + $0x18] sm:$0xff]
    %v1291 = vlaneseq
    %v1292 = vshrl.u32 %v1291, 7
    %v1293 = vsub.s32 0, %v1292
    %v1294 = vrot.slane %v1284, %v1293
    %v1296 = vsel %vm159, %v1281, 0
    %v1299 = vsel %vm159, %v1282, 0
    %1301 = vmatprep.subr.mxu0 0.0
    %1302 = vmatpush1.msra.mxu0 %v1287
    %1303 = vmatprep.subr.mxu0 0.0
    %1304 = vmatpush1.msra.mxu0 %v1288
    %1305 = vmatprep.subr.mxu0 0.0
    %1306 = vmatpush1.msra.mxu0 %v1289
    %1307 = vmatprep.subr.mxu0 0.0
    %1308 = vmatpush1.msra.mxu0 %v1290
    %1309 = vmatprep.subr.mxu0 0.0
    %1310 = vmatpush1.msra.mxu0 0.0
    %1311 = vmatprep.subr.mxu0 0.0
    %1312 = vmatpush1.msra.mxu0 0.0
    %1313 = vmatprep.subr.mxu0 0.0
    %1314 = vmatpush1.msra.mxu0 0.0
    %1315 = vmatprep.subr.mxu0 0.0
    %1316 = vmatpush1.msra.mxu0 0.0
    %1317 = vmatprep.subr.mxu0 0.0
    %1318 = vmatpush1.msra.mxu0 0.0
    %1319 = vmatprep.subr.mxu0 0.0
    %1320 = vmatpush1.msra.mxu0 0.0
    %1321 = vmatprep.subr.mxu0 0.0
    %1322 = vmatpush1.msra.mxu0 0.0
    %1323 = vmatprep.subr.mxu0 0.0
    %1324 = vmatpush1.msra.mxu0 0.0
    %1325 = vmatprep.subr.mxu0 0.0
    %1326 = vmatpush1.msra.mxu0 0.0
    %1327 = vmatprep.subr.mxu0 0.0
    %1328 = vmatpush1.msra.mxu0 0.0
    %1329 = vmatprep.subr.mxu0 0.0
    %1330 = vmatpush1.msra.mxu0 0.0
    %1331 = vmatprep.subr.mxu0 0.0
    %1332 = vmatpush1.msra.mxu0 0.0
    %1333 = vmatprep.subr.mxu0 0.0
    %1334 = vmatpush1.msra.mxu0 0.0
    %1335 = vmatprep.subr.mxu0 0.0
    %1336 = vmatpush1.msra.mxu0 0.0
    %1337 = vmatprep.subr.mxu0 0.0
    %1338 = vmatpush1.msra.mxu0 0.0
    %1339 = vmatprep.subr.mxu0 0.0
    %1340 = vmatpush1.msra.mxu0 0.0
    %1341 = vmatprep.subr.mxu0 0.0
    %1342 = vmatpush1.msra.mxu0 0.0
    %1343 = vmatprep.subr.mxu0 0.0
    %1344 = vmatpush1.msra.mxu0 0.0
    %1345 = vmatprep.subr.mxu0 0.0
    %1346 = vmatpush1.msra.mxu0 0.0
    %1347 = vmatprep.subr.mxu0 0.0
    %1348 = vmatpush1.msra.mxu0 0.0
    %1349 = vmatprep.subr.mxu0 0.0
    %1350 = vmatpush1.msra.mxu0 0.0
    %1351 = vmatprep.subr.mxu0 0.0
    %1352 = vmatpush1.msra.mxu0 0.0
    %1353 = vmatprep.subr.mxu0 0.0
    %1354 = vmatpush1.msra.mxu0 0.0
    %1355 = vmatprep.subr.mxu0 0.0
    %1356 = vmatpush1.msra.mxu0 0.0
    %1357 = vmatprep.subr.mxu0 0.0
    %1358 = vmatpush1.msra.mxu0 0.0
    %1359 = vmatprep.subr.mxu0 0.0
    %1360 = vmatpush1.msra.mxu0 0.0
    %1361 = vmatprep.subr.mxu0 0.0
    %1362 = vmatpush1.msra.mxu0 0.0
    %1363 = vmatprep.subr.mxu0 0.0
    %1364 = vmatpush1.msra.mxu0 0.0
    %1365 = vmatprep.mubr.f32.mxu0 0.0
    %1366 = vmatmul.mubr.f32.gmra.mrb[0].mxu0 %v1296
    %v1367 = vpop.f32.mrb[0].mxu0
    %v1368 = vadd.f32 %v1294, %v1367
    %v1369 = vpop.f32.mrb[0].mxu0
    %1370 = vmatprep.mubr.f32.mxu0 0.0
    %1371 = vmatmul.mubr.f32.gmra.mrb[0].mxu0 %v1299
    %v1372 = vpop.f32.mrb[0].mxu0
    %v1373 = vadd.f32 %v1294, %v1372
    %v1374 = vpop.f32.mrb[0].mxu0
    %1375 = vdwg.mxu0
    %1376 = vmatprep.subr.mxu0 0.0
    %1377 = vmatpush1.msra.mxu0 %v1281
    %1378 = vmatprep.subr.mxu0 0.0
    %1379 = vmatpush1.msra.mxu0 %v1282
    %1380 = vmatprep.subr.mxu0 0.0
    %1381 = vmatpush1.msra.mxu0 0.0
    %1382 = vmatprep.subr.mxu0 0.0
    %1383 = vmatpush1.msra.mxu0 0.0
    %1384 = vmatprep.subr.mxu0 0.0
    %1385 = vmatpush1.msra.mxu0 0.0
    %1386 = vmatprep.subr.mxu0 0.0
    %1387 = vmatpush1.msra.mxu0 0.0
    %1388 = vmatprep.subr.mxu0 0.0
    %1389 = vmatpush1.msra.mxu0 0.0
    %1390 = vmatprep.subr.mxu0 0.0
    %1391 = vmatpush1.msra.mxu0 0.0
    %1392 = vmatprep.subr.mxu0 0.0
    %1393 = vmatpush1.msra.mxu0 0.0
    %1394 = vmatprep.subr.mxu0 0.0
    %1395 = vmatpush1.msra.mxu0 0.0
    %1396 = vmatprep.subr.mxu0 0.0
    %1397 = vmatpush1.msra.mxu0 0.0
    %1398 = vmatprep.subr.mxu0 0.0
    %1399 = vmatpush1.msra.mxu0 0.0
    %1400 = vmatprep.subr.mxu0 0.0
    %1401 = vmatpush1.msra.mxu0 0.0
    %1402 = vmatprep.subr.mxu0 0.0
    %1403 = vmatpush1.msra.mxu0 0.0
    %1404 = vmatprep.subr.mxu0 0.0
    %1405 = vmatpush1.msra.mxu0 0.0
    %1406 = vmatprep.subr.mxu0 0.0
    %1407 = vmatpush1.msra.mxu0 0.0
    %1408 = vmatprep.subr.mxu0 0.0
    %1409 = vmatpush1.msra.mxu0 0.0
    %1410 = vmatprep.subr.mxu0 0.0
    %1411 = vmatpush1.msra.mxu0 0.0
    %1412 = vmatprep.subr.mxu0 0.0
    %1413 = vmatpush1.msra.mxu0 0.0
    %1414 = vmatprep.subr.mxu0 0.0
    %1415 = vmatpush1.msra.mxu0 0.0
    %1416 = vmatprep.subr.mxu0 0.0
    %1417 = vmatpush1.msra.mxu0 0.0
    %1418 = vmatprep.subr.mxu0 0.0
    %1419 = vmatpush1.msra.mxu0 0.0
    %1420 = vmatprep.subr.mxu0 0.0
    %1421 = vmatpush1.msra.mxu0 0.0
    %1422 = vmatprep.subr.mxu0 0.0
    %1423 = vmatpush1.msra.mxu0 0.0
    %1424 = vmatprep.subr.mxu0 0.0
    %1425 = vmatpush1.msra.mxu0 0.0
    %1426 = vmatprep.subr.mxu0 0.0
    %1427 = vmatpush1.msra.mxu0 0.0
    %1428 = vmatprep.subr.mxu0 0.0
    %1429 = vmatpush1.msra.mxu0 0.0
    %1430 = vmatprep.subr.mxu0 0.0
    %1431 = vmatpush1.msra.mxu0 0.0
    %1432 = vmatprep.subr.mxu0 0.0
    %1433 = vmatpush1.msra.mxu0 0.0
    %1434 = vmatprep.subr.mxu0 0.0
    %1435 = vmatpush1.msra.mxu0 0.0
    %1436 = vmatprep.subr.mxu0 0.0
    %1437 = vmatpush1.msra.mxu0 0.0
    %1438 = vmatprep.subr.mxu0 0.0
    %1439 = vmatpush1.msra.mxu0 0.0
    %1440 = vmatprep.mubr.f32.mxu0 0.0
    %1441 = vmatmul.mubr.f32.gmra.mrb[0].mxu0 %v243
    %v1442 = vpop.f32.mrb[0].mxu0
    %v1443 = vadd.f32 0.0, %v1442
    %v1444 = vpop.f32.mrb[0].mxu0
    %1445 = vmatprep.mubr.f32.mxu0 0.0
    %1446 = vmatmul.mubr.f32.gmra.mrb[0].mxu0 %v246
    %v1447 = vpop.f32.mrb[0].mxu0
    %v1448 = vadd.f32 0.0, %v1447
    %v1449 = vpop.f32.mrb[0].mxu0
    %1450 = vmatprep.mubr.f32.mxu0 0.0
    %1451 = vmatmul.mubr.f32.gmra.mrb[0].mxu0 %v249
    %v1452 = vpop.f32.mrb[0].mxu0
    %v1453 = vadd.f32 0.0, %v1452
    %v1454 = vpop.f32.mrb[0].mxu0
    %1455 = vmatprep.mubr.f32.mxu0 0.0
    %1456 = vmatmul.mubr.f32.gmra.mrb[0].mxu0 %v252
    %v1457 = vpop.f32.mrb[0].mxu0
    %v1458 = vadd.f32 0.0, %v1457
    %v1459 = vpop.f32.mrb[0].mxu0
    %1460 = vmatprep.mubr.f32.mxu0 0.0
    %1461 = vmatmul.mubr.f32.gmra.mrb[0].mxu0 %v255
    %v1462 = vpop.f32.mrb[0].mxu0
    %v1463 = vadd.f32 0.0, %v1462
    %v1464 = vpop.f32.mrb[0].mxu0
    %1465 = vmatprep.mubr.f32.mxu0 0.0
    %1466 = vmatmul.mubr.f32.gmra.mrb[0].mxu0 %v258
    %v1467 = vpop.f32.mrb[0].mxu0
    %v1468 = vadd.f32 0.0, %v1467
    %v1469 = vpop.f32.mrb[0].mxu0
    %1470 = vmatprep.mubr.f32.mxu0 0.0
    %1471 = vmatmul.mubr.f32.gmra.mrb[0].mxu0 %v261
    %v1472 = vpop.f32.mrb[0].mxu0
    %v1473 = vadd.f32 0.0, %v1472
    %v1474 = vpop.f32.mrb[0].mxu0
    %1475 = vmatprep.mubr.f32.mxu0 0.0
    %1476 = vmatmul.mubr.f32.gmra.mrb[0].mxu0 %v264
    %v1477 = vpop.f32.mrb[0].mxu0
    %v1478 = vadd.f32 0.0, %v1477
    %v1479 = vpop.f32.mrb[0].mxu0
    %1480 = vdwg.mxu0
    %s1481 = scalar_lea.vmem %s2, 32
    %v1482 = vld [vmem:[%s1481] sm:$0xff]
    %v1483 = vld [vmem:[%s1481 + $0x8] sm:$0xff]
    %v1484 = vld [vmem:[%s1481 + $0x10] sm:$0xff]
    %v1485 = vld [vmem:[%s1481 + $0x18] sm:$0xff]
    %v1486 = vlaneseq
    %v1487 = vshrl.u32 %v1486, 7
    %v1488 = vsub.s32 1, %v1487
    %v1489 = vrot.slane %v1284, %v1488
    %v1491 = vsel %vm159, %v1443, 0
    %v1494 = vsel %vm159, %v1448, 0
    %v1497 = vsel %vm159, %v1453, 0
    %v1500 = vsel %vm159, %v1458, 0
    %v1503 = vsel %vm159, %v1463, 0
    %v1506 = vsel %vm159, %v1468, 0
    %v1509 = vsel %vm159, %v1473, 0
    %v1512 = vsel %vm159, %v1478, 0
    %1514 = vmatprep.subr.mxu0 0.0
    %1515 = vmatpush1.msra.mxu0 %v1482
    %1516 = vmatprep.subr.mxu0 0.0
    %1517 = vmatpush1.msra.mxu0 %v1483
    %1518 = vmatprep.subr.mxu0 0.0
    %1519 = vmatpush1.msra.mxu0 %v1484
    %1520 = vmatprep.subr.mxu0 0.0
    %1521 = vmatpush1.msra.mxu0 %v1485
    %1522 = vmatprep.subr.mxu0 0.0
    %1523 = vmatpush1.msra.mxu0 0.0
    %1524 = vmatprep.subr.mxu0 0.0
    %1525 = vmatpush1.msra.mxu0 0.0
    %1526 = vmatprep.subr.mxu0 0.0
    %1527 = vmatpush1.msra.mxu0 0.0
    %1528 = vmatprep.subr.mxu0 0.0
    %1529 = vmatpush1.msra.mxu0 0.0
    %1530 = vmatprep.subr.mxu0 0.0
    %1531 = vmatpush1.msra.mxu0 0.0
    %1532 = vmatprep.subr.mxu0 0.0
    %1533 = vmatpush1.msra.mxu0 0.0
    %1534 = vmatprep.subr.mxu0 0.0
    %1535 = vmatpush1.msra.mxu0 0.0
    %1536 = vmatprep.subr.mxu0 0.0
    %1537 = vmatpush1.msra.mxu0 0.0
    %1538 = vmatprep.subr.mxu0 0.0
    %1539 = vmatpush1.msra.mxu0 0.0
    %1540 = vmatprep.subr.mxu0 0.0
    %1541 = vmatpush1.msra.mxu0 0.0
    %1542 = vmatprep.subr.mxu0 0.0
    %1543 = vmatpush1.msra.mxu0 0.0
    %1544 = vmatprep.subr.mxu0 0.0
    %1545 = vmatpush1.msra.mxu0 0.0
    %1546 = vmatprep.subr.mxu0 0.0
    %1547 = vmatpush1.msra.mxu0 0.0
    %1548 = vmatprep.subr.mxu0 0.0
    %1549 = vmatpush1.msra.mxu0 0.0
    %1550 = vmatprep.subr.mxu0 0.0
    %1551 = vmatpush1.msra.mxu0 0.0
    %1552 = vmatprep.subr.mxu0 0.0
    %1553 = vmatpush1.msra.mxu0 0.0
    %1554 = vmatprep.subr.mxu0 0.0
    %1555 = vmatpush1.msra.mxu0 0.0
    %1556 = vmatprep.subr.mxu0 0.0
    %1557 = vmatpush1.msra.mxu0 0.0
    %1558 = vmatprep.subr.mxu0 0.0
    %1559 = vmatpush1.msra.mxu0 0.0
    %1560 = vmatprep.subr.mxu0 0.0
    %1561 = vmatpush1.msra.mxu0 0.0
    %1562 = vmatprep.subr.mxu0 0.0
    %1563 = vmatpush1.msra.mxu0 0.0
    %1564 = vmatprep.subr.mxu0 0.0
    %1565 = vmatpush1.msra.mxu0 0.0
    %1566 = vmatprep.subr.mxu0 0.0
    %1567 = vmatpush1.msra.mxu0 0.0
    %1568 = vmatprep.subr.mxu0 0.0
    %1569 = vmatpush1.msra.mxu0 0.0
    %1570 = vmatprep.subr.mxu0 0.0
    %1571 = vmatpush1.msra.mxu0 0.0
    %1572 = vmatprep.subr.mxu0 0.0
    %1573 = vmatpush1.msra.mxu0 0.0
    %1574 = vmatprep.subr.mxu0 0.0
    %1575 = vmatpush1.msra.mxu0 0.0
    %1576 = vmatprep.subr.mxu0 0.0
    %1577 = vmatpush1.msra.mxu0 0.0
    %1578 = vmatprep.mubr.f32.mxu0 0.0
    %1579 = vmatmul.mubr.f32.gmra.mrb[0].mxu0 %v1491
    %v1580 = vpop.f32.mrb[0].mxu0
    %v1581 = vadd.f32 %v1489, %v1580
    %v1582 = vpop.f32.mrb[0].mxu0
    %1583 = vmatprep.mubr.f32.mxu0 0.0
    %1584 = vmatmul.mubr.f32.gmra.mrb[0].mxu0 %v1494
    %v1585 = vpop.f32.mrb[0].mxu0
    %v1586 = vadd.f32 %v1489, %v1585
    %v1587 = vpop.f32.mrb[0].mxu0
    %1588 = vmatprep.mubr.f32.mxu0 0.0
    %1589 = vmatmul.mubr.f32.gmra.mrb[0].mxu0 %v1497
    %v1590 = vpop.f32.mrb[0].mxu0
    %v1591 = vadd.f32 %v1489, %v1590
    %v1592 = vpop.f32.mrb[0].mxu0
    %1593 = vmatprep.mubr.f32.mxu0 0.0
    %1594 = vmatmul.mubr.f32.gmra.mrb[0].mxu0 %v1500
    %v1595 = vpop.f32.mrb[0].mxu0
    %v1596 = vadd.f32 %v1489, %v1595
    %v1597 = vpop.f32.mrb[0].mxu0
    %1598 = vmatprep.mubr.f32.mxu0 0.0
    %1599 = vmatmul.mubr.f32.gmra.mrb[0].mxu0 %v1503
    %v1600 = vpop.f32.mrb[0].mxu0
    %v1601 = vadd.f32 %v1489, %v1600
    %v1602 = vpop.f32.mrb[0].mxu0
    %1603 = vmatprep.mubr.f32.mxu0 0.0
    %1604 = vmatmul.mubr.f32.gmra.mrb[0].mxu0 %v1506
    %v1605 = vpop.f32.mrb[0].mxu0
    %v1606 = vadd.f32 %v1489, %v1605
    %v1607 = vpop.f32.mrb[0].mxu0
    %1608 = vmatprep.mubr.f32.mxu0 0.0
    %1609 = vmatmul.mubr.f32.gmra.mrb[0].mxu0 %v1509
    %v1610 = vpop.f32.mrb[0].mxu0
    %v1611 = vadd.f32 %v1489, %v1610
    %v1612 = vpop.f32.mrb[0].mxu0
    %1613 = vmatprep.mubr.f32.mxu0 0.0
    %1614 = vmatmul.mubr.f32.gmra.mrb[0].mxu0 %v1512
    %v1615 = vpop.f32.mrb[0].mxu0
    %v1616 = vadd.f32 %v1489, %v1615
    %v1617 = vpop.f32.mrb[0].mxu0
    %1618 = vdwg.mxu0
    %v1619 = vmul.f32 %v1581, %v96
    %v1620 = vmul.f32 %v1586, %v97
    %v1621 = vmul.f32 %v1591, %v98
    %v1622 = vmul.f32 %v1596, %v99
    %v1623 = vmul.f32 %v1601, %v100
    %v1624 = vmul.f32 %v1606, %v101
    %v1625 = vmul.f32 %v1611, %v102
    %v1626 = vmul.f32 %v1616, %v103
    %s1627 = scalar_lea.vmem %s3, 32
    %v1628 = vld [vmem:[%s1627] sm:$0xff]
    %v1629 = vld [vmem:[%s1627 + $0x8] sm:$0xff]
    %v1630 = vld [vmem:[%s1627 + $0x10] sm:$0xff]
    %v1631 = vld [vmem:[%s1627 + $0x18] sm:$0xff]
    %v1632 = vlaneseq
    %v1633 = vshrl.u32 %v1632, 7
    %v1634 = vsub.s32 2, %v1633
    %v1635 = vrot.slane %v1284, %v1634
    %1636 = vmatprep.subr.mxu0 0.0
    %1637 = vmatpush1.msra.mxu0 %v1628
    %1638 = vmatprep.subr.mxu0 0.0
    %1639 = vmatpush1.msra.mxu0 %v1629
    %1640 = vmatprep.subr.mxu0 0.0
    %1641 = vmatpush1.msra.mxu0 %v1630
    %1642 = vmatprep.subr.mxu0 0.0
    %1643 = vmatpush1.msra.mxu0 %v1631
    %1644 = vmatprep.subr.mxu0 0.0
    %1645 = vmatpush1.msra.mxu0 0.0
    %1646 = vmatprep.subr.mxu0 0.0
    %1647 = vmatpush1.msra.mxu0 0.0
    %1648 = vmatprep.subr.mxu0 0.0
    %1649 = vmatpush1.msra.mxu0 0.0
    %1650 = vmatprep.subr.mxu0 0.0
    %1651 = vmatpush1.msra.mxu0 0.0
    %1652 = vmatprep.subr.mxu0 0.0
    %1653 = vmatpush1.msra.mxu0 0.0
    %1654 = vmatprep.subr.mxu0 0.0
    %1655 = vmatpush1.msra.mxu0 0.0
    %1656 = vmatprep.subr.mxu0 0.0
    %1657 = vmatpush1.msra.mxu0 0.0
    %1658 = vmatprep.subr.mxu0 0.0
    %1659 = vmatpush1.msra.mxu0 0.0
    %1660 = vmatprep.subr.mxu0 0.0
    %1661 = vmatpush1.msra.mxu0 0.0
    %1662 = vmatprep.subr.mxu0 0.0
    %1663 = vmatpush1.msra.mxu0 0.0
    %1664 = vmatprep.subr.mxu0 0.0
    %1665 = vmatpush1.msra.mxu0 0.0
    %1666 = vmatprep.subr.mxu0 0.0
    %1667 = vmatpush1.msra.mxu0 0.0
    %1668 = vmatprep.subr.mxu0 0.0
    %1669 = vmatpush1.msra.mxu0 0.0
    %1670 = vmatprep.subr.mxu0 0.0
    %1671 = vmatpush1.msra.mxu0 0.0
    %1672 = vmatprep.subr.mxu0 0.0
    %1673 = vmatpush1.msra.mxu0 0.0
    %1674 = vmatprep.subr.mxu0 0.0
    %1675 = vmatpush1.msra.mxu0 0.0
    %1676 = vmatprep.subr.mxu0 0.0
    %1677 = vmatpush1.msra.mxu0 0.0
    %1678 = vmatprep.subr.mxu0 0.0
    %1679 = vmatpush1.msra.mxu0 0.0
    %1680 = vmatprep.subr.mxu0 0.0
    %1681 = vmatpush1.msra.mxu0 0.0
    %1682 = vmatprep.subr.mxu0 0.0
    %1683 = vmatpush1.msra.mxu0 0.0
    %1684 = vmatprep.subr.mxu0 0.0
    %1685 = vmatpush1.msra.mxu0 0.0
    %1686 = vmatprep.subr.mxu0 0.0
    %1687 = vmatpush1.msra.mxu0 0.0
    %1688 = vmatprep.subr.mxu0 0.0
    %1689 = vmatpush1.msra.mxu0 0.0
    %1690 = vmatprep.subr.mxu0 0.0
    %1691 = vmatpush1.msra.mxu0 0.0
    %1692 = vmatprep.subr.mxu0 0.0
    %1693 = vmatpush1.msra.mxu0 0.0
    %1694 = vmatprep.subr.mxu0 0.0
    %1695 = vmatpush1.msra.mxu0 0.0
    %1696 = vmatprep.subr.mxu0 0.0
    %1697 = vmatpush1.msra.mxu0 0.0
    %1698 = vmatprep.subr.mxu0 0.0
    %1699 = vmatpush1.msra.mxu0 0.0
    %1700 = vmatprep.mubr.f32.mxu0 0.0
    %1701 = vmatmul.mubr.f32.gmra.mrb[0].mxu0 %v1491
    %v1702 = vpop.f32.mrb[0].mxu0
    %v1703 = vadd.f32 %v1635, %v1702
    %v1704 = vpop.f32.mrb[0].mxu0
    %1705 = vmatprep.mubr.f32.mxu0 0.0
    %1706 = vmatmul.mubr.f32.gmra.mrb[0].mxu0 %v1494
    %v1707 = vpop.f32.mrb[0].mxu0
    %v1708 = vadd.f32 %v1635, %v1707
    %v1709 = vpop.f32.mrb[0].mxu0
    %1710 = vmatprep.mubr.f32.mxu0 0.0
    %1711 = vmatmul.mubr.f32.gmra.mrb[0].mxu0 %v1497
    %v1712 = vpop.f32.mrb[0].mxu0
    %v1713 = vadd.f32 %v1635, %v1712
    %v1714 = vpop.f32.mrb[0].mxu0
    %1715 = vmatprep.mubr.f32.mxu0 0.0
    %1716 = vmatmul.mubr.f32.gmra.mrb[0].mxu0 %v1500
    %v1717 = vpop.f32.mrb[0].mxu0
    %v1718 = vadd.f32 %v1635, %v1717
    %v1719 = vpop.f32.mrb[0].mxu0
    %1720 = vmatprep.mubr.f32.mxu0 0.0
    %1721 = vmatmul.mubr.f32.gmra.mrb[0].mxu0 %v1503
    %v1722 = vpop.f32.mrb[0].mxu0
    %v1723 = vadd.f32 %v1635, %v1722
    %v1724 = vpop.f32.mrb[0].mxu0
    %1725 = vmatprep.mubr.f32.mxu0 0.0
    %1726 = vmatmul.mubr.f32.gmra.mrb[0].mxu0 %v1506
    %v1727 = vpop.f32.mrb[0].mxu0
    %v1728 = vadd.f32 %v1635, %v1727
    %v1729 = vpop.f32.mrb[0].mxu0
    %1730 = vmatprep.mubr.f32.mxu0 0.0
    %1731 = vmatmul.mubr.f32.gmra.mrb[0].mxu0 %v1509
    %v1732 = vpop.f32.mrb[0].mxu0
    %v1733 = vadd.f32 %v1635, %v1732
    %v1734 = vpop.f32.mrb[0].mxu0
    %1735 = vmatprep.mubr.f32.mxu0 0.0
    %1736 = vmatmul.mubr.f32.gmra.mrb[0].mxu0 %v1512
    %v1737 = vpop.f32.mrb[0].mxu0
    %v1738 = vadd.f32 %v1635, %v1737
    %v1739 = vpop.f32.mrb[0].mxu0
    %1740 = vdwg.mxu0
    %v1741 = vmul.f32 %v1703, %v96
    %v1742 = vmul.f32 %v1708, %v97
    %v1743 = vmul.f32 %v1713, %v98
    %v1744 = vmul.f32 %v1718, %v99
    %v1745 = vmul.f32 %v1723, %v100
    %v1746 = vmul.f32 %v1728, %v101
    %v1747 = vmul.f32 %v1733, %v102
    %v1748 = vmul.f32 %v1738, %v103
    %v1750 = vsel %vm159, %v1368, 0
    %v1753 = vsel %vm159, %v1373, 0
    %v1756 = vsel %vm159, %v1619, 0
    %v1759 = vsel %vm159, %v1620, 0
    %v1762 = vsel %vm159, %v1621, 0
    %v1765 = vsel %vm159, %v1622, 0
    %v1768 = vsel %vm159, %v1623, 0
    %v1771 = vsel %vm159, %v1624, 0
    %v1774 = vsel %vm159, %v1625, 0
    %v1777 = vsel %vm159, %v1626, 0
    %1779 = vmatprep.subr.mxu0 0.0
    %1780 = vmatpush1.xpose.msra.mxu0 %v1756
    %1781 = vmatprep.subr.mxu0 0.0
    %1782 = vmatpush1.xpose.msra.mxu0 %v1759
    %1783 = vmatprep.subr.mxu0 0.0
    %1784 = vmatpush1.xpose.msra.mxu0 %v1762
    %1785 = vmatprep.subr.mxu0 0.0
    %1786 = vmatpush1.xpose.msra.mxu0 %v1765
    %1787 = vmatprep.subr.mxu0 0.0
    %1788 = vmatpush1.xpose.msra.mxu0 %v1768
    %1789 = vmatprep.subr.mxu0 0.0
    %1790 = vmatpush1.xpose.msra.mxu0 %v1771
    %1791 = vmatprep.subr.mxu0 0.0
    %1792 = vmatpush1.xpose.msra.mxu0 %v1774
    %1793 = vmatprep.subr.mxu0 0.0
    %1794 = vmatpush1.xpose.msra.mxu0 %v1777
    %1795 = vmatprep.subr.mxu0 0.0
    %1796 = vmatpush1.xpose.msra.mxu0 0.0
    %1797 = vmatprep.subr.mxu0 0.0
    %1798 = vmatpush1.xpose.msra.mxu0 0.0
    %1799 = vmatprep.subr.mxu0 0.0
    %1800 = vmatpush1.xpose.msra.mxu0 0.0
    %1801 = vmatprep.subr.mxu0 0.0
    %1802 = vmatpush1.xpose.msra.mxu0 0.0
    %1803 = vmatprep.subr.mxu0 0.0
    %1804 = vmatpush1.xpose.msra.mxu0 0.0
    %1805 = vmatprep.subr.mxu0 0.0
    %1806 = vmatpush1.xpose.msra.mxu0 0.0
    %1807 = vmatprep.subr.mxu0 0.0
    %1808 = vmatpush1.xpose.msra.mxu0 0.0
    %1809 = vmatprep.subr.mxu0 0.0
    %1810 = vmatpush1.xpose.msra.mxu0 0.0
    %1811 = vmatprep.subr.mxu0 0.0
    %1812 = vmatpush1.xpose.msra.mxu0 0.0
    %1813 = vmatprep.subr.mxu0 0.0
    %1814 = vmatpush1.xpose.msra.mxu0 0.0
    %1815 = vmatprep.subr.mxu0 0.0
    %1816 = vmatpush1.xpose.msra.mxu0 0.0
    %1817 = vmatprep.subr.mxu0 0.0
    %1818 = vmatpush1.xpose.msra.mxu0 0.0
    %1819 = vmatprep.subr.mxu0 0.0
    %1820 = vmatpush1.xpose.msra.mxu0 0.0
    %1821 = vmatprep.subr.mxu0 0.0
    %1822 = vmatpush1.xpose.msra.mxu0 0.0
    %1823 = vmatprep.subr.mxu0 0.0
    %1824 = vmatpush1.xpose.msra.mxu0 0.0
    %1825 = vmatprep.subr.mxu0 0.0
    %1826 = vmatpush1.xpose.msra.mxu0 0.0
    %1827 = vmatprep.subr.mxu0 0.0
    %1828 = vmatpush1.xpose.msra.mxu0 0.0
    %1829 = vmatprep.subr.mxu0 0.0
    %1830 = vmatpush1.xpose.msra.mxu0 0.0
    %1831 = vmatprep.subr.mxu0 0.0
    %1832 = vmatpush1.xpose.msra.mxu0 0.0
    %1833 = vmatprep.subr.mxu0 0.0
    %1834 = vmatpush1.xpose.msra.mxu0 0.0
    %1835 = vmatprep.subr.mxu0 0.0
    %1836 = vmatpush1.xpose.msra.mxu0 0.0
    %1837 = vmatprep.subr.mxu0 0.0
    %1838 = vmatpush1.xpose.msra.mxu0 0.0
    %1839 = vmatprep.subr.mxu0 0.0
    %1840 = vmatpush1.xpose.msra.mxu0 0.0
    %1841 = vmatprep.subr.mxu0 0.0
    %1842 = vmatpush1.xpose.msra.mxu0 0.0
    %1843 = vmatprep.mubr.f32.mxu0 0.0
    %1844 = vmatmul.mubr.f32.gmra.mrb[0].mxu0 %v1750
    %v1845 = vpop.f32.mrb[0].mxu0
    %v1846 = vadd.f32 %v104, %v1845
    %v1847 = vpop.f32.mrb[0].mxu0
    %1848 = vmatprep.mubr.f32.mxu0 0.0
    %1849 = vmatmul.mubr.f32.gmra.mrb[0].mxu0 %v1753
    %v1850 = vpop.f32.mrb[0].mxu0
    %v1851 = vadd.f32 %v105, %v1850
    %v1852 = vpop.f32.mrb[0].mxu0
    %1853 = vdwg.mxu0
    %v1854 = vsel %vm742, %v1846, -inf
    %1855 = vmax.xlane.f32.xlu0 %v1854
    %v1856 = vpop.xlane.xlu0 %1855
    %v1857 = vsel %vm742, %v1851, -inf
    %1858 = vmax.xlane.f32.xlu0 %v1857
    %v1859 = vpop.xlane.xlu0 %1858
    %v1860 = vsub.f32 %v1846, %v1856
    %v1861 = vsub.f32 %v1851, %v1859
    %v1862 = vmul.f32 %v1860, 1.442695
    %v1863 = vpow.pop %v1862
    %v1864 = vmul.f32 %v1861, 1.442695
    %v1865 = vpow.pop %v1864
    %v1867 = vsel %vm742, %v1863, 0
    %v1870 = vsel %vm742, %v1865, 0
    %1872 = vmatprep.subr.mxu0 0.0
    %1873 = vmatpush1.msra.mxu0 %v106
    %1874 = vmatprep.subr.mxu0 0.0
    %1875 = vmatpush1.msra.mxu0 %v107
    %1876 = vmatprep.subr.mxu0 0.0
    %1877 = vmatpush1.msra.mxu0 %v108
    %1878 = vmatprep.subr.mxu0 0.0
    %1879 = vmatpush1.msra.mxu0 %v109
    %1880 = vmatprep.subr.mxu0 0.0
    %1881 = vmatpush1.msra.mxu0 %v110
    %1882 = vmatprep.subr.mxu0 0.0
    %1883 = vmatpush1.msra.mxu0 %v111
    %1884 = vmatprep.subr.mxu0 0.0
    %1885 = vmatpush1.msra.mxu0 %v112
    %1886 = vmatprep.subr.mxu0 0.0
    %1887 = vmatpush1.msra.mxu0 %v113
    %1888 = vmatprep.subr.mxu0 0.0
    %1889 = vmatpush1.msra.mxu0 0.0
    %1890 = vmatprep.subr.mxu0 0.0
    %1891 = vmatpush1.msra.mxu0 0.0
    %1892 = vmatprep.subr.mxu0 0.0
    %1893 = vmatpush1.msra.mxu0 0.0
    %1894 = vmatprep.subr.mxu0 0.0
    %1895 = vmatpush1.msra.mxu0 0.0
    %1896 = vmatprep.subr.mxu0 0.0
    %1897 = vmatpush1.msra.mxu0 0.0
    %1898 = vmatprep.subr.mxu0 0.0
    %1899 = vmatpush1.msra.mxu0 0.0
    %1900 = vmatprep.subr.mxu0 0.0
    %1901 = vmatpush1.msra.mxu0 0.0
    %1902 = vmatprep.subr.mxu0 0.0
    %1903 = vmatpush1.msra.mxu0 0.0
    %1904 = vmatprep.subr.mxu0 0.0
    %1905 = vmatpush1.msra.mxu0 0.0
    %1906 = vmatprep.subr.mxu0 0.0
    %1907 = vmatpush1.msra.mxu0 0.0
    %1908 = vmatprep.subr.mxu0 0.0
    %1909 = vmatpush1.msra.mxu0 0.0
    %1910 = vmatprep.subr.mxu0 0.0
    %1911 = vmatpush1.msra.mxu0 0.0
    %1912 = vmatprep.subr.mxu0 0.0
    %1913 = vmatpush1.msra.mxu0 0.0
    %1914 = vmatprep.subr.mxu0 0.0
    %1915 = vmatpush1.msra.mxu0 0.0
    %1916 = vmatprep.subr.mxu0 0.0
    %1917 = vmatpush1.msra.mxu0 0.0
    %1918 = vmatprep.subr.mxu0 0.0
    %1919 = vmatpush1.msra.mxu0 0.0
    %1920 = vmatprep.subr.mxu0 0.0
    %1921 = vmatpush1.msra.mxu0 0.0
    %1922 = vmatprep.subr.mxu0 0.0
    %1923 = vmatpush1.msra.mxu0 0.0
    %1924 = vmatprep.subr.mxu0 0.0
    %1925 = vmatpush1.msra.mxu0 0.0
    %1926 = vmatprep.subr.mxu0 0.0
    %1927 = vmatpush1.msra.mxu0 0.0
    %1928 = vmatprep.subr.mxu0 0.0
    %1929 = vmatpush1.msra.mxu0 0.0
    %1930 = vmatprep.subr.mxu0 0.0
    %1931 = vmatpush1.msra.mxu0 0.0
    %1932 = vmatprep.subr.mxu0 0.0
    %1933 = vmatpush1.msra.mxu0 0.0
    %1934 = vmatprep.subr.mxu0 0.0
    %1935 = vmatpush1.msra.mxu0 0.0
    %1936 = vmatprep.mubr.f32.mxu0 0.0
    %1937 = vmatmul.mubr.f32.gmra.mrb[0].mxu0 %v1867
    %v1938 = vpop.f32.mrb[0].mxu0
    %v1939 = vadd.f32 0.0, %v1938
    %v1940 = vpop.f32.mrb[0].mxu0
    %1941 = vmatprep.mubr.f32.mxu0 0.0
    %1942 = vmatmul.mubr.f32.gmra.mrb[0].mxu0 %v1870
    %v1943 = vpop.f32.mrb[0].mxu0
    %v1944 = vadd.f32 0.0, %v1943
    %v1945 = vpop.f32.mrb[0].mxu0
    %1946 = vdwg.mxu0
    %v1947 = vrcp.pop %v1939
    %v1948 = vrcp.pop %v1944
    %v1949 = vmul.f32 %v1863, %v1947
    %v1950 = vmul.f32 %v1865, %v1948
    %v1952 = vsel %vm742, %v1949, 0
    %v1955 = vsel %vm742, %v1950, 0
    %1957 = vmatprep.subr.mxu0 0.0
    %1958 = vmatpush1.msra.mxu0 %v1741
    %1959 = vmatprep.subr.mxu0 0.0
    %1960 = vmatpush1.msra.mxu0 %v1742
    %1961 = vmatprep.subr.mxu0 0.0
    %1962 = vmatpush1.msra.mxu0 %v1743
    %1963 = vmatprep.subr.mxu0 0.0
    %1964 = vmatpush1.msra.mxu0 %v1744
    %1965 = vmatprep.subr.mxu0 0.0
    %1966 = vmatpush1.msra.mxu0 %v1745
    %1967 = vmatprep.subr.mxu0 0.0
    %1968 = vmatpush1.msra.mxu0 %v1746
    %1969 = vmatprep.subr.mxu0 0.0
    %1970 = vmatpush1.msra.mxu0 %v1747
    %1971 = vmatprep.subr.mxu0 0.0
    %1972 = vmatpush1.msra.mxu0 %v1748
    %1973 = vmatprep.subr.mxu0 0.0
    %1974 = vmatpush1.msra.mxu0 0.0
    %1975 = vmatprep.subr.mxu0 0.0
    %1976 = vmatpush1.msra.mxu0 0.0
    %1977 = vmatprep.subr.mxu0 0.0
    %1978 = vmatpush1.msra.mxu0 0.0
    %1979 = vmatprep.subr.mxu0 0.0
    %1980 = vmatpush1.msra.mxu0 0.0
    %1981 = vmatprep.subr.mxu0 0.0
    %1982 = vmatpush1.msra.mxu0 0.0
    %1983 = vmatprep.subr.mxu0 0.0
    %1984 = vmatpush1.msra.mxu0 0.0
    %1985 = vmatprep.subr.mxu0 0.0
    %1986 = vmatpush1.msra.mxu0 0.0
    %1987 = vmatprep.subr.mxu0 0.0
    %1988 = vmatpush1.msra.mxu0 0.0
    %1989 = vmatprep.subr.mxu0 0.0
    %1990 = vmatpush1.msra.mxu0 0.0
    %1991 = vmatprep.subr.mxu0 0.0
    %1992 = vmatpush1.msra.mxu0 0.0
    %1993 = vmatprep.subr.mxu0 0.0
    %1994 = vmatpush1.msra.mxu0 0.0
    %1995 = vmatprep.subr.mxu0 0.0
    %1996 = vmatpush1.msra.mxu0 0.0
    %1997 = vmatprep.subr.mxu0 0.0
    %1998 = vmatpush1.msra.mxu0 0.0
    %1999 = vmatprep.subr.mxu0 0.0
    %2000 = vmatpush1.msra.mxu0 0.0
    %2001 = vmatprep.subr.mxu0 0.0
    %2002 = vmatpush1.msra.mxu0 0.0
    %2003 = vmatprep.subr.mxu0 0.0
    %2004 = vmatpush1.msra.mxu0 0.0
    %2005 = vmatprep.subr.mxu0 0.0
    %2006 = vmatpush1.msra.mxu0 0.0
    %2007 = vmatprep.subr.mxu0 0.0
    %2008 = vmatpush1.msra.mxu0 0.0
    %2009 = vmatprep.subr.mxu0 0.0
    %2010 = vmatpush1.msra.mxu0 0.0
    %2011 = vmatprep.subr.mxu0 0.0
    %2012 = vmatpush1.msra.mxu0 0.0
    %2013 = vmatprep.subr.mxu0 0.0
    %2014 = vmatpush1.msra.mxu0 0.0
    %2015 = vmatprep.subr.mxu0 0.0
    %2016 = vmatpush1.msra.mxu0 0.0
    %2017 = vmatprep.subr.mxu0 0.0
    %2018 = vmatpush1.msra.mxu0 0.0
    %2019 = vmatprep.subr.mxu0 0.0
    %2020 = vmatpush1.msra.mxu0 0.0
    %2021 = vmatprep.mubr.f32.mxu0 0.0
    %2022 = vmatmul.mubr.f32.gmra.mrb[0].mxu0 %v1952
    %v2023 = vpop.f32.mrb[0].mxu0
    %v2024 = vadd.f32 0.0, %v2023
    %v2025 = vpop.f32.mrb[0].mxu0
    %2026 = vmatprep.mubr.f32.mxu0 0.0
    %2027 = vmatmul.mubr.f32.gmra.mrb[0].mxu0 %v1955
    %v2028 = vpop.f32.mrb[0].mxu0
    %v2029 = vadd.f32 0.0, %v2028
    %v2030 = vpop.f32.mrb[0].mxu0
    %2031 = vdwg.mxu0
    %s2032 = scalar_lea.vmem %s4, 32
    %v2033 = vld [vmem:[%s2032] sm:$0xff]
    %v2034 = vld [vmem:[%s2032 + $0x8] sm:$0xff]
    %v2035 = vld [vmem:[%s2032 + $0x10] sm:$0xff]
    %v2036 = vld [vmem:[%s2032 + $0x18] sm:$0xff]
    %v2037 = vlaneseq
    %v2038 = vshrl.u32 %v2037, 7
    %v2039 = vsub.s32 3, %v2038
    %v2040 = vrot.slane %v1284, %v2039
    %v2042 = vsel %vm159, %v2024, 0
    %v2045 = vsel %vm159, %v2029, 0
    %2047 = vmatprep.subr.mxu0 0.0
    %2048 = vmatpush1.msra.mxu0 %v2033
    %2049 = vmatprep.subr.mxu0 0.0
    %2050 = vmatpush1.msra.mxu0 %v2034
    %2051 = vmatprep.subr.mxu0 0.0
    %2052 = vmatpush1.msra.mxu0 %v2035
    %2053 = vmatprep.subr.mxu0 0.0
    %2054 = vmatpush1.msra.mxu0 %v2036
    %2055 = vmatprep.subr.mxu0 0.0
    %2056 = vmatpush1.msra.mxu0 0.0
    %2057 = vmatprep.subr.mxu0 0.0
    %2058 = vmatpush1.msra.mxu0 0.0
    %2059 = vmatprep.subr.mxu0 0.0
    %2060 = vmatpush1.msra.mxu0 0.0
    %2061 = vmatprep.subr.mxu0 0.0
    %2062 = vmatpush1.msra.mxu0 0.0
    %2063 = vmatprep.subr.mxu0 0.0
    %2064 = vmatpush1.msra.mxu0 0.0
    %2065 = vmatprep.subr.mxu0 0.0
    %2066 = vmatpush1.msra.mxu0 0.0
    %2067 = vmatprep.subr.mxu0 0.0
    %2068 = vmatpush1.msra.mxu0 0.0
    %2069 = vmatprep.subr.mxu0 0.0
    %2070 = vmatpush1.msra.mxu0 0.0
    %2071 = vmatprep.subr.mxu0 0.0
    %2072 = vmatpush1.msra.mxu0 0.0
    %2073 = vmatprep.subr.mxu0 0.0
    %2074 = vmatpush1.msra.mxu0 0.0
    %2075 = vmatprep.subr.mxu0 0.0
    %2076 = vmatpush1.msra.mxu0 0.0
    %2077 = vmatprep.subr.mxu0 0.0
    %2078 = vmatpush1.msra.mxu0 0.0
    %2079 = vmatprep.subr.mxu0 0.0
    %2080 = vmatpush1.msra.mxu0 0.0
    %2081 = vmatprep.subr.mxu0 0.0
    %2082 = vmatpush1.msra.mxu0 0.0
    %2083 = vmatprep.subr.mxu0 0.0
    %2084 = vmatpush1.msra.mxu0 0.0
    %2085 = vmatprep.subr.mxu0 0.0
    %2086 = vmatpush1.msra.mxu0 0.0
    %2087 = vmatprep.subr.mxu0 0.0
    %2088 = vmatpush1.msra.mxu0 0.0
    %2089 = vmatprep.subr.mxu0 0.0
    %2090 = vmatpush1.msra.mxu0 0.0
    %2091 = vmatprep.subr.mxu0 0.0
    %2092 = vmatpush1.msra.mxu0 0.0
    %2093 = vmatprep.subr.mxu0 0.0
    %2094 = vmatpush1.msra.mxu0 0.0
    %2095 = vmatprep.subr.mxu0 0.0
    %2096 = vmatpush1.msra.mxu0 0.0
    %2097 = vmatprep.subr.mxu0 0.0
    %2098 = vmatpush1.msra.mxu0 0.0
    %2099 = vmatprep.subr.mxu0 0.0
    %2100 = vmatpush1.msra.mxu0 0.0
    %2101 = vmatprep.subr.mxu0 0.0
    %2102 = vmatpush1.msra.mxu0 0.0
    %2103 = vmatprep.subr.mxu0 0.0
    %2104 = vmatpush1.msra.mxu0 0.0
    %2105 = vmatprep.subr.mxu0 0.0
    %2106 = vmatpush1.msra.mxu0 0.0
    %2107 = vmatprep.subr.mxu0 0.0
    %2108 = vmatpush1.msra.mxu0 0.0
    %2109 = vmatprep.subr.mxu0 0.0
    %2110 = vmatpush1.msra.mxu0 0.0
    %2111 = vmatprep.mubr.f32.mxu0 0.0
    %2112 = vmatmul.mubr.f32.gmra.mrb[0].mxu0 %v2042
    %v2113 = vpop.f32.mrb[0].mxu0
    %v2114 = vadd.f32 %v2040, %v2113
    %v2115 = vpop.f32.mrb[0].mxu0
    %2116 = vmatprep.mubr.f32.mxu0 0.0
    %2117 = vmatmul.mubr.f32.gmra.mrb[0].mxu0 %v2045
    %v2118 = vpop.f32.mrb[0].mxu0
    %v2119 = vadd.f32 %v2040, %v2118
    %v2120 = vpop.f32.mrb[0].mxu0
    %2121 = vdwg.mxu0
    %v2122 = vadd.f32 %v1281, %v2114
    %v2123 = vadd.f32 %v1282, %v2119
    %v2124 = vsel %vm159, %v2122, 0.0
    %2125 = vadd.xlane.f32.xlu0 %v2124
    %v2126 = vpop.xlane.xlu0 %2125
    %v2127 = vsel %vm159, %v2123, 0.0
    %2128 = vadd.xlane.f32.xlu0 %v2127
    %v2129 = vpop.xlane.xlu0 %2128
    %v2130 = vmul.f32 %v2126, %v1018
    %v2131 = vmul.f32 %v2129, %v1018
    %v2132 = vmul.f32 %v2122, %v2122
    %v2133 = vmul.f32 %v2123, %v2123
    %v2134 = vsel %vm159, %v2132, 0.0
    %2135 = vadd.xlane.f32.xlu0 %v2134
    %v2136 = vpop.xlane.xlu0 %2135
    %v2137 = vsel %vm159, %v2133, 0.0
    %2138 = vadd.xlane.f32.xlu0 %v2137
    %v2139 = vpop.xlane.xlu0 %2138
    %v2140 = vmul.f32 %v2136, %v1018
    %v2141 = vmul.f32 %v2139, %v1018
    %v2142 = vmul.f32 %v2130, %v2130
    %v2143 = vmul.f32 %v2131, %v2131
    %v2144 = vsub.f32 %v2140, %v2142
    %v2145 = vsub.f32 %v2141, %v2143
    %v2146 = vsub.f32 %v2122, %v2130
    %v2147 = vsub.f32 %v2123, %v2131
    %v2148 = vadd.f32 %v2144, 1e-05
    %v2149 = vadd.f32 %v2145, 1e-05
    %v2150 = vrsqrt.pop %v2148
    %v2151 = vrsqrt.pop %v2149
    %v2152 = vmul.f32 %v2146, %v2150
    %v2153 = vmul.f32 %v2147, %v2151
    %v2154 = vlaneseq
    %v2155 = vshrl.u32 %v2154, 7
    %v2156 = vsub.s32 6, %v2155
    %v2157 = vrot.slane %v1284, %v2156
    %v2158 = vmul.f32 %v2152, %v2157
    %v2159 = vmul.f32 %v2153, %v2157
    %v2160 = vlaneseq
    %v2161 = vshrl.u32 %v2160, 7
    %v2162 = vsub.s32 7, %v2161
    %v2163 = vrot.slane %v1284, %v2162
    %v2164 = vadd.f32 %v2158, %v2163
    %v2165 = vadd.f32 %v2159, %v2163
    %s2166 = scalar_lea.vmem [#allocation2], 32
    %v2167 = vld [vmem:[%s2166] sm:$0xff]
    %v2168 = vld [vmem:[%s2166 + $0x8] sm:$0xff]
    %v2169 = vld [vmem:[%s2166 + $0x10] sm:$0xff]
    %v2170 = vld [vmem:[%s2166 + $0x18] sm:$0xff]
    %v2171 = vlaneseq
    %v2172 = vshrl.u32 %v2171, 7
    %v2173 = vsub.s32 4, %v2172
    %v2174 = vrot.slane %v1284, %v2173
    %v2176 = vsel %vm159, %v2164, 0
    %v2179 = vsel %vm159, %v2165, 0
    %2181 = vmatprep.subr.mxu0 0.0
    %2182 = vmatpush1.msra.mxu0 %v2167
    %2183 = vmatprep.subr.mxu0 0.0
    %2184 = vmatpush1.msra.mxu0 %v2168
    %2185 = vmatprep.subr.mxu0 0.0
    %2186 = vmatpush1.msra.mxu0 %v2169
    %2187 = vmatprep.subr.mxu0 0.0
    %2188 = vmatpush1.msra.mxu0 %v2170
    %2189 = vmatprep.subr.mxu0 0.0
    %2190 = vmatpush1.msra.mxu0 0.0
    %2191 = vmatprep.subr.mxu0 0.0
    %2192 = vmatpush1.msra.mxu0 0.0
    %2193 = vmatprep.subr.mxu0 0.0
    %2194 = vmatpush1.msra.mxu0 0.0
    %2195 = vmatprep.subr.mxu0 0.0
    %2196 = vmatpush1.msra.mxu0 0.0
    %2197 = vmatprep.subr.mxu0 0.0
    %2198 = vmatpush1.msra.mxu0 0.0
    %2199 = vmatprep.subr.mxu0 0.0
    %2200 = vmatpush1.msra.mxu0 0.0
    %2201 = vmatprep.subr.mxu0 0.0
    %2202 = vmatpush1.msra.mxu0 0.0
    %2203 = vmatprep.subr.mxu0 0.0
    %2204 = vmatpush1.msra.mxu0 0.0
    %2205 = vmatprep.subr.mxu0 0.0
    %2206 = vmatpush1.msra.mxu0 0.0
    %2207 = vmatprep.subr.mxu0 0.0
    %2208 = vmatpush1.msra.mxu0 0.0
    %2209 = vmatprep.subr.mxu0 0.0
    %2210 = vmatpush1.msra.mxu0 0.0
    %2211 = vmatprep.subr.mxu0 0.0
    %2212 = vmatpush1.msra.mxu0 0.0
    %2213 = vmatprep.subr.mxu0 0.0
    %2214 = vmatpush1.msra.mxu0 0.0
    %2215 = vmatprep.subr.mxu0 0.0
    %2216 = vmatpush1.msra.mxu0 0.0
    %2217 = vmatprep.subr.mxu0 0.0
    %2218 = vmatpush1.msra.mxu0 0.0
    %2219 = vmatprep.subr.mxu0 0.0
    %2220 = vmatpush1.msra.mxu0 0.0
    %2221 = vmatprep.subr.mxu0 0.0
    %2222 = vmatpush1.msra.mxu0 0.0
    %2223 = vmatprep.subr.mxu0 0.0
    %2224 = vmatpush1.msra.mxu0 0.0
    %2225 = vmatprep.subr.mxu0 0.0
    %2226 = vmatpush1.msra.mxu0 0.0
    %2227 = vmatprep.subr.mxu0 0.0
    %2228 = vmatpush1.msra.mxu0 0.0
    %2229 = vmatprep.subr.mxu0 0.0
    %2230 = vmatpush1.msra.mxu0 0.0
    %2231 = vmatprep.subr.mxu0 0.0
    %2232 = vmatpush1.msra.mxu0 0.0
    %2233 = vmatprep.subr.mxu0 0.0
    %2234 = vmatpush1.msra.mxu0 0.0
    %2235 = vmatprep.subr.mxu0 0.0
    %2236 = vmatpush1.msra.mxu0 0.0
    %2237 = vmatprep.subr.mxu0 0.0
    %2238 = vmatpush1.msra.mxu0 0.0
    %2239 = vmatprep.subr.mxu0 0.0
    %2240 = vmatpush1.msra.mxu0 0.0
    %2241 = vmatprep.subr.mxu0 0.0
    %2242 = vmatpush1.msra.mxu0 0.0
    %2243 = vmatprep.subr.mxu0 0.0
    %2244 = vmatpush1.msra.mxu0 0.0
    %2245 = vmatprep.mubr.f32.mxu0 0.0
    %2246 = vmatmul.mubr.f32.gmra.mrb[0].mxu0 %v2176
    %v2247 = vpop.f32.mrb[0].mxu0
    %v2248 = vadd.f32 %v2174, %v2247
    %v2249 = vpop.f32.mrb[0].mxu0
    %2250 = vmatprep.mubr.f32.mxu0 0.0
    %2251 = vmatmul.mubr.f32.gmra.mrb[0].mxu0 %v2179
    %v2252 = vpop.f32.mrb[0].mxu0
    %v2253 = vadd.f32 %v2174, %v2252
    %v2254 = vpop.f32.mrb[0].mxu0
    %2255 = vdwg.mxu0
    %v2256 = vmax.f32 %v2248, 0.0
    %v2257 = vmax.f32 %v2253, 0.0
    %s2258 = scalar_lea.vmem %s6, 64
    %v2259 = vld [vmem:[%s2258] sm:$0xff]
    %v2260 = vld [vmem:[%s2258 + $0x8] sm:$0xff]
    %v2261 = vld [vmem:[%s2258 + $0x10] sm:$0xff]
    %v2262 = vld [vmem:[%s2258 + $0x18] sm:$0xff]
    %v2263 = vld [vmem:[%s2258 + $0x20] sm:$0xff]
    %v2264 = vld [vmem:[%s2258 + $0x28] sm:$0xff]
    %v2265 = vld [vmem:[%s2258 + $0x30] sm:$0xff]
    %v2266 = vld [vmem:[%s2258 + $0x38] sm:$0xff]
    %v2267 = vlaneseq
    %v2268 = vshrl.u32 %v2267, 7
    %v2269 = vsub.s32 5, %v2268
    %v2270 = vrot.slane %v1284, %v2269
    %v2272 = vsel %vm742, %v2256, 0
    %v2275 = vsel %vm742, %v2257, 0
    %2277 = vmatprep.subr.mxu0 0.0
    %2278 = vmatpush1.msra.mxu0 %v2259
    %2279 = vmatprep.subr.mxu0 0.0
    %2280 = vmatpush1.msra.mxu0 %v2260
    %2281 = vmatprep.subr.mxu0 0.0
    %2282 = vmatpush1.msra.mxu0 %v2261
    %2283 = vmatprep.subr.mxu0 0.0
    %2284 = vmatpush1.msra.mxu0 %v2262
    %2285 = vmatprep.subr.mxu0 0.0
    %2286 = vmatpush1.msra.mxu0 %v2263
    %2287 = vmatprep.subr.mxu0 0.0
    %2288 = vmatpush1.msra.mxu0 %v2264
    %2289 = vmatprep.subr.mxu0 0.0
    %2290 = vmatpush1.msra.mxu0 %v2265
    %2291 = vmatprep.subr.mxu0 0.0
    %2292 = vmatpush1.msra.mxu0 %v2266
    %2293 = vmatprep.subr.mxu0 0.0
    %2294 = vmatpush1.msra.mxu0 0.0
    %2295 = vmatprep.subr.mxu0 0.0
    %2296 = vmatpush1.msra.mxu0 0.0
    %2297 = vmatprep.subr.mxu0 0.0
    %2298 = vmatpush1.msra.mxu0 0.0
    %2299 = vmatprep.subr.mxu0 0.0
    %2300 = vmatpush1.msra.mxu0 0.0
    %2301 = vmatprep.subr.mxu0 0.0
    %2302 = vmatpush1.msra.mxu0 0.0
    %2303 = vmatprep.subr.mxu0 0.0
    %2304 = vmatpush1.msra.mxu0 0.0
    %2305 = vmatprep.subr.mxu0 0.0
    %2306 = vmatpush1.msra.mxu0 0.0
    %2307 = vmatprep.subr.mxu0 0.0
    %2308 = vmatpush1.msra.mxu0 0.0
    %2309 = vmatprep.subr.mxu0 0.0
    %2310 = vmatpush1.msra.mxu0 0.0
    %2311 = vmatprep.subr.mxu0 0.0
    %2312 = vmatpush1.msra.mxu0 0.0
    %2313 = vmatprep.subr.mxu0 0.0
    %2314 = vmatpush1.msra.mxu0 0.0
    %2315 = vmatprep.subr.mxu0 0.0
    %2316 = vmatpush1.msra.mxu0 0.0
    %2317 = vmatprep.subr.mxu0 0.0
    %2318 = vmatpush1.msra.mxu0 0.0
    %2319 = vmatprep.subr.mxu0 0.0
    %2320 = vmatpush1.msra.mxu0 0.0
    %2321 = vmatprep.subr.mxu0 0.0
    %2322 = vmatpush1.msra.mxu0 0.0
    %2323 = vmatprep.subr.mxu0 0.0
    %2324 = vmatpush1.msra.mxu0 0.0
    %2325 = vmatprep.subr.mxu0 0.0
    %2326 = vmatpush1.msra.mxu0 0.0
    %2327 = vmatprep.subr.mxu0 0.0
    %2328 = vmatpush1.msra.mxu0 0.0
    %2329 = vmatprep.subr.mxu0 0.0
    %2330 = vmatpush1.msra.mxu0 0.0
    %2331 = vmatprep.subr.mxu0 0.0
    %2332 = vmatpush1.msra.mxu0 0.0
    %2333 = vmatprep.subr.mxu0 0.0
    %2334 = vmatpush1.msra.mxu0 0.0
    %2335 = vmatprep.subr.mxu0 0.0
    %2336 = vmatpush1.msra.mxu0 0.0
    %2337 = vmatprep.subr.mxu0 0.0
    %2338 = vmatpush1.msra.mxu0 0.0
    %2339 = vmatprep.subr.mxu0 0.0
    %2340 = vmatpush1.msra.mxu0 0.0
    %2341 = vmatprep.mubr.f32.mxu0 0.0
    %2342 = vmatmul.mubr.f32.gmra.mrb[0].mxu0 %v2272
    %v2343 = vpop.f32.mrb[0].mxu0
    %v2344 = vadd.f32 %v2270, %v2343
    %v2345 = vpop.f32.mrb[0].mxu0
    %2346 = vmatprep.mubr.f32.mxu0 0.0
    %2347 = vmatmul.mubr.f32.gmra.mrb[0].mxu0 %v2275
    %v2348 = vpop.f32.mrb[0].mxu0
    %v2349 = vadd.f32 %v2270, %v2348
    %v2350 = vpop.f32.mrb[0].mxu0
    %2351 = vdwg.mxu0
    %v2352 = vadd.f32 %v2164, %v2344
    %v2353 = vadd.f32 %v2165, %v2349
    %v2354 = vsel %vm159, %v2352, 0.0
    %2355 = vadd.xlane.f32.xlu0 %v2354
    %v2356 = vpop.xlane.xlu0 %2355
    %v2357 = vsel %vm159, %v2353, 0.0
    %2358 = vadd.xlane.f32.xlu0 %v2357
    %v2359 = vpop.xlane.xlu0 %2358
    %v2360 = vmul.f32 %v2356, %v1018
    %v2361 = vmul.f32 %v2359, %v1018
    %v2362 = vmul.f32 %v2352, %v2352
    %v2363 = vmul.f32 %v2353, %v2353
    %v2364 = vsel %vm159, %v2362, 0.0
    %2365 = vadd.xlane.f32.xlu0 %v2364
    %v2366 = vpop.xlane.xlu0 %2365
    %v2367 = vsel %vm159, %v2363, 0.0
    %2368 = vadd.xlane.f32.xlu0 %v2367
    %v2369 = vpop.xlane.xlu0 %2368
    %v2370 = vmul.f32 %v2366, %v1018
    %v2371 = vmul.f32 %v2369, %v1018
    %v2372 = vmul.f32 %v2360, %v2360
    %v2373 = vmul.f32 %v2361, %v2361
    %v2374 = vsub.f32 %v2370, %v2372
    %v2375 = vsub.f32 %v2371, %v2373
    %v2376 = vsub.f32 %v2352, %v2360
    %v2377 = vsub.f32 %v2353, %v2361
    %v2378 = vadd.f32 %v2374, 1e-05
    %v2379 = vadd.f32 %v2375, 1e-05
    %v2380 = vrsqrt.pop %v2378
    %v2381 = vrsqrt.pop %v2379
    %v2382 = vmul.f32 %v2376, %v2380
    %v2383 = vmul.f32 %v2377, %v2381
    %v2384 = vlaneseq
    %v2385 = vshrl.u32 %v2384, 7
    %v2386 = vsub.s32 0, %v2385
    %v2387 = vrot.slane %v1285, %v2386
    %v2388 = vmul.f32 %v2382, %v2387
    %v2389 = vmul.f32 %v2383, %v2387
    %v2390 = vlaneseq
    %v2391 = vshrl.u32 %v2390, 7
    %v2392 = vsub.s32 1, %v2391
    %v2393 = vrot.slane %v1285, %v2392
    %v2394 = vadd.f32 %v2388, %v2393
    %v2395 = vadd.f32 %v2389, %v2393
    %s2396 = scalar_lea.vmem %s7, 32
    %v2397 = vld [vmem:[%s2396] sm:$0xff]
    %v2398 = vld [vmem:[%s2396 + $0x8] sm:$0x3]
    %s2399 = scalar_lea.vmem %s1, 64
    %v2400 = vld [vmem:[%s2399] sm:$0xff]
    %v2401 = vld [vmem:[%s2399 + $0x8] sm:$0xff]
    %v2402 = vld [vmem:[%s2399 + $0x10] sm:$0xff]
    %v2403 = vld [vmem:[%s2399 + $0x18] sm:$0xff]
    %v2404 = vlaneseq
    %v2405 = vshrl.u32 %v2404, 7
    %v2406 = vsub.s32 0, %v2405
    %v2407 = vrot.slane %v2397, %v2406
    %v2409 = vsel %vm159, %v2394, 0
    %v2412 = vsel %vm159, %v2395, 0
    %2414 = vmatprep.subr.mxu0 0.0
    %2415 = vmatpush1.msra.mxu0 %v2400
    %2416 = vmatprep.subr.mxu0 0.0
    %2417 = vmatpush1.msra.mxu0 %v2401
    %2418 = vmatprep.subr.mxu0 0.0
    %2419 = vmatpush1.msra.mxu0 %v2402
    %2420 = vmatprep.subr.mxu0 0.0
    %2421 = vmatpush1.msra.mxu0 %v2403
    %2422 = vmatprep.subr.mxu0 0.0
    %2423 = vmatpush1.msra.mxu0 0.0
    %2424 = vmatprep.subr.mxu0 0.0
    %2425 = vmatpush1.msra.mxu0 0.0
    %2426 = vmatprep.subr.mxu0 0.0
    %2427 = vmatpush1.msra.mxu0 0.0
    %2428 = vmatprep.subr.mxu0 0.0
    %2429 = vmatpush1.msra.mxu0 0.0
    %2430 = vmatprep.subr.mxu0 0.0
    %2431 = vmatpush1.msra.mxu0 0.0
    %2432 = vmatprep.subr.mxu0 0.0
    %2433 = vmatpush1.msra.mxu0 0.0
    %2434 = vmatprep.subr.mxu0 0.0
    %2435 = vmatpush1.msra.mxu0 0.0
    %2436 = vmatprep.subr.mxu0 0.0
    %2437 = vmatpush1.msra.mxu0 0.0
    %2438 = vmatprep.subr.mxu0 0.0
    %2439 = vmatpush1.msra.mxu0 0.0
    %2440 = vmatprep.subr.mxu0 0.0
    %2441 = vmatpush1.msra.mxu0 0.0
    %2442 = vmatprep.subr.mxu0 0.0
    %2443 = vmatpush1.msra.mxu0 0.0
    %2444 = vmatprep.subr.mxu0 0.0
    %2445 = vmatpush1.msra.mxu0 0.0
    %2446 = vmatprep.subr.mxu0 0.0
    %2447 = vmatpush1.msra.mxu0 0.0
    %2448 = vmatprep.subr.mxu0 0.0
    %2449 = vmatpush1.msra.mxu0 0.0
    %2450 = vmatprep.subr.mxu0 0.0
    %2451 = vmatpush1.msra.mxu0 0.0
    %2452 = vmatprep.subr.mxu0 0.0
    %2453 = vmatpush1.msra.mxu0 0.0
    %2454 = vmatprep.subr.mxu0 0.0
    %2455 = vmatpush1.msra.mxu0 0.0
    %2456 = vmatprep.subr.mxu0 0.0
    %2457 = vmatpush1.msra.mxu0 0.0
    %2458 = vmatprep.subr.mxu0 0.0
    %2459 = vmatpush1.msra.mxu0 0.0
    %2460 = vmatprep.subr.mxu0 0.0
    %2461 = vmatpush1.msra.mxu0 0.0
    %2462 = vmatprep.subr.mxu0 0.0
    %2463 = vmatpush1.msra.mxu0 0.0
    %2464 = vmatprep.subr.mxu0 0.0
    %2465 = vmatpush1.msra.mxu0 0.0
    %2466 = vmatprep.subr.mxu0 0.0
    %2467 = vmatpush1.msra.mxu0 0.0
    %2468 = vmatprep.subr.mxu0 0.0
    %2469 = vmatpush1.msra.mxu0 0.0
    %2470 = vmatprep.subr.mxu0 0.0
    %2471 = vmatpush1.msra.mxu0 0.0
    %2472 = vmatprep.subr.mxu0 0.0
    %2473 = vmatpush1.msra.mxu0 0.0
    %2474 = vmatprep.subr.mxu0 0.0
    %2475 = vmatpush1.msra.mxu0 0.0
    %2476 = vmatprep.subr.mxu0 0.0
    %2477 = vmatpush1.msra.mxu0 0.0
    %2478 = vmatprep.mubr.f32.mxu0 0.0
    %2479 = vmatmul.mubr.f32.gmra.mrb[0].mxu0 %v2409
    %v2480 = vpop.f32.mrb[0].mxu0
    %v2481 = vadd.f32 %v2407, %v2480
    %v2482 = vpop.f32.mrb[0].mxu0
    %2483 = vmatprep.mubr.f32.mxu0 0.0
    %2484 = vmatmul.mubr.f32.gmra.mrb[0].mxu0 %v2412
    %v2485 = vpop.f32.mrb[0].mxu0
    %v2486 = vadd.f32 %v2407, %v2485
    %v2487 = vpop.f32.mrb[0].mxu0
    %2488 = vdwg.mxu0
    %2489 = vmatprep.subr.mxu0 0.0
    %2490 = vmatpush1.msra.mxu0 %v2394
    %2491 = vmatprep.subr.mxu0 0.0
    %2492 = vmatpush1.msra.mxu0 %v2395
    %2493 = vmatprep.subr.mxu0 0.0
    %2494 = vmatpush1.msra.mxu0 0.0
    %2495 = vmatprep.subr.mxu0 0.0
    %2496 = vmatpush1.msra.mxu0 0.0
    %2497 = vmatprep.subr.mxu0 0.0
    %2498 = vmatpush1.msra.mxu0 0.0
    %2499 = vmatprep.subr.mxu0 0.0
    %2500 = vmatpush1.msra.mxu0 0.0
    %2501 = vmatprep.subr.mxu0 0.0
    %2502 = vmatpush1.msra.mxu0 0.0
    %2503 = vmatprep.subr.mxu0 0.0
    %2504 = vmatpush1.msra.mxu0 0.0
    %2505 = vmatprep.subr.mxu0 0.0
    %2506 = vmatpush1.msra.mxu0 0.0
    %2507 = vmatprep.subr.mxu0 0.0
    %2508 = vmatpush1.msra.mxu0 0.0
    %2509 = vmatprep.subr.mxu0 0.0
    %2510 = vmatpush1.msra.mxu0 0.0
    %2511 = vmatprep.subr.mxu0 0.0
    %2512 = vmatpush1.msra.mxu0 0.0
    %2513 = vmatprep.subr.mxu0 0.0
    %2514 = vmatpush1.msra.mxu0 0.0
    %2515 = vmatprep.subr.mxu0 0.0
    %2516 = vmatpush1.msra.mxu0 0.0
    %2517 = vmatprep.subr.mxu0 0.0
    %2518 = vmatpush1.msra.mxu0 0.0
    %2519 = vmatprep.subr.mxu0 0.0
    %2520 = vmatpush1.msra.mxu0 0.0
    %2521 = vmatprep.subr.mxu0 0.0
    %2522 = vmatpush1.msra.mxu0 0.0
    %2523 = vmatprep.subr.mxu0 0.0
    %2524 = vmatpush1.msra.mxu0 0.0
    %2525 = vmatprep.subr.mxu0 0.0
    %2526 = vmatpush1.msra.mxu0 0.0
    %2527 = vmatprep.subr.mxu0 0.0
    %2528 = vmatpush1.msra.mxu0 0.0
    %2529 = vmatprep.subr.mxu0 0.0
    %2530 = vmatpush1.msra.mxu0 0.0
    %2531 = vmatprep.subr.mxu0 0.0
    %2532 = vmatpush1.msra.mxu0 0.0
    %2533 = vmatprep.subr.mxu0 0.0
    %2534 = vmatpush1.msra.mxu0 0.0
    %2535 = vmatprep.subr.mxu0 0.0
    %2536 = vmatpush1.msra.mxu0 0.0
    %2537 = vmatprep.subr.mxu0 0.0
    %2538 = vmatpush1.msra.mxu0 0.0
    %2539 = vmatprep.subr.mxu0 0.0
    %2540 = vmatpush1.msra.mxu0 0.0
    %2541 = vmatprep.subr.mxu0 0.0
    %2542 = vmatpush1.msra.mxu0 0.0
    %2543 = vmatprep.subr.mxu0 0.0
    %2544 = vmatpush1.msra.mxu0 0.0
    %2545 = vmatprep.subr.mxu0 0.0
    %2546 = vmatpush1.msra.mxu0 0.0
    %2547 = vmatprep.subr.mxu0 0.0
    %2548 = vmatpush1.msra.mxu0 0.0
    %2549 = vmatprep.subr.mxu0 0.0
    %2550 = vmatpush1.msra.mxu0 0.0
    %2551 = vmatprep.subr.mxu0 0.0
    %2552 = vmatpush1.msra.mxu0 0.0
    %2553 = vmatprep.mubr.f32.mxu0 0.0
    %2554 = vmatmul.mubr.f32.gmra.mrb[0].mxu0 %v243
    %v2555 = vpop.f32.mrb[0].mxu0
    %v2556 = vadd.f32 0.0, %v2555
    %v2557 = vpop.f32.mrb[0].mxu0
    %2558 = vmatprep.mubr.f32.mxu0 0.0
    %2559 = vmatmul.mubr.f32.gmra.mrb[0].mxu0 %v246
    %v2560 = vpop.f32.mrb[0].mxu0
    %v2561 = vadd.f32 0.0, %v2560
    %v2562 = vpop.f32.mrb[0].mxu0
    %2563 = vmatprep.mubr.f32.mxu0 0.0
    %2564 = vmatmul.mubr.f32.gmra.mrb[0].mxu0 %v249
    %v2565 = vpop.f32.mrb[0].mxu0
    %v2566 = vadd.f32 0.0, %v2565
    %v2567 = vpop.f32.mrb[0].mxu0
    %2568 = vmatprep.mubr.f32.mxu0 0.0
    %2569 = vmatmul.mubr.f32.gmra.mrb[0].mxu0 %v252
    %v2570 = vpop.f32.mrb[0].mxu0
    %v2571 = vadd.f32 0.0, %v2570
    %v2572 = vpop.f32.mrb[0].mxu0
    %2573 = vmatprep.mubr.f32.mxu0 0.0
    %2574 = vmatmul.mubr.f32.gmra.mrb[0].mxu0 %v255
    %v2575 = vpop.f32.mrb[0].mxu0
    %v2576 = vadd.f32 0.0, %v2575
    %v2577 = vpop.f32.mrb[0].mxu0
    %2578 = vmatprep.mubr.f32.mxu0 0.0
    %2579 = vmatmul.mubr.f32.gmra.mrb[0].mxu0 %v258
    %v2580 = vpop.f32.mrb[0].mxu0
    %v2581 = vadd.f32 0.0, %v2580
    %v2582 = vpop.f32.mrb[0].mxu0
    %2583 = vmatprep.mubr.f32.mxu0 0.0
    %2584 = vmatmul.mubr.f32.gmra.mrb[0].mxu0 %v261
    %v2585 = vpop.f32.mrb[0].mxu0
    %v2586 = vadd.f32 0.0, %v2585
    %v2587 = vpop.f32.mrb[0].mxu0
    %2588 = vmatprep.mubr.f32.mxu0 0.0
    %2589 = vmatmul.mubr.f32.gmra.mrb[0].mxu0 %v264
    %v2590 = vpop.f32.mrb[0].mxu0
    %v2591 = vadd.f32 0.0, %v2590
    %v2592 = vpop.f32.mrb[0].mxu0
    %2593 = vdwg.mxu0
    %s2594 = scalar_lea.vmem %s2, 64
    %v2595 = vld [vmem:[%s2594] sm:$0xff]
    %v2596 = vld [vmem:[%s2594 + $0x8] sm:$0xff]
    %v2597 = vld [vmem:[%s2594 + $0x10] sm:$0xff]
    %v2598 = vld [vmem:[%s2594 + $0x18] sm:$0xff]
    %v2599 = vlaneseq
    %v2600 = vshrl.u32 %v2599, 7
    %v2601 = vsub.s32 1, %v2600
    %v2602 = vrot.slane %v2397, %v2601
    %v2604 = vsel %vm159, %v2556, 0
    %v2607 = vsel %vm159, %v2561, 0
    %v2610 = vsel %vm159, %v2566, 0
    %v2613 = vsel %vm159, %v2571, 0
    %v2616 = vsel %vm159, %v2576, 0
    %v2619 = vsel %vm159, %v2581, 0
    %v2622 = vsel %vm159, %v2586, 0
    %v2625 = vsel %vm159, %v2591, 0
    %2627 = vmatprep.subr.mxu0 0.0
    %2628 = vmatpush1.msra.mxu0 %v2595
    %2629 = vmatprep.subr.mxu0 0.0
    %2630 = vmatpush1.msra.mxu0 %v2596
    %2631 = vmatprep.subr.mxu0 0.0
    %2632 = vmatpush1.msra.mxu0 %v2597
    %2633 = vmatprep.subr.mxu0 0.0
    %2634 = vmatpush1.msra.mxu0 %v2598
    %2635 = vmatprep.subr.mxu0 0.0
    %2636 = vmatpush1.msra.mxu0 0.0
    %2637 = vmatprep.subr.mxu0 0.0
    %2638 = vmatpush1.msra.mxu0 0.0
    %2639 = vmatprep.subr.mxu0 0.0
    %2640 = vmatpush1.msra.mxu0 0.0
    %2641 = vmatprep.subr.mxu0 0.0
    %2642 = vmatpush1.msra.mxu0 0.0
    %2643 = vmatprep.subr.mxu0 0.0
    %2644 = vmatpush1.msra.mxu0 0.0
    %2645 = vmatprep.subr.mxu0 0.0
    %2646 = vmatpush1.msra.mxu0 0.0
    %2647 = vmatprep.subr.mxu0 0.0
    %2648 = vmatpush1.msra.mxu0 0.0
    %2649 = vmatprep.subr.mxu0 0.0
    %2650 = vmatpush1.msra.mxu0 0.0
    %2651 = vmatprep.subr.mxu0 0.0
    %2652 = vmatpush1.msra.mxu0 0.0
    %2653 = vmatprep.subr.mxu0 0.0
    %2654 = vmatpush1.msra.mxu0 0.0
    %2655 = vmatprep.subr.mxu0 0.0
    %2656 = vmatpush1.msra.mxu0 0.0
    %2657 = vmatprep.subr.mxu0 0.0
    %2658 = vmatpush1.msra.mxu0 0.0
    %2659 = vmatprep.subr.mxu0 0.0
    %2660 = vmatpush1.msra.mxu0 0.0
    %2661 = vmatprep.subr.mxu0 0.0
    %2662 = vmatpush1.msra.mxu0 0.0
    %2663 = vmatprep.subr.mxu0 0.0
    %2664 = vmatpush1.msra.mxu0 0.0
    %2665 = vmatprep.subr.mxu0 0.0
    %2666 = vmatpush1.msra.mxu0 0.0
    %2667 = vmatprep.subr.mxu0 0.0
    %2668 = vmatpush1.msra.mxu0 0.0
    %2669 = vmatprep.subr.mxu0 0.0
    %2670 = vmatpush1.msra.mxu0 0.0
    %2671 = vmatprep.subr.mxu0 0.0
    %2672 = vmatpush1.msra.mxu0 0.0
    %2673 = vmatprep.subr.mxu0 0.0
    %2674 = vmatpush1.msra.mxu0 0.0
    %2675 = vmatprep.subr.mxu0 0.0
    %2676 = vmatpush1.msra.mxu0 0.0
    %2677 = vmatprep.subr.mxu0 0.0
    %2678 = vmatpush1.msra.mxu0 0.0
    %2679 = vmatprep.subr.mxu0 0.0
    %2680 = vmatpush1.msra.mxu0 0.0
    %2681 = vmatprep.subr.mxu0 0.0
    %2682 = vmatpush1.msra.mxu0 0.0
    %2683 = vmatprep.subr.mxu0 0.0
    %2684 = vmatpush1.msra.mxu0 0.0
    %2685 = vmatprep.subr.mxu0 0.0
    %2686 = vmatpush1.msra.mxu0 0.0
    %2687 = vmatprep.subr.mxu0 0.0
    %2688 = vmatpush1.msra.mxu0 0.0
    %2689 = vmatprep.subr.mxu0 0.0
    %2690 = vmatpush1.msra.mxu0 0.0
    %2691 = vmatprep.mubr.f32.mxu0 0.0
    %2692 = vmatmul.mubr.f32.gmra.mrb[0].mxu0 %v2604
    %v2693 = vpop.f32.mrb[0].mxu0
    %v2694 = vadd.f32 %v2602, %v2693
    %v2695 = vpop.f32.mrb[0].mxu0
    %2696 = vmatprep.mubr.f32.mxu0 0.0
    %2697 = vmatmul.mubr.f32.gmra.mrb[0].mxu0 %v2607
    %v2698 = vpop.f32.mrb[0].mxu0
    %v2699 = vadd.f32 %v2602, %v2698
    %v2700 = vpop.f32.mrb[0].mxu0
    %2701 = vmatprep.mubr.f32.mxu0 0.0
    %2702 = vmatmul.mubr.f32.gmra.mrb[0].mxu0 %v2610
    %v2703 = vpop.f32.mrb[0].mxu0
    %v2704 = vadd.f32 %v2602, %v2703
    %v2705 = vpop.f32.mrb[0].mxu0
    %2706 = vmatprep.mubr.f32.mxu0 0.0
    %2707 = vmatmul.mubr.f32.gmra.mrb[0].mxu0 %v2613
    %v2708 = vpop.f32.mrb[0].mxu0
    %v2709 = vadd.f32 %v2602, %v2708
    %v2710 = vpop.f32.mrb[0].mxu0
    %2711 = vmatprep.mubr.f32.mxu0 0.0
    %2712 = vmatmul.mubr.f32.gmra.mrb[0].mxu0 %v2616
    %v2713 = vpop.f32.mrb[0].mxu0
    %v2714 = vadd.f32 %v2602, %v2713
    %v2715 = vpop.f32.mrb[0].mxu0
    %2716 = vmatprep.mubr.f32.mxu0 0.0
    %2717 = vmatmul.mubr.f32.gmra.mrb[0].mxu0 %v2619
    %v2718 = vpop.f32.mrb[0].mxu0
    %v2719 = vadd.f32 %v2602, %v2718
    %v2720 = vpop.f32.mrb[0].mxu0
    %2721 = vmatprep.mubr.f32.mxu0 0.0
    %2722 = vmatmul.mubr.f32.gmra.mrb[0].mxu0 %v2622
    %v2723 = vpop.f32.mrb[0].mxu0
    %v2724 = vadd.f32 %v2602, %v2723
    %v2725 = vpop.f32.mrb[0].mxu0
    %2726 = vmatprep.mubr.f32.mxu0 0.0
    %2727 = vmatmul.mubr.f32.gmra.mrb[0].mxu0 %v2625
    %v2728 = vpop.f32.mrb[0].mxu0
    %v2729 = vadd.f32 %v2602, %v2728
    %v2730 = vpop.f32.mrb[0].mxu0
    %2731 = vdwg.mxu0
    %v2732 = vmul.f32 %v2694, %v96
    %v2733 = vmul.f32 %v2699, %v97
    %v2734 = vmul.f32 %v2704, %v98
    %v2735 = vmul.f32 %v2709, %v99
    %v2736 = vmul.f32 %v2714, %v100
    %v2737 = vmul.f32 %v2719, %v101
    %v2738 = vmul.f32 %v2724, %v102
    %v2739 = vmul.f32 %v2729, %v103
    %s2740 = scalar_lea.vmem %s3, 64
    %v2741 = vld [vmem:[%s2740] sm:$0xff]
    %v2742 = vld [vmem:[%s2740 + $0x8] sm:$0xff]
    %v2743 = vld [vmem:[%s2740 + $0x10] sm:$0xff]
    %v2744 = vld [vmem:[%s2740 + $0x18] sm:$0xff]
    %v2745 = vlaneseq
    %v2746 = vshrl.u32 %v2745, 7
    %v2747 = vsub.s32 2, %v2746
    %v2748 = vrot.slane %v2397, %v2747
    %2749 = vmatprep.subr.mxu0 0.0
    %2750 = vmatpush1.msra.mxu0 %v2741
    %2751 = vmatprep.subr.mxu0 0.0
    %2752 = vmatpush1.msra.mxu0 %v2742
    %2753 = vmatprep.subr.mxu0 0.0
    %2754 = vmatpush1.msra.mxu0 %v2743
    %2755 = vmatprep.subr.mxu0 0.0
    %2756 = vmatpush1.msra.mxu0 %v2744
    %2757 = vmatprep.subr.mxu0 0.0
    %2758 = vmatpush1.msra.mxu0 0.0
    %2759 = vmatprep.subr.mxu0 0.0
    %2760 = vmatpush1.msra.mxu0 0.0
    %2761 = vmatprep.subr.mxu0 0.0
    %2762 = vmatpush1.msra.mxu0 0.0
    %2763 = vmatprep.subr.mxu0 0.0
    %2764 = vmatpush1.msra.mxu0 0.0
    %2765 = vmatprep.subr.mxu0 0.0
    %2766 = vmatpush1.msra.mxu0 0.0
    %2767 = vmatprep.subr.mxu0 0.0
    %2768 = vmatpush1.msra.mxu0 0.0
    %2769 = vmatprep.subr.mxu0 0.0
    %2770 = vmatpush1.msra.mxu0 0.0
    %2771 = vmatprep.subr.mxu0 0.0
    %2772 = vmatpush1.msra.mxu0 0.0
    %2773 = vmatprep.subr.mxu0 0.0
    %2774 = vmatpush1.msra.mxu0 0.0
    %2775 = vmatprep.subr.mxu0 0.0
    %2776 = vmatpush1.msra.mxu0 0.0
    %2777 = vmatprep.subr.mxu0 0.0
    %2778 = vmatpush1.msra.mxu0 0.0
    %2779 = vmatprep.subr.mxu0 0.0
    %2780 = vmatpush1.msra.mxu0 0.0
    %2781 = vmatprep.subr.mxu0 0.0
    %2782 = vmatpush1.msra.mxu0 0.0
    %2783 = vmatprep.subr.mxu0 0.0
    %2784 = vmatpush1.msra.mxu0 0.0
    %2785 = vmatprep.subr.mxu0 0.0
    %2786 = vmatpush1.msra.mxu0 0.0
    %2787 = vmatprep.subr.mxu0 0.0
    %2788 = vmatpush1.msra.mxu0 0.0
    %2789 = vmatprep.subr.mxu0 0.0
    %2790 = vmatpush1.msra.mxu0 0.0
    %2791 = vmatprep.subr.mxu0 0.0
    %2792 = vmatpush1.msra.mxu0 0.0
    %2793 = vmatprep.subr.mxu0 0.0
    %2794 = vmatpush1.msra.mxu0 0.0
    %2795 = vmatprep.subr.mxu0 0.0
    %2796 = vmatpush1.msra.mxu0 0.0
    %2797 = vmatprep.subr.mxu0 0.0
    %2798 = vmatpush1.msra.mxu0 0.0
    %2799 = vmatprep.subr.mxu0 0.0
    %2800 = vmatpush1.msra.mxu0 0.0
    %2801 = vmatprep.subr.mxu0 0.0
    %2802 = vmatpush1.msra.mxu0 0.0
    %2803 = vmatprep.subr.mxu0 0.0
    %2804 = vmatpush1.msra.mxu0 0.0
    %2805 = vmatprep.subr.mxu0 0.0
    %2806 = vmatpush1.msra.mxu0 0.0
    %2807 = vmatprep.subr.mxu0 0.0
    %2808 = vmatpush1.msra.mxu0 0.0
    %2809 = vmatprep.subr.mxu0 0.0
    %2810 = vmatpush1.msra.mxu0 0.0
    %2811 = vmatprep.subr.mxu0 0.0
    %2812 = vmatpush1.msra.mxu0 0.0
    %2813 = vmatprep.mubr.f32.mxu0 0.0
    %2814 = vmatmul.mubr.f32.gmra.mrb[0].mxu0 %v2604
    %v2815 = vpop.f32.mrb[0].mxu0
    %v2816 = vadd.f32 %v2748, %v2815
    %v2817 = vpop.f32.mrb[0].mxu0
    %2818 = vmatprep.mubr.f32.mxu0 0.0
    %2819 = vmatmul.mubr.f32.gmra.mrb[0].mxu0 %v2607
    %v2820 = vpop.f32.mrb[0].mxu0
    %v2821 = vadd.f32 %v2748, %v2820
    %v2822 = vpop.f32.mrb[0].mxu0
    %2823 = vmatprep.mubr.f32.mxu0 0.0
    %2824 = vmatmul.mubr.f32.gmra.mrb[0].mxu0 %v2610
    %v2825 = vpop.f32.mrb[0].mxu0
    %v2826 = vadd.f32 %v2748, %v2825
    %v2827 = vpop.f32.mrb[0].mxu0
    %2828 = vmatprep.mubr.f32.mxu0 0.0
    %2829 = vmatmul.mubr.f32.gmra.mrb[0].mxu0 %v2613
    %v2830 = vpop.f32.mrb[0].mxu0
    %v2831 = vadd.f32 %v2748, %v2830
    %v2832 = vpop.f32.mrb[0].mxu0
    %2833 = vmatprep.mubr.f32.mxu0 0.0
    %2834 = vmatmul.mubr.f32.gmra.mrb[0].mxu0 %v2616
    %v2835 = vpop.f32.mrb[0].mxu0
    %v2836 = vadd.f32 %v2748, %v2835
    %v2837 = vpop.f32.mrb[0].mxu0
    %2838 = vmatprep.mubr.f32.mxu0 0.0
    %2839 = vmatmul.mubr.f32.gmra.mrb[0].mxu0 %v2619
    %v2840 = vpop.f32.mrb[0].mxu0
    %v2841 = vadd.f32 %v2748, %v2840
    %v2842 = vpop.f32.mrb[0].mxu0
    %2843 = vmatprep.mubr.f32.mxu0 0.0
    %2844 = vmatmul.mubr.f32.gmra.mrb[0].mxu0 %v2622
    %v2845 = vpop.f32.mrb[0].mxu0
    %v2846 = vadd.f32 %v2748, %v2845
    %v2847 = vpop.f32.mrb[0].mxu0
    %2848 = vmatprep.mubr.f32.mxu0 0.0
    %2849 = vmatmul.mubr.f32.gmra.mrb[0].mxu0 %v2625
    %v2850 = vpop.f32.mrb[0].mxu0
    %v2851 = vadd.f32 %v2748, %v2850
    %v2852 = vpop.f32.mrb[0].mxu0
    %2853 = vdwg.mxu0
    %v2854 = vmul.f32 %v2816, %v96
    %v2855 = vmul.f32 %v2821, %v97
    %v2856 = vmul.f32 %v2826, %v98
    %v2857 = vmul.f32 %v2831, %v99
    %v2858 = vmul.f32 %v2836, %v100
    %v2859 = vmul.f32 %v2841, %v101
    %v2860 = vmul.f32 %v2846, %v102
    %v2861 = vmul.f32 %v2851, %v103
    %v2863 = vsel %vm159, %v2481, 0
    %v2866 = vsel %vm159, %v2486, 0
    %v2869 = vsel %vm159, %v2732, 0
    %v2872 = vsel %vm159, %v2733, 0
    %v2875 = vsel %vm159, %v2734, 0
    %v2878 = vsel %vm159, %v2735, 0
    %v2881 = vsel %vm159, %v2736, 0
    %v2884 = vsel %vm159, %v2737, 0
    %v2887 = vsel %vm159, %v2738, 0
    %v2890 = vsel %vm159, %v2739, 0
    %2892 = vmatprep.subr.mxu0 0.0
    %2893 = vmatpush1.xpose.msra.mxu0 %v2869
    %2894 = vmatprep.subr.mxu0 0.0
    %2895 = vmatpush1.xpose.msra.mxu0 %v2872
    %2896 = vmatprep.subr.mxu0 0.0
    %2897 = vmatpush1.xpose.msra.mxu0 %v2875
    %2898 = vmatprep.subr.mxu0 0.0
    %2899 = vmatpush1.xpose.msra.mxu0 %v2878
    %2900 = vmatprep.subr.mxu0 0.0
    %2901 = vmatpush1.xpose.msra.mxu0 %v2881
    %2902 = vmatprep.subr.mxu0 0.0
    %2903 = vmatpush1.xpose.msra.mxu0 %v2884
    %2904 = vmatprep.subr.mxu0 0.0
    %2905 = vmatpush1.xpose.msra.mxu0 %v2887
    %2906 = vmatprep.subr.mxu0 0.0
    %2907 = vmatpush1.xpose.msra.mxu0 %v2890
    %2908 = vmatprep.subr.mxu0 0.0
    %2909 = vmatpush1.xpose.msra.mxu0 0.0
    %2910 = vmatprep.subr.mxu0 0.0
    %2911 = vmatpush1.xpose.msra.mxu0 0.0
    %2912 = vmatprep.subr.mxu0 0.0
    %2913 = vmatpush1.xpose.msra.mxu0 0.0
    %2914 = vmatprep.subr.mxu0 0.0
    %2915 = vmatpush1.xpose.msra.mxu0 0.0
    %2916 = vmatprep.subr.mxu0 0.0
    %2917 = vmatpush1.xpose.msra.mxu0 0.0
    %2918 = vmatprep.subr.mxu0 0.0
    %2919 = vmatpush1.xpose.msra.mxu0 0.0
    %2920 = vmatprep.subr.mxu0 0.0
    %2921 = vmatpush1.xpose.msra.mxu0 0.0
    %2922 = vmatprep.subr.mxu0 0.0
    %2923 = vmatpush1.xpose.msra.mxu0 0.0
    %2924 = vmatprep.subr.mxu0 0.0
    %2925 = vmatpush1.xpose.msra.mxu0 0.0
    %2926 = vmatprep.subr.mxu0 0.0
    %2927 = vmatpush1.xpose.msra.mxu0 0.0
    %2928 = vmatprep.subr.mxu0 0.0
    %2929 = vmatpush1.xpose.msra.mxu0 0.0
    %2930 = vmatprep.subr.mxu0 0.0
    %2931 = vmatpush1.xpose.msra.mxu0 0.0
    %2932 = vmatprep.subr.mxu0 0.0
    %2933 = vmatpush1.xpose.msra.mxu0 0.0
    %2934 = vmatprep.subr.mxu0 0.0
    %2935 = vmatpush1.xpose.msra.mxu0 0.0
    %2936 = vmatprep.subr.mxu0 0.0
    %2937 = vmatpush1.xpose.msra.mxu0 0.0
    %2938 = vmatprep.subr.mxu0 0.0
    %2939 = vmatpush1.xpose.msra.mxu0 0.0
    %2940 = vmatprep.subr.mxu0 0.0
    %2941 = vmatpush1.xpose.msra.mxu0 0.0
    %2942 = vmatprep.subr.mxu0 0.0
    %2943 = vmatpush1.xpose.msra.mxu0 0.0
    %2944 = vmatprep.subr.mxu0 0.0
    %2945 = vmatpush1.xpose.msra.mxu0 0.0
    %2946 = vmatprep.subr.mxu0 0.0
    %2947 = vmatpush1.xpose.msra.mxu0 0.0
    %2948 = vmatprep.subr.mxu0 0.0
    %2949 = vmatpush1.xpose.msra.mxu0 0.0
    %2950 = vmatprep.subr.mxu0 0.0
    %2951 = vmatpush1.xpose.msra.mxu0 0.0
    %2952 = vmatprep.subr.mxu0 0.0
    %2953 = vmatpush1.xpose.msra.mxu0 0.0
    %2954 = vmatprep.subr.mxu0 0.0
    %2955 = vmatpush1.xpose.msra.mxu0 0.0
    %2956 = vmatprep.mubr.f32.mxu0 0.0
    %2957 = vmatmul.mubr.f32.gmra.mrb[0].mxu0 %v2863
    %v2958 = vpop.f32.mrb[0].mxu0
    %v2959 = vadd.f32 %v104, %v2958
    %v2960 = vpop.f32.mrb[0].mxu0
    %2961 = vmatprep.mubr.f32.mxu0 0.0
    %2962 = vmatmul.mubr.f32.gmra.mrb[0].mxu0 %v2866
    %v2963 = vpop.f32.mrb[0].mxu0
    %v2964 = vadd.f32 %v105, %v2963
    %v2965 = vpop.f32.mrb[0].mxu0
    %2966 = vdwg.mxu0
    %v2967 = vsel %vm742, %v2959, -inf
    %2968 = vmax.xlane.f32.xlu0 %v2967
    %v2969 = vpop.xlane.xlu0 %2968
    %v2970 = vsel %vm742, %v2964, -inf
    %2971 = vmax.xlane.f32.xlu0 %v2970
    %v2972 = vpop.xlane.xlu0 %2971
    %v2973 = vsub.f32 %v2959, %v2969
    %v2974 = vsub.f32 %v2964, %v2972
    %v2975 = vmul.f32 %v2973, 1.442695
    %v2976 = vpow.pop %v2975
    %v2977 = vmul.f32 %v2974, 1.442695
    %v2978 = vpow.pop %v2977
    %v2980 = vsel %vm742, %v2976, 0
    %v2983 = vsel %vm742, %v2978, 0
    %2985 = vmatprep.subr.mxu0 0.0
    %2986 = vmatpush1.msra.mxu0 %v106
    %2987 = vmatprep.subr.mxu0 0.0
    %2988 = vmatpush1.msra.mxu0 %v107
    %2989 = vmatprep.subr.mxu0 0.0
    %2990 = vmatpush1.msra.mxu0 %v108
    %2991 = vmatprep.subr.mxu0 0.0
    %2992 = vmatpush1.msra.mxu0 %v109
    %2993 = vmatprep.subr.mxu0 0.0
    %2994 = vmatpush1.msra.mxu0 %v110
    %2995 = vmatprep.subr.mxu0 0.0
    %2996 = vmatpush1.msra.mxu0 %v111
    %2997 = vmatprep.subr.mxu0 0.0
    %2998 = vmatpush1.msra.mxu0 %v112
    %2999 = vmatprep.subr.mxu0 0.0
    %3000 = vmatpush1.msra.mxu0 %v113
    %3001 = vmatprep.subr.mxu0 0.0
    %3002 = vmatpush1.msra.mxu0 0.0
    %3003 = vmatprep.subr.mxu0 0.0
    %3004 = vmatpush1.msra.mxu0 0.0
    %3005 = vmatprep.subr.mxu0 0.0
    %3006 = vmatpush1.msra.mxu0 0.0
    %3007 = vmatprep.subr.mxu0 0.0
    %3008 = vmatpush1.msra.mxu0 0.0
    %3009 = vmatprep.subr.mxu0 0.0
    %3010 = vmatpush1.msra.mxu0 0.0
    %3011 = vmatprep.subr.mxu0 0.0
    %3012 = vmatpush1.msra.mxu0 0.0
    %3013 = vmatprep.subr.mxu0 0.0
    %3014 = vmatpush1.msra.mxu0 0.0
    %3015 = vmatprep.subr.mxu0 0.0
    %3016 = vmatpush1.msra.mxu0 0.0
    %3017 = vmatprep.subr.mxu0 0.0
    %3018 = vmatpush1.msra.mxu0 0.0
    %3019 = vmatprep.subr.mxu0 0.0
    %3020 = vmatpush1.msra.mxu0 0.0
    %3021 = vmatprep.subr.mxu0 0.0
    %3022 = vmatpush1.msra.mxu0 0.0
    %3023 = vmatprep.subr.mxu0 0.0
    %3024 = vmatpush1.msra.mxu0 0.0
    %3025 = vmatprep.subr.mxu0 0.0
    %3026 = vmatpush1.msra.mxu0 0.0
    %3027 = vmatprep.subr.mxu0 0.0
    %3028 = vmatpush1.msra.mxu0 0.0
    %3029 = vmatprep.subr.mxu0 0.0
    %3030 = vmatpush1.msra.mxu0 0.0
    %3031 = vmatprep.subr.mxu0 0.0
    %3032 = vmatpush1.msra.mxu0 0.0
    %3033 = vmatprep.subr.mxu0 0.0
    %3034 = vmatpush1.msra.mxu0 0.0
    %3035 = vmatprep.subr.mxu0 0.0
    %3036 = vmatpush1.msra.mxu0 0.0
    %3037 = vmatprep.subr.mxu0 0.0
    %3038 = vmatpush1.msra.mxu0 0.0
    %3039 = vmatprep.subr.mxu0 0.0
    %3040 = vmatpush1.msra.mxu0 0.0
    %3041 = vmatprep.subr.mxu0 0.0
    %3042 = vmatpush1.msra.mxu0 0.0
    %3043 = vmatprep.subr.mxu0 0.0
    %3044 = vmatpush1.msra.mxu0 0.0
    %3045 = vmatprep.subr.mxu0 0.0
    %3046 = vmatpush1.msra.mxu0 0.0
    %3047 = vmatprep.subr.mxu0 0.0
    %3048 = vmatpush1.msra.mxu0 0.0
    %3049 = vmatprep.mubr.f32.mxu0 0.0
    %3050 = vmatmul.mubr.f32.gmra.mrb[0].mxu0 %v2980
    %v3051 = vpop.f32.mrb[0].mxu0
    %v3052 = vadd.f32 0.0, %v3051
    %v3053 = vpop.f32.mrb[0].mxu0
    %3054 = vmatprep.mubr.f32.mxu0 0.0
    %3055 = vmatmul.mubr.f32.gmra.mrb[0].mxu0 %v2983
    %v3056 = vpop.f32.mrb[0].mxu0
    %v3057 = vadd.f32 0.0, %v3056
    %v3058 = vpop.f32.mrb[0].mxu0
    %3059 = vdwg.mxu0
    %v3060 = vrcp.pop %v3052
    %v3061 = vrcp.pop %v3057
    %v3062 = vmul.f32 %v2976, %v3060
    %v3063 = vmul.f32 %v2978, %v3061
    %v3065 = vsel %vm742, %v3062, 0
    %v3068 = vsel %vm742, %v3063, 0
    %3070 = vmatprep.subr.mxu0 0.0
    %3071 = vmatpush1.msra.mxu0 %v2854
    %3072 = vmatprep.subr.mxu0 0.0
    %3073 = vmatpush1.msra.mxu0 %v2855
    %3074 = vmatprep.subr.mxu0 0.0
    %3075 = vmatpush1.msra.mxu0 %v2856
    %3076 = vmatprep.subr.mxu0 0.0
    %3077 = vmatpush1.msra.mxu0 %v2857
    %3078 = vmatprep.subr.mxu0 0.0
    %3079 = vmatpush1.msra.mxu0 %v2858
    %3080 = vmatprep.subr.mxu0 0.0
    %3081 = vmatpush1.msra.mxu0 %v2859
    %3082 = vmatprep.subr.mxu0 0.0
    %3083 = vmatpush1.msra.mxu0 %v2860
    %3084 = vmatprep.subr.mxu0 0.0
    %3085 = vmatpush1.msra.mxu0 %v2861
    %3086 = vmatprep.subr.mxu0 0.0
    %3087 = vmatpush1.msra.mxu0 0.0
    %3088 = vmatprep.subr.mxu0 0.0
    %3089 = vmatpush1.msra.mxu0 0.0
    %3090 = vmatprep.subr.mxu0 0.0
    %3091 = vmatpush1.msra.mxu0 0.0
    %3092 = vmatprep.subr.mxu0 0.0
    %3093 = vmatpush1.msra.mxu0 0.0
    %3094 = vmatprep.subr.mxu0 0.0
    %3095 = vmatpush1.msra.mxu0 0.0
    %3096 = vmatprep.subr.mxu0 0.0
    %3097 = vmatpush1.msra.mxu0 0.0
    %3098 = vmatprep.subr.mxu0 0.0
    %3099 = vmatpush1.msra.mxu0 0.0
    %3100 = vmatprep.subr.mxu0 0.0
    %3101 = vmatpush1.msra.mxu0 0.0
    %3102 = vmatprep.subr.mxu0 0.0
    %3103 = vmatpush1.msra.mxu0 0.0
    %3104 = vmatprep.subr.mxu0 0.0
    %3105 = vmatpush1.msra.mxu0 0.0
    %3106 = vmatprep.subr.mxu0 0.0
    %3107 = vmatpush1.msra.mxu0 0.0
    %3108 = vmatprep.subr.mxu0 0.0
    %3109 = vmatpush1.msra.mxu0 0.0
    %3110 = vmatprep.subr.mxu0 0.0
    %3111 = vmatpush1.msra.mxu0 0.0
    %3112 = vmatprep.subr.mxu0 0.0
    %3113 = vmatpush1.msra.mxu0 0.0
    %3114 = vmatprep.subr.mxu0 0.0
    %3115 = vmatpush1.msra.mxu0 0.0
    %3116 = vmatprep.subr.mxu0 0.0
    %3117 = vmatpush1.msra.mxu0 0.0
    %3118 = vmatprep.subr.mxu0 0.0
    %3119 = vmatpush1.msra.mxu0 0.0
    %3120 = vmatprep.subr.mxu0 0.0
    %3121 = vmatpush1.msra.mxu0 0.0
    %3122 = vmatprep.subr.mxu0 0.0
    %3123 = vmatpush1.msra.mxu0 0.0
    %3124 = vmatprep.subr.mxu0 0.0
    %3125 = vmatpush1.msra.mxu0 0.0
    %3126 = vmatprep.subr.mxu0 0.0
    %3127 = vmatpush1.msra.mxu0 0.0
    %3128 = vmatprep.subr.mxu0 0.0
    %3129 = vmatpush1.msra.mxu0 0.0
    %3130 = vmatprep.subr.mxu0 0.0
    %3131 = vmatpush1.msra.mxu0 0.0
    %3132 = vmatprep.subr.mxu0 0.0
    %3133 = vmatpush1.msra.mxu0 0.0
    %3134 = vmatprep.mubr.f32.mxu0 0.0
    %3135 = vmatmul.mubr.f32.gmra.mrb[0].mxu0 %v3065
    %v3136 = vpop.f32.mrb[0].mxu0
    %v3137 = vadd.f32 0.0, %v3136
    %v3138 = vpop.f32.mrb[0].mxu0
    %3139 = vmatprep.mubr.f32.mxu0 0.0
    %3140 = vmatmul.mubr.f32.gmra.mrb[0].mxu0 %v3068
    %v3141 = vpop.f32.mrb[0].mxu0
    %v3142 = vadd.f32 0.0, %v3141
    %v3143 = vpop.f32.mrb[0].mxu0
    %3144 = vdwg.mxu0
    %s3145 = scalar_lea.vmem %s4, 64
    %v3146 = vld [vmem:[%s3145] sm:$0xff]
    %v3147 = vld [vmem:[%s3145 + $0x8] sm:$0xff]
    %v3148 = vld [vmem:[%s3145 + $0x10] sm:$0xff]
    %v3149 = vld [vmem:[%s3145 + $0x18] sm:$0xff]
    %v3150 = vlaneseq
    %v3151 = vshrl.u32 %v3150, 7
    %v3152 = vsub.s32 3, %v3151
    %v3153 = vrot.slane %v2397, %v3152
    %v3155 = vsel %vm159, %v3137, 0
    %v3158 = vsel %vm159, %v3142, 0
    %3160 = vmatprep.subr.mxu0 0.0
    %3161 = vmatpush1.msra.mxu0 %v3146
    %3162 = vmatprep.subr.mxu0 0.0
    %3163 = vmatpush1.msra.mxu0 %v3147
    %3164 = vmatprep.subr.mxu0 0.0
    %3165 = vmatpush1.msra.mxu0 %v3148
    %3166 = vmatprep.subr.mxu0 0.0
    %3167 = vmatpush1.msra.mxu0 %v3149
    %3168 = vmatprep.subr.mxu0 0.0
    %3169 = vmatpush1.msra.mxu0 0.0
    %3170 = vmatprep.subr.mxu0 0.0
    %3171 = vmatpush1.msra.mxu0 0.0
    %3172 = vmatprep.subr.mxu0 0.0
    %3173 = vmatpush1.msra.mxu0 0.0
    %3174 = vmatprep.subr.mxu0 0.0
    %3175 = vmatpush1.msra.mxu0 0.0
    %3176 = vmatprep.subr.mxu0 0.0
    %3177 = vmatpush1.msra.mxu0 0.0
    %3178 = vmatprep.subr.mxu0 0.0
    %3179 = vmatpush1.msra.mxu0 0.0
    %3180 = vmatprep.subr.mxu0 0.0
    %3181 = vmatpush1.msra.mxu0 0.0
    %3182 = vmatprep.subr.mxu0 0.0
    %3183 = vmatpush1.msra.mxu0 0.0
    %3184 = vmatprep.subr.mxu0 0.0
    %3185 = vmatpush1.msra.mxu0 0.0
    %3186 = vmatprep.subr.mxu0 0.0
    %3187 = vmatpush1.msra.mxu0 0.0
    %3188 = vmatprep.subr.mxu0 0.0
    %3189 = vmatpush1.msra.mxu0 0.0
    %3190 = vmatprep.subr.mxu0 0.0
    %3191 = vmatpush1.msra.mxu0 0.0
    %3192 = vmatprep.subr.mxu0 0.0
    %3193 = vmatpush1.msra.mxu0 0.0
    %3194 = vmatprep.subr.mxu0 0.0
    %3195 = vmatpush1.msra.mxu0 0.0
    %3196 = vmatprep.subr.mxu0 0.0
    %3197 = vmatpush1.msra.mxu0 0.0
    %3198 = vmatprep.subr.mxu0 0.0
    %3199 = vmatpush1.msra.mxu0 0.0
    %3200 = vmatprep.subr.mxu0 0.0
    %3201 = vmatpush1.msra.mxu0 0.0
    %3202 = vmatprep.subr.mxu0 0.0
    %3203 = vmatpush1.msra.mxu0 0.0
    %3204 = vmatprep.subr.mxu0 0.0
    %3205 = vmatpush1.msra.mxu0 0.0
    %3206 = vmatprep.subr.mxu0 0.0
    %3207 = vmatpush1.msra.mxu0 0.0
    %3208 = vmatprep.subr.mxu0 0.0
    %3209 = vmatpush1.msra.mxu0 0.0
    %3210 = vmatprep.subr.mxu0 0.0
    %3211 = vmatpush1.msra.mxu0 0.0
    %3212 = vmatprep.subr.mxu0 0.0
    %3213 = vmatpush1.msra.mxu0 0.0
    %3214 = vmatprep.subr.mxu0 0.0
    %3215 = vmatpush1.msra.mxu0 0.0
    %3216 = vmatprep.subr.mxu0 0.0
    %3217 = vmatpush1.msra.mxu0 0.0
    %3218 = vmatprep.subr.mxu0 0.0
    %3219 = vmatpush1.msra.mxu0 0.0
    %3220 = vmatprep.subr.mxu0 0.0
    %3221 = vmatpush1.msra.mxu0 0.0
    %3222 = vmatprep.subr.mxu0 0.0
    %3223 = vmatpush1.msra.mxu0 0.0
    %3224 = vmatprep.mubr.f32.mxu0 0.0
    %3225 = vmatmul.mubr.f32.gmra.mrb[0].mxu0 %v3155
    %v3226 = vpop.f32.mrb[0].mxu0
    %v3227 = vadd.f32 %v3153, %v3226
    %v3228 = vpop.f32.mrb[0].mxu0
    %3229 = vmatprep.mubr.f32.mxu0 0.0
    %3230 = vmatmul.mubr.f32.gmra.mrb[0].mxu0 %v3158
    %v3231 = vpop.f32.mrb[0].mxu0
    %v3232 = vadd.f32 %v3153, %v3231
    %v3233 = vpop.f32.mrb[0].mxu0
    %3234 = vdwg.mxu0
    %v3235 = vadd.f32 %v2394, %v3227
    %v3236 = vadd.f32 %v2395, %v3232
    %v3237 = vsel %vm159, %v3235, 0.0
    %3238 = vadd.xlane.f32.xlu0 %v3237
    %v3239 = vpop.xlane.xlu0 %3238
    %v3240 = vsel %vm159, %v3236, 0.0
    %3241 = vadd.xlane.f32.xlu0 %v3240
    %v3242 = vpop.xlane.xlu0 %3241
    %v3243 = vmul.f32 %v3239, %v1018
    %v3244 = vmul.f32 %v3242, %v1018
    %v3245 = vmul.f32 %v3235, %v3235
    %v3246 = vmul.f32 %v3236, %v3236
    %v3247 = vsel %vm159, %v3245, 0.0
    %3248 = vadd.xlane.f32.xlu0 %v3247
    %v3249 = vpop.xlane.xlu0 %3248
    %v3250 = vsel %vm159, %v3246, 0.0
    %3251 = vadd.xlane.f32.xlu0 %v3250
    %v3252 = vpop.xlane.xlu0 %3251
    %v3253 = vmul.f32 %v3249, %v1018
    %v3254 = vmul.f32 %v3252, %v1018
    %v3255 = vmul.f32 %v3243, %v3243
    %v3256 = vmul.f32 %v3244, %v3244
    %v3257 = vsub.f32 %v3253, %v3255
    %v3258 = vsub.f32 %v3254, %v3256
    %v3259 = vsub.f32 %v3235, %v3243
    %v3260 = vsub.f32 %v3236, %v3244
    %v3261 = vadd.f32 %v3257, 1e-05
    %v3262 = vadd.f32 %v3258, 1e-05
    %v3263 = vrsqrt.pop %v3261
    %v3264 = vrsqrt.pop %v3262
    %v3265 = vmul.f32 %v3259, %v3263
    %v3266 = vmul.f32 %v3260, %v3264
    %v3267 = vlaneseq
    %v3268 = vshrl.u32 %v3267, 7
    %v3269 = vsub.s32 6, %v3268
    %v3270 = vrot.slane %v2397, %v3269
    %v3271 = vmul.f32 %v3265, %v3270
    %v3272 = vmul.f32 %v3266, %v3270
    %v3273 = vlaneseq
    %v3274 = vshrl.u32 %v3273, 7
    %v3275 = vsub.s32 7, %v3274
    %v3276 = vrot.slane %v2397, %v3275
    %v3277 = vadd.f32 %v3271, %v3276
    %v3278 = vadd.f32 %v3272, %v3276
    %s3279 = scalar_lea.vmem [#allocation2], 64
    %v3280 = vld [vmem:[%s3279] sm:$0xff]
    %v3281 = vld [vmem:[%s3279 + $0x8] sm:$0xff]
    %v3282 = vld [vmem:[%s3279 + $0x10] sm:$0xff]
    %v3283 = vld [vmem:[%s3279 + $0x18] sm:$0xff]
    %v3284 = vlaneseq
    %v3285 = vshrl.u32 %v3284, 7
    %v3286 = vsub.s32 4, %v3285
    %v3287 = vrot.slane %v2397, %v3286
    %v3289 = vsel %vm159, %v3277, 0
    %v3292 = vsel %vm159, %v3278, 0
    %3294 = vmatprep.subr.mxu0 0.0
    %3295 = vmatpush1.msra.mxu0 %v3280
    %3296 = vmatprep.subr.mxu0 0.0
    %3297 = vmatpush1.msra.mxu0 %v3281
    %3298 = vmatprep.subr.mxu0 0.0
    %3299 = vmatpush1.msra.mxu0 %v3282
    %3300 = vmatprep.subr.mxu0 0.0
    %3301 = vmatpush1.msra.mxu0 %v3283
    %3302 = vmatprep.subr.mxu0 0.0
    %3303 = vmatpush1.msra.mxu0 0.0
    %3304 = vmatprep.subr.mxu0 0.0
    %3305 = vmatpush1.msra.mxu0 0.0
    %3306 = vmatprep.subr.mxu0 0.0
    %3307 = vmatpush1.msra.mxu0 0.0
    %3308 = vmatprep.subr.mxu0 0.0
    %3309 = vmatpush1.msra.mxu0 0.0
    %3310 = vmatprep.subr.mxu0 0.0
    %3311 = vmatpush1.msra.mxu0 0.0
    %3312 = vmatprep.subr.mxu0 0.0
    %3313 = vmatpush1.msra.mxu0 0.0
    %3314 = vmatprep.subr.mxu0 0.0
    %3315 = vmatpush1.msra.mxu0 0.0
    %3316 = vmatprep.subr.mxu0 0.0
    %3317 = vmatpush1.msra.mxu0 0.0
    %3318 = vmatprep.subr.mxu0 0.0
    %3319 = vmatpush1.msra.mxu0 0.0
    %3320 = vmatprep.subr.mxu0 0.0
    %3321 = vmatpush1.msra.mxu0 0.0
    %3322 = vmatprep.subr.mxu0 0.0
    %3323 = vmatpush1.msra.mxu0 0.0
    %3324 = vmatprep.subr.mxu0 0.0
    %3325 = vmatpush1.msra.mxu0 0.0
    %3326 = vmatprep.subr.mxu0 0.0
    %3327 = vmatpush1.msra.mxu0 0.0
    %3328 = vmatprep.subr.mxu0 0.0
    %3329 = vmatpush1.msra.mxu0 0.0
    %3330 = vmatprep.subr.mxu0 0.0
    %3331 = vmatpush1.msra.mxu0 0.0
    %3332 = vmatprep.subr.mxu0 0.0
    %3333 = vmatpush1.msra.mxu0 0.0
    %3334 = vmatprep.subr.mxu0 0.0
    %3335 = vmatpush1.msra.mxu0 0.0
    %3336 = vmatprep.subr.mxu0 0.0
    %3337 = vmatpush1.msra.mxu0 0.0
    %3338 = vmatprep.subr.mxu0 0.0
    %3339 = vmatpush1.msra.mxu0 0.0
    %3340 = vmatprep.subr.mxu0 0.0
    %3341 = vmatpush1.msra.mxu0 0.0
    %3342 = vmatprep.subr.mxu0 0.0
    %3343 = vmatpush1.msra.mxu0 0.0
    %3344 = vmatprep.subr.mxu0 0.0
    %3345 = vmatpush1.msra.mxu0 0.0
    %3346 = vmatprep.subr.mxu0 0.0
    %3347 = vmatpush1.msra.mxu0 0.0
    %3348 = vmatprep.subr.mxu0 0.0
    %3349 = vmatpush1.msra.mxu0 0.0
    %3350 = vmatprep.subr.mxu0 0.0
    %3351 = vmatpush1.msra.mxu0 0.0
    %3352 = vmatprep.subr.mxu0 0.0
    %3353 = vmatpush1.msra.mxu0 0.0
    %3354 = vmatprep.subr.mxu0 0.0
    %3355 = vmatpush1.msra.mxu0 0.0
    %3356 = vmatprep.subr.mxu0 0.0
    %3357 = vmatpush1.msra.mxu0 0.0
    %3358 = vmatprep.mubr.f32.mxu0 0.0
    %3359 = vmatmul.mubr.f32.gmra.mrb[0].mxu0 %v3289
    %v3360 = vpop.f32.mrb[0].mxu0
    %v3361 = vadd.f32 %v3287, %v3360
    %v3362 = vpop.f32.mrb[0].mxu0
    %3363 = vmatprep.mubr.f32.mxu0 0.0
    %3364 = vmatmul.mubr.f32.gmra.mrb[0].mxu0 %v3292
    %v3365 = vpop.f32.mrb[0].mxu0
    %v3366 = vadd.f32 %v3287, %v3365
    %v3367 = vpop.f32.mrb[0].mxu0
    %3368 = vdwg.mxu0
    %v3369 = vmax.f32 %v3361, 0.0
    %v3370 = vmax.f32 %v3366, 0.0
    %s3371 = scalar_lea.vmem %s6, 128
    %v3372 = vld [vmem:[%s3371] sm:$0xff]
    %v3373 = vld [vmem:[%s3371 + $0x8] sm:$0xff]
    %v3374 = vld [vmem:[%s3371 + $0x10] sm:$0xff]
    %v3375 = vld [vmem:[%s3371 + $0x18] sm:$0xff]
    %v3376 = vld [vmem:[%s3371 + $0x20] sm:$0xff]
    %v3377 = vld [vmem:[%s3371 + $0x28] sm:$0xff]
    %v3378 = vld [vmem:[%s3371 + $0x30] sm:$0xff]
    %v3379 = vld [vmem:[%s3371 + $0x38] sm:$0xff]
    %v3380 = vlaneseq
    %v3381 = vshrl.u32 %v3380, 7
    %v3382 = vsub.s32 5, %v3381
    %v3383 = vrot.slane %v2397, %v3382
    %v3385 = vsel %vm742, %v3369, 0
    %v3388 = vsel %vm742, %v3370, 0
    %3390 = vmatprep.subr.mxu0 0.0
    %3391 = vmatpush1.msra.mxu0 %v3372
    %3392 = vmatprep.subr.mxu0 0.0
    %3393 = vmatpush1.msra.mxu0 %v3373
    %3394 = vmatprep.subr.mxu0 0.0
    %3395 = vmatpush1.msra.mxu0 %v3374
    %3396 = vmatprep.subr.mxu0 0.0
    %3397 = vmatpush1.msra.mxu0 %v3375
    %3398 = vmatprep.subr.mxu0 0.0
    %3399 = vmatpush1.msra.mxu0 %v3376
    %3400 = vmatprep.subr.mxu0 0.0
    %3401 = vmatpush1.msra.mxu0 %v3377
    %3402 = vmatprep.subr.mxu0 0.0
    %3403 = vmatpush1.msra.mxu0 %v3378
    %3404 = vmatprep.subr.mxu0 0.0
    %3405 = vmatpush1.msra.mxu0 %v3379
    %3406 = vmatprep.subr.mxu0 0.0
    %3407 = vmatpush1.msra.mxu0 0.0
    %3408 = vmatprep.subr.mxu0 0.0
    %3409 = vmatpush1.msra.mxu0 0.0
    %3410 = vmatprep.subr.mxu0 0.0
    %3411 = vmatpush1.msra.mxu0 0.0
    %3412 = vmatprep.subr.mxu0 0.0
    %3413 = vmatpush1.msra.mxu0 0.0
    %3414 = vmatprep.subr.mxu0 0.0
    %3415 = vmatpush1.msra.mxu0 0.0
    %3416 = vmatprep.subr.mxu0 0.0
    %3417 = vmatpush1.msra.mxu0 0.0
    %3418 = vmatprep.subr.mxu0 0.0
    %3419 = vmatpush1.msra.mxu0 0.0
    %3420 = vmatprep.subr.mxu0 0.0
    %3421 = vmatpush1.msra.mxu0 0.0
    %3422 = vmatprep.subr.mxu0 0.0
    %3423 = vmatpush1.msra.mxu0 0.0
    %3424 = vmatprep.subr.mxu0 0.0
    %3425 = vmatpush1.msra.mxu0 0.0
    %3426 = vmatprep.subr.mxu0 0.0
    %3427 = vmatpush1.msra.mxu0 0.0
    %3428 = vmatprep.subr.mxu0 0.0
    %3429 = vmatpush1.msra.mxu0 0.0
    %3430 = vmatprep.subr.mxu0 0.0
    %3431 = vmatpush1.msra.mxu0 0.0
    %3432 = vmatprep.subr.mxu0 0.0
    %3433 = vmatpush1.msra.mxu0 0.0
    %3434 = vmatprep.subr.mxu0 0.0
    %3435 = vmatpush1.msra.mxu0 0.0
    %3436 = vmatprep.subr.mxu0 0.0
    %3437 = vmatpush1.msra.mxu0 0.0
    %3438 = vmatprep.subr.mxu0 0.0
    %3439 = vmatpush1.msra.mxu0 0.0
    %3440 = vmatprep.subr.mxu0 0.0
    %3441 = vmatpush1.msra.mxu0 0.0
    %3442 = vmatprep.subr.mxu0 0.0
    %3443 = vmatpush1.msra.mxu0 0.0
    %3444 = vmatprep.subr.mxu0 0.0
    %3445 = vmatpush1.msra.mxu0 0.0
    %3446 = vmatprep.subr.mxu0 0.0
    %3447 = vmatpush1.msra.mxu0 0.0
    %3448 = vmatprep.subr.mxu0 0.0
    %3449 = vmatpush1.msra.mxu0 0.0
    %3450 = vmatprep.subr.mxu0 0.0
    %3451 = vmatpush1.msra.mxu0 0.0
    %3452 = vmatprep.subr.mxu0 0.0
    %3453 = vmatpush1.msra.mxu0 0.0
    %3454 = vmatprep.mubr.f32.mxu0 0.0
    %3455 = vmatmul.mubr.f32.gmra.mrb[0].mxu0 %v3385
    %v3456 = vpop.f32.mrb[0].mxu0
    %v3457 = vadd.f32 %v3383, %v3456
    %v3458 = vpop.f32.mrb[0].mxu0
    %3459 = vmatprep.mubr.f32.mxu0 0.0
    %3460 = vmatmul.mubr.f32.gmra.mrb[0].mxu0 %v3388
    %v3461 = vpop.f32.mrb[0].mxu0
    %v3462 = vadd.f32 %v3383, %v3461
    %v3463 = vpop.f32.mrb[0].mxu0
    %3464 = vdwg.mxu0
    %v3465 = vadd.f32 %v3277, %v3457
    %v3466 = vadd.f32 %v3278, %v3462
    %v3467 = vsel %vm159, %v3465, 0.0
    %3468 = vadd.xlane.f32.xlu0 %v3467
    %v3469 = vpop.xlane.xlu0 %3468
    %v3470 = vsel %vm159, %v3466, 0.0
    %3471 = vadd.xlane.f32.xlu0 %v3470
    %v3472 = vpop.xlane.xlu0 %3471
    %v3473 = vmul.f32 %v3469, %v1018
    %v3474 = vmul.f32 %v3472, %v1018
    %v3475 = vmul.f32 %v3465, %v3465
    %v3476 = vmul.f32 %v3466, %v3466
    %v3477 = vsel %vm159, %v3475, 0.0
    %3478 = vadd.xlane.f32.xlu0 %v3477
    %v3479 = vpop.xlane.xlu0 %3478
    %v3480 = vsel %vm159, %v3476, 0.0
    %3481 = vadd.xlane.f32.xlu0 %v3480
    %v3482 = vpop.xlane.xlu0 %3481
    %v3483 = vmul.f32 %v3479, %v1018
    %v3484 = vmul.f32 %v3482, %v1018
    %v3485 = vmul.f32 %v3473, %v3473
    %v3486 = vmul.f32 %v3474, %v3474
    %v3487 = vsub.f32 %v3483, %v3485
    %v3488 = vsub.f32 %v3484, %v3486
    %v3489 = vsub.f32 %v3465, %v3473
    %v3490 = vsub.f32 %v3466, %v3474
    %v3491 = vadd.f32 %v3487, 1e-05
    %v3492 = vadd.f32 %v3488, 1e-05
    %v3493 = vrsqrt.pop %v3491
    %v3494 = vrsqrt.pop %v3492
    %v3495 = vmul.f32 %v3489, %v3493
    %v3496 = vmul.f32 %v3490, %v3494
    %v3497 = vlaneseq
    %v3498 = vshrl.u32 %v3497, 7
    %v3499 = vsub.s32 0, %v3498
    %v3500 = vrot.slane %v2398, %v3499
    %v3501 = vmul.f32 %v3495, %v3500
    %v3502 = vmul.f32 %v3496, %v3500
    %v3503 = vlaneseq
    %v3504 = vshrl.u32 %v3503, 7
    %v3505 = vsub.s32 1, %v3504
    %v3506 = vrot.slane %v2398, %v3505
    %v3507 = vadd.f32 %v3501, %v3506
    %v3508 = vadd.f32 %v3502, %v3506
    %s3509 = scalar_lea.vmem %s7, 48
    %v3510 = vld [vmem:[%s3509] sm:$0xff]
    %v3511 = vld [vmem:[%s3509 + $0x8] sm:$0x3]
    %s3512 = scalar_lea.vmem %s1, 96
    %v3513 = vld [vmem:[%s3512] sm:$0xff]
    %v3514 = vld [vmem:[%s3512 + $0x8] sm:$0xff]
    %v3515 = vld [vmem:[%s3512 + $0x10] sm:$0xff]
    %v3516 = vld [vmem:[%s3512 + $0x18] sm:$0xff]
    %v3517 = vlaneseq
    %v3518 = vshrl.u32 %v3517, 7
    %v3519 = vsub.s32 0, %v3518
    %v3520 = vrot.slane %v3510, %v3519
    %v3522 = vsel %vm159, %v3507, 0
    %v3525 = vsel %vm159, %v3508, 0
    %3527 = vmatprep.subr.mxu0 0.0
    %3528 = vmatpush1.msra.mxu0 %v3513
    %3529 = vmatprep.subr.mxu0 0.0
    %3530 = vmatpush1.msra.mxu0 %v3514
    %3531 = vmatprep.subr.mxu0 0.0
    %3532 = vmatpush1.msra.mxu0 %v3515
    %3533 = vmatprep.subr.mxu0 0.0
    %3534 = vmatpush1.msra.mxu0 %v3516
    %3535 = vmatprep.subr.mxu0 0.0
    %3536 = vmatpush1.msra.mxu0 0.0
    %3537 = vmatprep.subr.mxu0 0.0
    %3538 = vmatpush1.msra.mxu0 0.0
    %3539 = vmatprep.subr.mxu0 0.0
    %3540 = vmatpush1.msra.mxu0 0.0
    %3541 = vmatprep.subr.mxu0 0.0
    %3542 = vmatpush1.msra.mxu0 0.0
    %3543 = vmatprep.subr.mxu0 0.0
    %3544 = vmatpush1.msra.mxu0 0.0
    %3545 = vmatprep.subr.mxu0 0.0
    %3546 = vmatpush1.msra.mxu0 0.0
    %3547 = vmatprep.subr.mxu0 0.0
    %3548 = vmatpush1.msra.mxu0 0.0
    %3549 = vmatprep.subr.mxu0 0.0
    %3550 = vmatpush1.msra.mxu0 0.0
    %3551 = vmatprep.subr.mxu0 0.0
    %3552 = vmatpush1.msra.mxu0 0.0
    %3553 = vmatprep.subr.mxu0 0.0
    %3554 = vmatpush1.msra.mxu0 0.0
    %3555 = vmatprep.subr.mxu0 0.0
    %3556 = vmatpush1.msra.mxu0 0.0
    %3557 = vmatprep.subr.mxu0 0.0
    %3558 = vmatpush1.msra.mxu0 0.0
    %3559 = vmatprep.subr.mxu0 0.0
    %3560 = vmatpush1.msra.mxu0 0.0
    %3561 = vmatprep.subr.mxu0 0.0
    %3562 = vmatpush1.msra.mxu0 0.0
    %3563 = vmatprep.subr.mxu0 0.0
    %3564 = vmatpush1.msra.mxu0 0.0
    %3565 = vmatprep.subr.mxu0 0.0
    %3566 = vmatpush1.msra.mxu0 0.0
    %3567 = vmatprep.subr.mxu0 0.0
    %3568 = vmatpush1.msra.mxu0 0.0
    %3569 = vmatprep.subr.mxu0 0.0
    %3570 = vmatpush1.msra.mxu0 0.0
    %3571 = vmatprep.subr.mxu0 0.0
    %3572 = vmatpush1.msra.mxu0 0.0
    %3573 = vmatprep.subr.mxu0 0.0
    %3574 = vmatpush1.msra.mxu0 0.0
    %3575 = vmatprep.subr.mxu0 0.0
    %3576 = vmatpush1.msra.mxu0 0.0
    %3577 = vmatprep.subr.mxu0 0.0
    %3578 = vmatpush1.msra.mxu0 0.0
    %3579 = vmatprep.subr.mxu0 0.0
    %3580 = vmatpush1.msra.mxu0 0.0
    %3581 = vmatprep.subr.mxu0 0.0
    %3582 = vmatpush1.msra.mxu0 0.0
    %3583 = vmatprep.subr.mxu0 0.0
    %3584 = vmatpush1.msra.mxu0 0.0
    %3585 = vmatprep.subr.mxu0 0.0
    %3586 = vmatpush1.msra.mxu0 0.0
    %3587 = vmatprep.subr.mxu0 0.0
    %3588 = vmatpush1.msra.mxu0 0.0
    %3589 = vmatprep.subr.mxu0 0.0
    %3590 = vmatpush1.msra.mxu0 0.0
    %3591 = vmatprep.mubr.f32.mxu0 0.0
    %3592 = vmatmul.mubr.f32.gmra.mrb[0].mxu0 %v3522
    %v3593 = vpop.f32.mrb[0].mxu0
    %v3594 = vadd.f32 %v3520, %v3593
    %v3595 = vpop.f32.mrb[0].mxu0
    %3596 = vmatprep.mubr.f32.mxu0 0.0
    %3597 = vmatmul.mubr.f32.gmra.mrb[0].mxu0 %v3525
    %v3598 = vpop.f32.mrb[0].mxu0
    %v3599 = vadd.f32 %v3520, %v3598
    %v3600 = vpop.f32.mrb[0].mxu0
    %3601 = vdwg.mxu0
    %3602 = vmatprep.subr.mxu0 0.0
    %3603 = vmatpush1.msra.mxu0 %v3507
    %3604 = vmatprep.subr.mxu0 0.0
    %3605 = vmatpush1.msra.mxu0 %v3508
    %3606 = vmatprep.subr.mxu0 0.0
    %3607 = vmatpush1.msra.mxu0 0.0
    %3608 = vmatprep.subr.mxu0 0.0
    %3609 = vmatpush1.msra.mxu0 0.0
    %3610 = vmatprep.subr.mxu0 0.0
    %3611 = vmatpush1.msra.mxu0 0.0
    %3612 = vmatprep.subr.mxu0 0.0
    %3613 = vmatpush1.msra.mxu0 0.0
    %3614 = vmatprep.subr.mxu0 0.0
    %3615 = vmatpush1.msra.mxu0 0.0
    %3616 = vmatprep.subr.mxu0 0.0
    %3617 = vmatpush1.msra.mxu0 0.0
    %3618 = vmatprep.subr.mxu0 0.0
    %3619 = vmatpush1.msra.mxu0 0.0
    %3620 = vmatprep.subr.mxu0 0.0
    %3621 = vmatpush1.msra.mxu0 0.0
    %3622 = vmatprep.subr.mxu0 0.0
    %3623 = vmatpush1.msra.mxu0 0.0
    %3624 = vmatprep.subr.mxu0 0.0
    %3625 = vmatpush1.msra.mxu0 0.0
    %3626 = vmatprep.subr.mxu0 0.0
    %3627 = vmatpush1.msra.mxu0 0.0
    %3628 = vmatprep.subr.mxu0 0.0
    %3629 = vmatpush1.msra.mxu0 0.0
    %3630 = vmatprep.subr.mxu0 0.0
    %3631 = vmatpush1.msra.mxu0 0.0
    %3632 = vmatprep.subr.mxu0 0.0
    %3633 = vmatpush1.msra.mxu0 0.0
    %3634 = vmatprep.subr.mxu0 0.0
    %3635 = vmatpush1.msra.mxu0 0.0
    %3636 = vmatprep.subr.mxu0 0.0
    %3637 = vmatpush1.msra.mxu0 0.0
    %3638 = vmatprep.subr.mxu0 0.0
    %3639 = vmatpush1.msra.mxu0 0.0
    %3640 = vmatprep.subr.mxu0 0.0
    %3641 = vmatpush1.msra.mxu0 0.0
    %3642 = vmatprep.subr.mxu0 0.0
    %3643 = vmatpush1.msra.mxu0 0.0
    %3644 = vmatprep.subr.mxu0 0.0
    %3645 = vmatpush1.msra.mxu0 0.0
    %3646 = vmatprep.subr.mxu0 0.0
    %3647 = vmatpush1.msra.mxu0 0.0
    %3648 = vmatprep.subr.mxu0 0.0
    %3649 = vmatpush1.msra.mxu0 0.0
    %3650 = vmatprep.subr.mxu0 0.0
    %3651 = vmatpush1.msra.mxu0 0.0
    %3652 = vmatprep.subr.mxu0 0.0
    %3653 = vmatpush1.msra.mxu0 0.0
    %3654 = vmatprep.subr.mxu0 0.0
    %3655 = vmatpush1.msra.mxu0 0.0
    %3656 = vmatprep.subr.mxu0 0.0
    %3657 = vmatpush1.msra.mxu0 0.0
    %3658 = vmatprep.subr.mxu0 0.0
    %3659 = vmatpush1.msra.mxu0 0.0
    %3660 = vmatprep.subr.mxu0 0.0
    %3661 = vmatpush1.msra.mxu0 0.0
    %3662 = vmatprep.subr.mxu0 0.0
    %3663 = vmatpush1.msra.mxu0 0.0
    %3664 = vmatprep.subr.mxu0 0.0
    %3665 = vmatpush1.msra.mxu0 0.0
    %3666 = vmatprep.mubr.f32.mxu0 0.0
    %3667 = vmatmul.mubr.f32.gmra.mrb[0].mxu0 %v243
    %v3668 = vpop.f32.mrb[0].mxu0
    %v3669 = vadd.f32 0.0, %v3668
    %v3670 = vpop.f32.mrb[0].mxu0
    %3671 = vmatprep.mubr.f32.mxu0 0.0
    %3672 = vmatmul.mubr.f32.gmra.mrb[0].mxu0 %v246
    %v3673 = vpop.f32.mrb[0].mxu0
    %v3674 = vadd.f32 0.0, %v3673
    %v3675 = vpop.f32.mrb[0].mxu0
    %3676 = vmatprep.mubr.f32.mxu0 0.0
    %3677 = vmatmul.mubr.f32.gmra.mrb[0].mxu0 %v249
    %v3678 = vpop.f32.mrb[0].mxu0
    %v3679 = vadd.f32 0.0, %v3678
    %v3680 = vpop.f32.mrb[0].mxu0
    %3681 = vmatprep.mubr.f32.mxu0 0.0
    %3682 = vmatmul.mubr.f32.gmra.mrb[0].mxu0 %v252
    %v3683 = vpop.f32.mrb[0].mxu0
    %v3684 = vadd.f32 0.0, %v3683
    %v3685 = vpop.f32.mrb[0].mxu0
    %3686 = vmatprep.mubr.f32.mxu0 0.0
    %3687 = vmatmul.mubr.f32.gmra.mrb[0].mxu0 %v255
    %v3688 = vpop.f32.mrb[0].mxu0
    %v3689 = vadd.f32 0.0, %v3688
    %v3690 = vpop.f32.mrb[0].mxu0
    %3691 = vmatprep.mubr.f32.mxu0 0.0
    %3692 = vmatmul.mubr.f32.gmra.mrb[0].mxu0 %v258
    %v3693 = vpop.f32.mrb[0].mxu0
    %v3694 = vadd.f32 0.0, %v3693
    %v3695 = vpop.f32.mrb[0].mxu0
    %3696 = vmatprep.mubr.f32.mxu0 0.0
    %3697 = vmatmul.mubr.f32.gmra.mrb[0].mxu0 %v261
    %v3698 = vpop.f32.mrb[0].mxu0
    %v3699 = vadd.f32 0.0, %v3698
    %v3700 = vpop.f32.mrb[0].mxu0
    %3701 = vmatprep.mubr.f32.mxu0 0.0
    %3702 = vmatmul.mubr.f32.gmra.mrb[0].mxu0 %v264
    %v3703 = vpop.f32.mrb[0].mxu0
    %v3704 = vadd.f32 0.0, %v3703
    %v3705 = vpop.f32.mrb[0].mxu0
    %3706 = vdwg.mxu0
    %s3707 = scalar_lea.vmem %s2, 96
    %v3708 = vld [vmem:[%s3707] sm:$0xff]
    %v3709 = vld [vmem:[%s3707 + $0x8] sm:$0xff]
    %v3710 = vld [vmem:[%s3707 + $0x10] sm:$0xff]
    %v3711 = vld [vmem:[%s3707 + $0x18] sm:$0xff]
    %v3712 = vlaneseq
    %v3713 = vshrl.u32 %v3712, 7
    %v3714 = vsub.s32 1, %v3713
    %v3715 = vrot.slane %v3510, %v3714
    %v3717 = vsel %vm159, %v3669, 0
    %v3720 = vsel %vm159, %v3674, 0
    %v3723 = vsel %vm159, %v3679, 0
    %v3726 = vsel %vm159, %v3684, 0
    %v3729 = vsel %vm159, %v3689, 0
    %v3732 = vsel %vm159, %v3694, 0
    %v3735 = vsel %vm159, %v3699, 0
    %v3738 = vsel %vm159, %v3704, 0
    %3740 = vmatprep.subr.mxu0 0.0
    %3741 = vmatpush1.msra.mxu0 %v3708
    %3742 = vmatprep.subr.mxu0 0.0
    %3743 = vmatpush1.msra.mxu0 %v3709
    %3744 = vmatprep.subr.mxu0 0.0
    %3745 = vmatpush1.msra.mxu0 %v3710
    %3746 = vmatprep.subr.mxu0 0.0
    %3747 = vmatpush1.msra.mxu0 %v3711
    %3748 = vmatprep.subr.mxu0 0.0
    %3749 = vmatpush1.msra.mxu0 0.0
    %3750 = vmatprep.subr.mxu0 0.0
    %3751 = vmatpush1.msra.mxu0 0.0
    %3752 = vmatprep.subr.mxu0 0.0
    %3753 = vmatpush1.msra.mxu0 0.0
    %3754 = vmatprep.subr.mxu0 0.0
    %3755 = vmatpush1.msra.mxu0 0.0
    %3756 = vmatprep.subr.mxu0 0.0
    %3757 = vmatpush1.msra.mxu0 0.0
    %3758 = vmatprep.subr.mxu0 0.0
    %3759 = vmatpush1.msra.mxu0 0.0
    %3760 = vmatprep.subr.mxu0 0.0
    %3761 = vmatpush1.msra.mxu0 0.0
    %3762 = vmatprep.subr.mxu0 0.0
    %3763 = vmatpush1.msra.mxu0 0.0
    %3764 = vmatprep.subr.mxu0 0.0
    %3765 = vmatpush1.msra.mxu0 0.0
    %3766 = vmatprep.subr.mxu0 0.0
    %3767 = vmatpush1.msra.mxu0 0.0
    %3768 = vmatprep.subr.mxu0 0.0
    %3769 = vmatpush1.msra.mxu0 0.0
    %3770 = vmatprep.subr.mxu0 0.0
    %3771 = vmatpush1.msra.mxu0 0.0
    %3772 = vmatprep.subr.mxu0 0.0
    %3773 = vmatpush1.msra.mxu0 0.0
    %3774 = vmatprep.subr.mxu0 0.0
    %3775 = vmatpush1.msra.mxu0 0.0
    %3776 = vmatprep.subr.mxu0 0.0
    %3777 = vmatpush1.msra.mxu0 0.0
    %3778 = vmatprep.subr.mxu0 0.0
    %3779 = vmatpush1.msra.mxu0 0.0
    %3780 = vmatprep.subr.mxu0 0.0
    %3781 = vmatpush1.msra.mxu0 0.0
    %3782 = vmatprep.subr.mxu0 0.0
    %3783 = vmatpush1.msra.mxu0 0.0
    %3784 = vmatprep.subr.mxu0 0.0
    %3785 = vmatpush1.msra.mxu0 0.0
    %3786 = vmatprep.subr.mxu0 0.0
    %3787 = vmatpush1.msra.mxu0 0.0
    %3788 = vmatprep.subr.mxu0 0.0
    %3789 = vmatpush1.msra.mxu0 0.0
    %3790 = vmatprep.subr.mxu0 0.0
    %3791 = vmatpush1.msra.mxu0 0.0
    %3792 = vmatprep.subr.mxu0 0.0
    %3793 = vmatpush1.msra.mxu0 0.0
    %3794 = vmatprep.subr.mxu0 0.0
    %3795 = vmatpush1.msra.mxu0 0.0
    %3796 = vmatprep.subr.mxu0 0.0
    %3797 = vmatpush1.msra.mxu0 0.0
    %3798 = vmatprep.subr.mxu0 0.0
    %3799 = vmatpush1.msra.mxu0 0.0
    %3800 = vmatprep.subr.mxu0 0.0
    %3801 = vmatpush1.msra.mxu0 0.0
    %3802 = vmatprep.subr.mxu0 0.0
    %3803 = vmatpush1.msra.mxu0 0.0
    %3804 = vmatprep.mubr.f32.mxu0 0.0
    %3805 = vmatmul.mubr.f32.gmra.mrb[0].mxu0 %v3717
    %v3806 = vpop.f32.mrb[0].mxu0
    %v3807 = vadd.f32 %v3715, %v3806
    %v3808 = vpop.f32.mrb[0].mxu0
    %3809 = vmatprep.mubr.f32.mxu0 0.0
    %3810 = vmatmul.mubr.f32.gmra.mrb[0].mxu0 %v3720
    %v3811 = vpop.f32.mrb[0].mxu0
    %v3812 = vadd.f32 %v3715, %v3811
    %v3813 = vpop.f32.mrb[0].mxu0
    %3814 = vmatprep.mubr.f32.mxu0 0.0
    %3815 = vmatmul.mubr.f32.gmra.mrb[0].mxu0 %v3723
    %v3816 = vpop.f32.mrb[0].mxu0
    %v3817 = vadd.f32 %v3715, %v3816
    %v3818 = vpop.f32.mrb[0].mxu0
    %3819 = vmatprep.mubr.f32.mxu0 0.0
    %3820 = vmatmul.mubr.f32.gmra.mrb[0].mxu0 %v3726
    %v3821 = vpop.f32.mrb[0].mxu0
    %v3822 = vadd.f32 %v3715, %v3821
    %v3823 = vpop.f32.mrb[0].mxu0
    %3824 = vmatprep.mubr.f32.mxu0 0.0
    %3825 = vmatmul.mubr.f32.gmra.mrb[0].mxu0 %v3729
    %v3826 = vpop.f32.mrb[0].mxu0
    %v3827 = vadd.f32 %v3715, %v3826
    %v3828 = vpop.f32.mrb[0].mxu0
    %3829 = vmatprep.mubr.f32.mxu0 0.0
    %3830 = vmatmul.mubr.f32.gmra.mrb[0].mxu0 %v3732
    %v3831 = vpop.f32.mrb[0].mxu0
    %v3832 = vadd.f32 %v3715, %v3831
    %v3833 = vpop.f32.mrb[0].mxu0
    %3834 = vmatprep.mubr.f32.mxu0 0.0
    %3835 = vmatmul.mubr.f32.gmra.mrb[0].mxu0 %v3735
    %v3836 = vpop.f32.mrb[0].mxu0
    %v3837 = vadd.f32 %v3715, %v3836
    %v3838 = vpop.f32.mrb[0].mxu0
    %3839 = vmatprep.mubr.f32.mxu0 0.0
    %3840 = vmatmul.mubr.f32.gmra.mrb[0].mxu0 %v3738
    %v3841 = vpop.f32.mrb[0].mxu0
    %v3842 = vadd.f32 %v3715, %v3841
    %v3843 = vpop.f32.mrb[0].mxu0
    %3844 = vdwg.mxu0
    %v3845 = vmul.f32 %v3807, %v96
    %v3846 = vmul.f32 %v3812, %v97
    %v3847 = vmul.f32 %v3817, %v98
    %v3848 = vmul.f32 %v3822, %v99
    %v3849 = vmul.f32 %v3827, %v100
    %v3850 = vmul.f32 %v3832, %v101
    %v3851 = vmul.f32 %v3837, %v102
    %v3852 = vmul.f32 %v3842, %v103
    %s3853 = scalar_lea.vmem %s3, 96
    %v3854 = vld [vmem:[%s3853] sm:$0xff]
    %v3855 = vld [vmem:[%s3853 + $0x8] sm:$0xff]
    %v3856 = vld [vmem:[%s3853 + $0x10] sm:$0xff]
    %v3857 = vld [vmem:[%s3853 + $0x18] sm:$0xff]
    %v3858 = vlaneseq
    %v3859 = vshrl.u32 %v3858, 7
    %v3860 = vsub.s32 2, %v3859
    %v3861 = vrot.slane %v3510, %v3860
    %3862 = vmatprep.subr.mxu0 0.0
    %3863 = vmatpush1.msra.mxu0 %v3854
    %3864 = vmatprep.subr.mxu0 0.0
    %3865 = vmatpush1.msra.mxu0 %v3855
    %3866 = vmatprep.subr.mxu0 0.0
    %3867 = vmatpush1.msra.mxu0 %v3856
    %3868 = vmatprep.subr.mxu0 0.0
    %3869 = vmatpush1.msra.mxu0 %v3857
    %3870 = vmatprep.subr.mxu0 0.0
    %3871 = vmatpush1.msra.mxu0 0.0
    %3872 = vmatprep.subr.mxu0 0.0
    %3873 = vmatpush1.msra.mxu0 0.0
    %3874 = vmatprep.subr.mxu0 0.0
    %3875 = vmatpush1.msra.mxu0 0.0
    %3876 = vmatprep.subr.mxu0 0.0
    %3877 = vmatpush1.msra.mxu0 0.0
    %3878 = vmatprep.subr.mxu0 0.0
    %3879 = vmatpush1.msra.mxu0 0.0
    %3880 = vmatprep.subr.mxu0 0.0
    %3881 = vmatpush1.msra.mxu0 0.0
    %3882 = vmatprep.subr.mxu0 0.0
    %3883 = vmatpush1.msra.mxu0 0.0
    %3884 = vmatprep.subr.mxu0 0.0
    %3885 = vmatpush1.msra.mxu0 0.0
    %3886 = vmatprep.subr.mxu0 0.0
    %3887 = vmatpush1.msra.mxu0 0.0
    %3888 = vmatprep.subr.mxu0 0.0
    %3889 = vmatpush1.msra.mxu0 0.0
    %3890 = vmatprep.subr.mxu0 0.0
    %3891 = vmatpush1.msra.mxu0 0.0
    %3892 = vmatprep.subr.mxu0 0.0
    %3893 = vmatpush1.msra.mxu0 0.0
    %3894 = vmatprep.subr.mxu0 0.0
    %3895 = vmatpush1.msra.mxu0 0.0
    %3896 = vmatprep.subr.mxu0 0.0
    %3897 = vmatpush1.msra.mxu0 0.0
    %3898 = vmatprep.subr.mxu0 0.0
    %3899 = vmatpush1.msra.mxu0 0.0
    %3900 = vmatprep.subr.mxu0 0.0
    %3901 = vmatpush1.msra.mxu0 0.0
    %3902 = vmatprep.subr.mxu0 0.0
    %3903 = vmatpush1.msra.mxu0 0.0
    %3904 = vmatprep.subr.mxu0 0.0
    %3905 = vmatpush1.msra.mxu0 0.0
    %3906 = vmatprep.subr.mxu0 0.0
    %3907 = vmatpush1.msra.mxu0 0.0
    %3908 = vmatprep.subr.mxu0 0.0
    %3909 = vmatpush1.msra.mxu0 0.0
    %3910 = vmatprep.subr.mxu0 0.0
    %3911 = vmatpush1.msra.mxu0 0.0
    %3912 = vmatprep.subr.mxu0 0.0
    %3913 = vmatpush1.msra.mxu0 0.0
    %3914 = vmatprep.subr.mxu0 0.0
    %3915 = vmatpush1.msra.mxu0 0.0
    %3916 = vmatprep.subr.mxu0 0.0
    %3917 = vmatpush1.msra.mxu0 0.0
    %3918 = vmatprep.subr.mxu0 0.0
    %3919 = vmatpush1.msra.mxu0 0.0
    %3920 = vmatprep.subr.mxu0 0.0
    %3921 = vmatpush1.msra.mxu0 0.0
    %3922 = vmatprep.subr.mxu0 0.0
    %3923 = vmatpush1.msra.mxu0 0.0
    %3924 = vmatprep.subr.mxu0 0.0
    %3925 = vmatpush1.msra.mxu0 0.0
    %3926 = vmatprep.mubr.f32.mxu0 0.0
    %3927 = vmatmul.mubr.f32.gmra.mrb[0].mxu0 %v3717
    %v3928 = vpop.f32.mrb[0].mxu0
    %v3929 = vadd.f32 %v3861, %v3928
    %v3930 = vpop.f32.mrb[0].mxu0
    %3931 = vmatprep.mubr.f32.mxu0 0.0
    %3932 = vmatmul.mubr.f32.gmra.mrb[0].mxu0 %v3720
    %v3933 = vpop.f32.mrb[0].mxu0
    %v3934 = vadd.f32 %v3861, %v3933
    %v3935 = vpop.f32.mrb[0].mxu0
    %3936 = vmatprep.mubr.f32.mxu0 0.0
    %3937 = vmatmul.mubr.f32.gmra.mrb[0].mxu0 %v3723
    %v3938 = vpop.f32.mrb[0].mxu0
    %v3939 = vadd.f32 %v3861, %v3938
    %v3940 = vpop.f32.mrb[0].mxu0
    %3941 = vmatprep.mubr.f32.mxu0 0.0
    %3942 = vmatmul.mubr.f32.gmra.mrb[0].mxu0 %v3726
    %v3943 = vpop.f32.mrb[0].mxu0
    %v3944 = vadd.f32 %v3861, %v3943
    %v3945 = vpop.f32.mrb[0].mxu0
    %3946 = vmatprep.mubr.f32.mxu0 0.0
    %3947 = vmatmul.mubr.f32.gmra.mrb[0].mxu0 %v3729
    %v3948 = vpop.f32.mrb[0].mxu0
    %v3949 = vadd.f32 %v3861, %v3948
    %v3950 = vpop.f32.mrb[0].mxu0
    %3951 = vmatprep.mubr.f32.mxu0 0.0
    %3952 = vmatmul.mubr.f32.gmra.mrb[0].mxu0 %v3732
    %v3953 = vpop.f32.mrb[0].mxu0
    %v3954 = vadd.f32 %v3861, %v3953
    %v3955 = vpop.f32.mrb[0].mxu0
    %3956 = vmatprep.mubr.f32.mxu0 0.0
    %3957 = vmatmul.mubr.f32.gmra.mrb[0].mxu0 %v3735
    %v3958 = vpop.f32.mrb[0].mxu0
    %v3959 = vadd.f32 %v3861, %v3958
    %v3960 = vpop.f32.mrb[0].mxu0
    %3961 = vmatprep.mubr.f32.mxu0 0.0
    %3962 = vmatmul.mubr.f32.gmra.mrb[0].mxu0 %v3738
    %v3963 = vpop.f32.mrb[0].mxu0
    %v3964 = vadd.f32 %v3861, %v3963
    %v3965 = vpop.f32.mrb[0].mxu0
    %3966 = vdwg.mxu0
    %v3967 = vmul.f32 %v3929, %v96
    %v3968 = vmul.f32 %v3934, %v97
    %v3969 = vmul.f32 %v3939, %v98
    %v3970 = vmul.f32 %v3944, %v99
    %v3971 = vmul.f32 %v3949, %v100
    %v3972 = vmul.f32 %v3954, %v101
    %v3973 = vmul.f32 %v3959, %v102
    %v3974 = vmul.f32 %v3964, %v103
    %v3976 = vsel %vm159, %v3594, 0
    %v3979 = vsel %vm159, %v3599, 0
    %v3982 = vsel %vm159, %v3845, 0
    %v3985 = vsel %vm159, %v3846, 0
    %v3988 = vsel %vm159, %v3847, 0
    %v3991 = vsel %vm159, %v3848, 0
    %v3994 = vsel %vm159, %v3849, 0
    %v3997 = vsel %vm159, %v3850, 0
    %v4000 = vsel %vm159, %v3851, 0
    %v4003 = vsel %vm159, %v3852, 0
    %4005 = vmatprep.subr.mxu0 0.0
    %4006 = vmatpush1.xpose.msra.mxu0 %v3982
    %4007 = vmatprep.subr.mxu0 0.0
    %4008 = vmatpush1.xpose.msra.mxu0 %v3985
    %4009 = vmatprep.subr.mxu0 0.0
    %4010 = vmatpush1.xpose.msra.mxu0 %v3988
    %4011 = vmatprep.subr.mxu0 0.0
    %4012 = vmatpush1.xpose.msra.mxu0 %v3991
    %4013 = vmatprep.subr.mxu0 0.0
    %4014 = vmatpush1.xpose.msra.mxu0 %v3994
    %4015 = vmatprep.subr.mxu0 0.0
    %4016 = vmatpush1.xpose.msra.mxu0 %v3997
    %4017 = vmatprep.subr.mxu0 0.0
    %4018 = vmatpush1.xpose.msra.mxu0 %v4000
    %4019 = vmatprep.subr.mxu0 0.0
    %4020 = vmatpush1.xpose.msra.mxu0 %v4003
    %4021 = vmatprep.subr.mxu0 0.0
    %4022 = vmatpush1.xpose.msra.mxu0 0.0
    %4023 = vmatprep.subr.mxu0 0.0
    %4024 = vmatpush1.xpose.msra.mxu0 0.0
    %4025 = vmatprep.subr.mxu0 0.0
    %4026 = vmatpush1.xpose.msra.mxu0 0.0
    %4027 = vmatprep.subr.mxu0 0.0
    %4028 = vmatpush1.xpose.msra.mxu0 0.0
    %4029 = vmatprep.subr.mxu0 0.0
    %4030 = vmatpush1.xpose.msra.mxu0 0.0
    %4031 = vmatprep.subr.mxu0 0.0
    %4032 = vmatpush1.xpose.msra.mxu0 0.0
    %4033 = vmatprep.subr.mxu0 0.0
    %4034 = vmatpush1.xpose.msra.mxu0 0.0
    %4035 = vmatprep.subr.mxu0 0.0
    %4036 = vmatpush1.xpose.msra.mxu0 0.0
    %4037 = vmatprep.subr.mxu0 0.0
    %4038 = vmatpush1.xpose.msra.mxu0 0.0
    %4039 = vmatprep.subr.mxu0 0.0
    %4040 = vmatpush1.xpose.msra.mxu0 0.0
    %4041 = vmatprep.subr.mxu0 0.0
    %4042 = vmatpush1.xpose.msra.mxu0 0.0
    %4043 = vmatprep.subr.mxu0 0.0
    %4044 = vmatpush1.xpose.msra.mxu0 0.0
    %4045 = vmatprep.subr.mxu0 0.0
    %4046 = vmatpush1.xpose.msra.mxu0 0.0
    %4047 = vmatprep.subr.mxu0 0.0
    %4048 = vmatpush1.xpose.msra.mxu0 0.0
    %4049 = vmatprep.subr.mxu0 0.0
    %4050 = vmatpush1.xpose.msra.mxu0 0.0
    %4051 = vmatprep.subr.mxu0 0.0
    %4052 = vmatpush1.xpose.msra.mxu0 0.0
    %4053 = vmatprep.subr.mxu0 0.0
    %4054 = vmatpush1.xpose.msra.mxu0 0.0
    %4055 = vmatprep.subr.mxu0 0.0
    %4056 = vmatpush1.xpose.msra.mxu0 0.0
    %4057 = vmatprep.subr.mxu0 0.0
    %4058 = vmatpush1.xpose.msra.mxu0 0.0
    %4059 = vmatprep.subr.mxu0 0.0
    %4060 = vmatpush1.xpose.msra.mxu0 0.0
    %4061 = vmatprep.subr.mxu0 0.0
    %4062 = vmatpush1.xpose.msra.mxu0 0.0
    %4063 = vmatprep.subr.mxu0 0.0
    %4064 = vmatpush1.xpose.msra.mxu0 0.0
    %4065 = vmatprep.subr.mxu0 0.0
    %4066 = vmatpush1.xpose.msra.mxu0 0.0
    %4067 = vmatprep.subr.mxu0 0.0
    %4068 = vmatpush1.xpose.msra.mxu0 0.0
    %4069 = vmatprep.mubr.f32.mxu0 0.0
    %4070 = vmatmul.mubr.f32.gmra.mrb[0].mxu0 %v3976
    %v4071 = vpop.f32.mrb[0].mxu0
    %v4072 = vadd.f32 %v104, %v4071
    %v4073 = vpop.f32.mrb[0].mxu0
    %4074 = vmatprep.mubr.f32.mxu0 0.0
    %4075 = vmatmul.mubr.f32.gmra.mrb[0].mxu0 %v3979
    %v4076 = vpop.f32.mrb[0].mxu0
    %v4077 = vadd.f32 %v105, %v4076
    %v4078 = vpop.f32.mrb[0].mxu0
    %4079 = vdwg.mxu0
    %v4080 = vsel %vm742, %v4072, -inf
    %4081 = vmax.xlane.f32.xlu0 %v4080
    %v4082 = vpop.xlane.xlu0 %4081
    %v4083 = vsel %vm742, %v4077, -inf
    %4084 = vmax.xlane.f32.xlu0 %v4083
    %v4085 = vpop.xlane.xlu0 %4084
    %v4086 = vsub.f32 %v4072, %v4082
    %v4087 = vsub.f32 %v4077, %v4085
    %v4088 = vmul.f32 %v4086, 1.442695
    %v4089 = vpow.pop %v4088
    %v4090 = vmul.f32 %v4087, 1.442695
    %v4091 = vpow.pop %v4090
    %v4093 = vsel %vm742, %v4089, 0
    %v4096 = vsel %vm742, %v4091, 0
    %4098 = vmatprep.subr.mxu0 0.0
    %4099 = vmatpush1.msra.mxu0 %v106
    %4100 = vmatprep.subr.mxu0 0.0
    %4101 = vmatpush1.msra.mxu0 %v107
    %4102 = vmatprep.subr.mxu0 0.0
    %4103 = vmatpush1.msra.mxu0 %v108
    %4104 = vmatprep.subr.mxu0 0.0
    %4105 = vmatpush1.msra.mxu0 %v109
    %4106 = vmatprep.subr.mxu0 0.0
    %4107 = vmatpush1.msra.mxu0 %v110
    %4108 = vmatprep.subr.mxu0 0.0
    %4109 = vmatpush1.msra.mxu0 %v111
    %4110 = vmatprep.subr.mxu0 0.0
    %4111 = vmatpush1.msra.mxu0 %v112
    %4112 = vmatprep.subr.mxu0 0.0
    %4113 = vmatpush1.msra.mxu0 %v113
    %4114 = vmatprep.subr.mxu0 0.0
    %4115 = vmatpush1.msra.mxu0 0.0
    %4116 = vmatprep.subr.mxu0 0.0
    %4117 = vmatpush1.msra.mxu0 0.0
    %4118 = vmatprep.subr.mxu0 0.0
    %4119 = vmatpush1.msra.mxu0 0.0
    %4120 = vmatprep.subr.mxu0 0.0
    %4121 = vmatpush1.msra.mxu0 0.0
    %4122 = vmatprep.subr.mxu0 0.0
    %4123 = vmatpush1.msra.mxu0 0.0
    %4124 = vmatprep.subr.mxu0 0.0
    %4125 = vmatpush1.msra.mxu0 0.0
    %4126 = vmatprep.subr.mxu0 0.0
    %4127 = vmatpush1.msra.mxu0 0.0
    %4128 = vmatprep.subr.mxu0 0.0
    %4129 = vmatpush1.msra.mxu0 0.0
    %4130 = vmatprep.subr.mxu0 0.0
    %4131 = vmatpush1.msra.mxu0 0.0
    %4132 = vmatprep.subr.mxu0 0.0
    %4133 = vmatpush1.msra.mxu0 0.0
    %4134 = vmatprep.subr.mxu0 0.0
    %4135 = vmatpush1.msra.mxu0 0.0
    %4136 = vmatprep.subr.mxu0 0.0
    %4137 = vmatpush1.msra.mxu0 0.0
    %4138 = vmatprep.subr.mxu0 0.0
    %4139 = vmatpush1.msra.mxu0 0.0
    %4140 = vmatprep.subr.mxu0 0.0
    %4141 = vmatpush1.msra.mxu0 0.0
    %4142 = vmatprep.subr.mxu0 0.0
    %4143 = vmatpush1.msra.mxu0 0.0
    %4144 = vmatprep.subr.mxu0 0.0
    %4145 = vmatpush1.msra.mxu0 0.0
    %4146 = vmatprep.subr.mxu0 0.0
    %4147 = vmatpush1.msra.mxu0 0.0
    %4148 = vmatprep.subr.mxu0 0.0
    %4149 = vmatpush1.msra.mxu0 0.0
    %4150 = vmatprep.subr.mxu0 0.0
    %4151 = vmatpush1.msra.mxu0 0.0
    %4152 = vmatprep.subr.mxu0 0.0
    %4153 = vmatpush1.msra.mxu0 0.0
    %4154 = vmatprep.subr.mxu0 0.0
    %4155 = vmatpush1.msra.mxu0 0.0
    %4156 = vmatprep.subr.mxu0 0.0
    %4157 = vmatpush1.msra.mxu0 0.0
    %4158 = vmatprep.subr.mxu0 0.0
    %4159 = vmatpush1.msra.mxu0 0.0
    %4160 = vmatprep.subr.mxu0 0.0
    %4161 = vmatpush1.msra.mxu0 0.0
    %4162 = vmatprep.mubr.f32.mxu0 0.0
    %4163 = vmatmul.mubr.f32.gmra.mrb[0].mxu0 %v4093
    %v4164 = vpop.f32.mrb[0].mxu0
    %v4165 = vadd.f32 0.0, %v4164
    %v4166 = vpop.f32.mrb[0].mxu0
    %4167 = vmatprep.mubr.f32.mxu0 0.0
    %4168 = vmatmul.mubr.f32.gmra.mrb[0].mxu0 %v4096
    %v4169 = vpop.f32.mrb[0].mxu0
    %v4170 = vadd.f32 0.0, %v4169
    %v4171 = vpop.f32.mrb[0].mxu0
    %4172 = vdwg.mxu0
    %v4173 = vrcp.pop %v4165
    %v4174 = vrcp.pop %v4170
    %v4175 = vmul.f32 %v4089, %v4173
    %v4176 = vmul.f32 %v4091, %v4174
    %v4178 = vsel %vm742, %v4175, 0
    %v4181 = vsel %vm742, %v4176, 0
    %4183 = vmatprep.subr.mxu0 0.0
    %4184 = vmatpush1.msra.mxu0 %v3967
    %4185 = vmatprep.subr.mxu0 0.0
    %4186 = vmatpush1.msra.mxu0 %v3968
    %4187 = vmatprep.subr.mxu0 0.0
    %4188 = vmatpush1.msra.mxu0 %v3969
    %4189 = vmatprep.subr.mxu0 0.0
    %4190 = vmatpush1.msra.mxu0 %v3970
    %4191 = vmatprep.subr.mxu0 0.0
    %4192 = vmatpush1.msra.mxu0 %v3971
    %4193 = vmatprep.subr.mxu0 0.0
    %4194 = vmatpush1.msra.mxu0 %v3972
    %4195 = vmatprep.subr.mxu0 0.0
    %4196 = vmatpush1.msra.mxu0 %v3973
    %4197 = vmatprep.subr.mxu0 0.0
    %4198 = vmatpush1.msra.mxu0 %v3974
    %4199 = vmatprep.subr.mxu0 0.0
    %4200 = vmatpush1.msra.mxu0 0.0
    %4201 = vmatprep.subr.mxu0 0.0
    %4202 = vmatpush1.msra.mxu0 0.0
    %4203 = vmatprep.subr.mxu0 0.0
    %4204 = vmatpush1.msra.mxu0 0.0
    %4205 = vmatprep.subr.mxu0 0.0
    %4206 = vmatpush1.msra.mxu0 0.0
    %4207 = vmatprep.subr.mxu0 0.0
    %4208 = vmatpush1.msra.mxu0 0.0
    %4209 = vmatprep.subr.mxu0 0.0
    %4210 = vmatpush1.msra.mxu0 0.0
    %4211 = vmatprep.subr.mxu0 0.0
    %4212 = vmatpush1.msra.mxu0 0.0
    %4213 = vmatprep.subr.mxu0 0.0
    %4214 = vmatpush1.msra.mxu0 0.0
    %4215 = vmatprep.subr.mxu0 0.0
    %4216 = vmatpush1.msra.mxu0 0.0
    %4217 = vmatprep.subr.mxu0 0.0
    %4218 = vmatpush1.msra.mxu0 0.0
    %4219 = vmatprep.subr.mxu0 0.0
    %4220 = vmatpush1.msra.mxu0 0.0
    %4221 = vmatprep.subr.mxu0 0.0
    %4222 = vmatpush1.msra.mxu0 0.0
    %4223 = vmatprep.subr.mxu0 0.0
    %4224 = vmatpush1.msra.mxu0 0.0
    %4225 = vmatprep.subr.mxu0 0.0
    %4226 = vmatpush1.msra.mxu0 0.0
    %4227 = vmatprep.subr.mxu0 0.0
    %4228 = vmatpush1.msra.mxu0 0.0
    %4229 = vmatprep.subr.mxu0 0.0
    %4230 = vmatpush1.msra.mxu0 0.0
    %4231 = vmatprep.subr.mxu0 0.0
    %4232 = vmatpush1.msra.mxu0 0.0
    %4233 = vmatprep.subr.mxu0 0.0
    %4234 = vmatpush1.msra.mxu0 0.0
    %4235 = vmatprep.subr.mxu0 0.0
    %4236 = vmatpush1.msra.mxu0 0.0
    %4237 = vmatprep.subr.mxu0 0.0
    %4238 = vmatpush1.msra.mxu0 0.0
    %4239 = vmatprep.subr.mxu0 0.0
    %4240 = vmatpush1.msra.mxu0 0.0
    %4241 = vmatprep.subr.mxu0 0.0
    %4242 = vmatpush1.msra.mxu0 0.0
    %4243 = vmatprep.subr.mxu0 0.0
    %4244 = vmatpush1.msra.mxu0 0.0
    %4245 = vmatprep.subr.mxu0 0.0
    %4246 = vmatpush1.msra.mxu0 0.0
    %4247 = vmatprep.mubr.f32.mxu0 0.0
    %4248 = vmatmul.mubr.f32.gmra.mrb[0].mxu0 %v4178
    %v4249 = vpop.f32.mrb[0].mxu0
    %v4250 = vadd.f32 0.0, %v4249
    %v4251 = vpop.f32.mrb[0].mxu0
    %4252 = vmatprep.mubr.f32.mxu0 0.0
    %4253 = vmatmul.mubr.f32.gmra.mrb[0].mxu0 %v4181
    %v4254 = vpop.f32.mrb[0].mxu0
    %v4255 = vadd.f32 0.0, %v4254
    %v4256 = vpop.f32.mrb[0].mxu0
    %4257 = vdwg.mxu0
    %s4258 = scalar_lea.vmem %s4, 96
    %v4259 = vld [vmem:[%s4258] sm:$0xff]
    %v4260 = vld [vmem:[%s4258 + $0x8] sm:$0xff]
    %v4261 = vld [vmem:[%s4258 + $0x10] sm:$0xff]
    %v4262 = vld [vmem:[%s4258 + $0x18] sm:$0xff]
    %v4263 = vlaneseq
    %v4264 = vshrl.u32 %v4263, 7
    %v4265 = vsub.s32 3, %v4264
    %v4266 = vrot.slane %v3510, %v4265
    %v4268 = vsel %vm159, %v4250, 0
    %v4271 = vsel %vm159, %v4255, 0
    %4273 = vmatprep.subr.mxu0 0.0
    %4274 = vmatpush1.msra.mxu0 %v4259
    %4275 = vmatprep.subr.mxu0 0.0
    %4276 = vmatpush1.msra.mxu0 %v4260
    %4277 = vmatprep.subr.mxu0 0.0
    %4278 = vmatpush1.msra.mxu0 %v4261
    %4279 = vmatprep.subr.mxu0 0.0
    %4280 = vmatpush1.msra.mxu0 %v4262
    %4281 = vmatprep.subr.mxu0 0.0
    %4282 = vmatpush1.msra.mxu0 0.0
    %4283 = vmatprep.subr.mxu0 0.0
    %4284 = vmatpush1.msra.mxu0 0.0
    %4285 = vmatprep.subr.mxu0 0.0
    %4286 = vmatpush1.msra.mxu0 0.0
    %4287 = vmatprep.subr.mxu0 0.0
    %4288 = vmatpush1.msra.mxu0 0.0
    %4289 = vmatprep.subr.mxu0 0.0
    %4290 = vmatpush1.msra.mxu0 0.0
    %4291 = vmatprep.subr.mxu0 0.0
    %4292 = vmatpush1.msra.mxu0 0.0
    %4293 = vmatprep.subr.mxu0 0.0
    %4294 = vmatpush1.msra.mxu0 0.0
    %4295 = vmatprep.subr.mxu0 0.0
    %4296 = vmatpush1.msra.mxu0 0.0
    %4297 = vmatprep.subr.mxu0 0.0
    %4298 = vmatpush1.msra.mxu0 0.0
    %4299 = vmatprep.subr.mxu0 0.0
    %4300 = vmatpush1.msra.mxu0 0.0
    %4301 = vmatprep.subr.mxu0 0.0
    %4302 = vmatpush1.msra.mxu0 0.0
    %4303 = vmatprep.subr.mxu0 0.0
    %4304 = vmatpush1.msra.mxu0 0.0
    %4305 = vmatprep.subr.mxu0 0.0
    %4306 = vmatpush1.msra.mxu0 0.0
    %4307 = vmatprep.subr.mxu0 0.0
    %4308 = vmatpush1.msra.mxu0 0.0
    %4309 = vmatprep.subr.mxu0 0.0
    %4310 = vmatpush1.msra.mxu0 0.0
    %4311 = vmatprep.subr.mxu0 0.0
    %4312 = vmatpush1.msra.mxu0 0.0
    %4313 = vmatprep.subr.mxu0 0.0
    %4314 = vmatpush1.msra.mxu0 0.0
    %4315 = vmatprep.subr.mxu0 0.0
    %4316 = vmatpush1.msra.mxu0 0.0
    %4317 = vmatprep.subr.mxu0 0.0
    %4318 = vmatpush1.msra.mxu0 0.0
    %4319 = vmatprep.subr.mxu0 0.0
    %4320 = vmatpush1.msra.mxu0 0.0
    %4321 = vmatprep.subr.mxu0 0.0
    %4322 = vmatpush1.msra.mxu0 0.0
    %4323 = vmatprep.subr.mxu0 0.0
    %4324 = vmatpush1.msra.mxu0 0.0
    %4325 = vmatprep.subr.mxu0 0.0
    %4326 = vmatpush1.msra.mxu0 0.0
    %4327 = vmatprep.subr.mxu0 0.0
    %4328 = vmatpush1.msra.mxu0 0.0
    %4329 = vmatprep.subr.mxu0 0.0
    %4330 = vmatpush1.msra.mxu0 0.0
    %4331 = vmatprep.subr.mxu0 0.0
    %4332 = vmatpush1.msra.mxu0 0.0
    %4333 = vmatprep.subr.mxu0 0.0
    %4334 = vmatpush1.msra.mxu0 0.0
    %4335 = vmatprep.subr.mxu0 0.0
    %4336 = vmatpush1.msra.mxu0 0.0
    %4337 = vmatprep.mubr.f32.mxu0 0.0
    %4338 = vmatmul.mubr.f32.gmra.mrb[0].mxu0 %v4268
    %v4339 = vpop.f32.mrb[0].mxu0
    %v4340 = vadd.f32 %v4266, %v4339
    %v4341 = vpop.f32.mrb[0].mxu0
    %4342 = vmatprep.mubr.f32.mxu0 0.0
    %4343 = vmatmul.mubr.f32.gmra.mrb[0].mxu0 %v4271
    %v4344 = vpop.f32.mrb[0].mxu0
    %v4345 = vadd.f32 %v4266, %v4344
    %v4346 = vpop.f32.mrb[0].mxu0
    %4347 = vdwg.mxu0
    %v4348 = vadd.f32 %v3507, %v4340
    %v4349 = vadd.f32 %v3508, %v4345
    %v4350 = vsel %vm159, %v4348, 0.0
    %4351 = vadd.xlane.f32.xlu0 %v4350
    %v4352 = vpop.xlane.xlu0 %4351
    %v4353 = vsel %vm159, %v4349, 0.0
    %4354 = vadd.xlane.f32.xlu0 %v4353
    %v4355 = vpop.xlane.xlu0 %4354
    %v4356 = vmul.f32 %v4352, %v1018
    %v4357 = vmul.f32 %v4355, %v1018
    %v4358 = vmul.f32 %v4348, %v4348
    %v4359 = vmul.f32 %v4349, %v4349
    %v4360 = vsel %vm159, %v4358, 0.0
    %4361 = vadd.xlane.f32.xlu0 %v4360
    %v4362 = vpop.xlane.xlu0 %4361
    %v4363 = vsel %vm159, %v4359, 0.0
    %4364 = vadd.xlane.f32.xlu0 %v4363
    %v4365 = vpop.xlane.xlu0 %4364
    %v4366 = vmul.f32 %v4362, %v1018
    %v4367 = vmul.f32 %v4365, %v1018
    %v4368 = vmul.f32 %v4356, %v4356
    %v4369 = vmul.f32 %v4357, %v4357
    %v4370 = vsub.f32 %v4366, %v4368
    %v4371 = vsub.f32 %v4367, %v4369
    %v4372 = vsub.f32 %v4348, %v4356
    %v4373 = vsub.f32 %v4349, %v4357
    %v4374 = vadd.f32 %v4370, 1e-05
    %v4375 = vadd.f32 %v4371, 1e-05
    %v4376 = vrsqrt.pop %v4374
    %v4377 = vrsqrt.pop %v4375
    %v4378 = vmul.f32 %v4372, %v4376
    %v4379 = vmul.f32 %v4373, %v4377
    %v4380 = vlaneseq
    %v4381 = vshrl.u32 %v4380, 7
    %v4382 = vsub.s32 6, %v4381
    %v4383 = vrot.slane %v3510, %v4382
    %v4384 = vmul.f32 %v4378, %v4383
    %v4385 = vmul.f32 %v4379, %v4383
    %v4386 = vlaneseq
    %v4387 = vshrl.u32 %v4386, 7
    %v4388 = vsub.s32 7, %v4387
    %v4389 = vrot.slane %v3510, %v4388
    %v4390 = vadd.f32 %v4384, %v4389
    %v4391 = vadd.f32 %v4385, %v4389
    %s4392 = scalar_lea.vmem [#allocation2], 96
    %v4393 = vld [vmem:[%s4392] sm:$0xff]
    %v4394 = vld [vmem:[%s4392 + $0x8] sm:$0xff]
    %v4395 = vld [vmem:[%s4392 + $0x10] sm:$0xff]
    %v4396 = vld [vmem:[%s4392 + $0x18] sm:$0xff]
    %v4397 = vlaneseq
    %v4398 = vshrl.u32 %v4397, 7
    %v4399 = vsub.s32 4, %v4398
    %v4400 = vrot.slane %v3510, %v4399
    %v4402 = vsel %vm159, %v4390, 0
    %v4405 = vsel %vm159, %v4391, 0
    %4407 = vmatprep.subr.mxu0 0.0
    %4408 = vmatpush1.msra.mxu0 %v4393
    %4409 = vmatprep.subr.mxu0 0.0
    %4410 = vmatpush1.msra.mxu0 %v4394
    %4411 = vmatprep.subr.mxu0 0.0
    %4412 = vmatpush1.msra.mxu0 %v4395
    %4413 = vmatprep.subr.mxu0 0.0
    %4414 = vmatpush1.msra.mxu0 %v4396
    %4415 = vmatprep.subr.mxu0 0.0
    %4416 = vmatpush1.msra.mxu0 0.0
    %4417 = vmatprep.subr.mxu0 0.0
    %4418 = vmatpush1.msra.mxu0 0.0
    %4419 = vmatprep.subr.mxu0 0.0
    %4420 = vmatpush1.msra.mxu0 0.0
    %4421 = vmatprep.subr.mxu0 0.0
    %4422 = vmatpush1.msra.mxu0 0.0
    %4423 = vmatprep.subr.mxu0 0.0
    %4424 = vmatpush1.msra.mxu0 0.0
    %4425 = vmatprep.subr.mxu0 0.0
    %4426 = vmatpush1.msra.mxu0 0.0
    %4427 = vmatprep.subr.mxu0 0.0
    %4428 = vmatpush1.msra.mxu0 0.0
    %4429 = vmatprep.subr.mxu0 0.0
    %4430 = vmatpush1.msra.mxu0 0.0
    %4431 = vmatprep.subr.mxu0 0.0
    %4432 = vmatpush1.msra.mxu0 0.0
    %4433 = vmatprep.subr.mxu0 0.0
    %4434 = vmatpush1.msra.mxu0 0.0
    %4435 = vmatprep.subr.mxu0 0.0
    %4436 = vmatpush1.msra.mxu0 0.0
    %4437 = vmatprep.subr.mxu0 0.0
    %4438 = vmatpush1.msra.mxu0 0.0
    %4439 = vmatprep.subr.mxu0 0.0
    %4440 = vmatpush1.msra.mxu0 0.0
    %4441 = vmatprep.subr.mxu0 0.0
    %4442 = vmatpush1.msra.mxu0 0.0
    %4443 = vmatprep.subr.mxu0 0.0
    %4444 = vmatpush1.msra.mxu0 0.0
    %4445 = vmatprep.subr.mxu0 0.0
    %4446 = vmatpush1.msra.mxu0 0.0
    %4447 = vmatprep.subr.mxu0 0.0
    %4448 = vmatpush1.msra.mxu0 0.0
    %4449 = vmatprep.subr.mxu0 0.0
    %4450 = vmatpush1.msra.mxu0 0.0
    %4451 = vmatprep.subr.mxu0 0.0
    %4452 = vmatpush1.msra.mxu0 0.0
    %4453 = vmatprep.subr.mxu0 0.0
    %4454 = vmatpush1.msra.mxu0 0.0
    %4455 = vmatprep.subr.mxu0 0.0
    %4456 = vmatpush1.msra.mxu0 0.0
    %4457 = vmatprep.subr.mxu0 0.0
    %4458 = vmatpush1.msra.mxu0 0.0
    %4459 = vmatprep.subr.mxu0 0.0
    %4460 = vmatpush1.msra.mxu0 0.0
    %4461 = vmatprep.subr.mxu0 0.0
    %4462 = vmatpush1.msra.mxu0 0.0
    %4463 = vmatprep.subr.mxu0 0.0
    %4464 = vmatpush1.msra.mxu0 0.0
    %4465 = vmatprep.subr.mxu0 0.0
    %4466 = vmatpush1.msra.mxu0 0.0
    %4467 = vmatprep.subr.mxu0 0.0
    %4468 = vmatpush1.msra.mxu0 0.0
    %4469 = vmatprep.subr.mxu0 0.0
    %4470 = vmatpush1.msra.mxu0 0.0
    %4471 = vmatprep.mubr.f32.mxu0 0.0
    %4472 = vmatmul.mubr.f32.gmra.mrb[0].mxu0 %v4402
    %v4473 = vpop.f32.mrb[0].mxu0
    %v4474 = vadd.f32 %v4400, %v4473
    %v4475 = vpop.f32.mrb[0].mxu0
    %4476 = vmatprep.mubr.f32.mxu0 0.0
    %4477 = vmatmul.mubr.f32.gmra.mrb[0].mxu0 %v4405
    %v4478 = vpop.f32.mrb[0].mxu0
    %v4479 = vadd.f32 %v4400, %v4478
    %v4480 = vpop.f32.mrb[0].mxu0
    %4481 = vdwg.mxu0
    %v4482 = vmax.f32 %v4474, 0.0
    %v4483 = vmax.f32 %v4479, 0.0
    %s4484 = scalar_lea.vmem %s6, 192
    %v4485 = vld [vmem:[%s4484] sm:$0xff]
    %v4486 = vld [vmem:[%s4484 + $0x8] sm:$0xff]
    %v4487 = vld [vmem:[%s4484 + $0x10] sm:$0xff]
    %v4488 = vld [vmem:[%s4484 + $0x18] sm:$0xff]
    %v4489 = vld [vmem:[%s4484 + $0x20] sm:$0xff]
    %v4490 = vld [vmem:[%s4484 + $0x28] sm:$0xff]
    %v4491 = vld [vmem:[%s4484 + $0x30] sm:$0xff]
    %v4492 = vld [vmem:[%s4484 + $0x38] sm:$0xff]
    %v4493 = vlaneseq
    %v4494 = vshrl.u32 %v4493, 7
    %v4495 = vsub.s32 5, %v4494
    %v4496 = vrot.slane %v3510, %v4495
    %v4498 = vsel %vm742, %v4482, 0
    %v4501 = vsel %vm742, %v4483, 0
    %4503 = vmatprep.subr.mxu0 0.0
    %4504 = vmatpush1.msra.mxu0 %v4485
    %4505 = vmatprep.subr.mxu0 0.0
    %4506 = vmatpush1.msra.mxu0 %v4486
    %4507 = vmatprep.subr.mxu0 0.0
    %4508 = vmatpush1.msra.mxu0 %v4487
    %4509 = vmatprep.subr.mxu0 0.0
    %4510 = vmatpush1.msra.mxu0 %v4488
    %4511 = vmatprep.subr.mxu0 0.0
    %4512 = vmatpush1.msra.mxu0 %v4489
    %4513 = vmatprep.subr.mxu0 0.0
    %4514 = vmatpush1.msra.mxu0 %v4490
    %4515 = vmatprep.subr.mxu0 0.0
    %4516 = vmatpush1.msra.mxu0 %v4491
    %4517 = vmatprep.subr.mxu0 0.0
    %4518 = vmatpush1.msra.mxu0 %v4492
    %4519 = vmatprep.subr.mxu0 0.0
    %4520 = vmatpush1.msra.mxu0 0.0
    %4521 = vmatprep.subr.mxu0 0.0
    %4522 = vmatpush1.msra.mxu0 0.0
    %4523 = vmatprep.subr.mxu0 0.0
    %4524 = vmatpush1.msra.mxu0 0.0
    %4525 = vmatprep.subr.mxu0 0.0
    %4526 = vmatpush1.msra.mxu0 0.0
    %4527 = vmatprep.subr.mxu0 0.0
    %4528 = vmatpush1.msra.mxu0 0.0
    %4529 = vmatprep.subr.mxu0 0.0
    %4530 = vmatpush1.msra.mxu0 0.0
    %4531 = vmatprep.subr.mxu0 0.0
    %4532 = vmatpush1.msra.mxu0 0.0
    %4533 = vmatprep.subr.mxu0 0.0
    %4534 = vmatpush1.msra.mxu0 0.0
    %4535 = vmatprep.subr.mxu0 0.0
    %4536 = vmatpush1.msra.mxu0 0.0
    %4537 = vmatprep.subr.mxu0 0.0
    %4538 = vmatpush1.msra.mxu0 0.0
    %4539 = vmatprep.subr.mxu0 0.0
    %4540 = vmatpush1.msra.mxu0 0.0
    %4541 = vmatprep.subr.mxu0 0.0
    %4542 = vmatpush1.msra.mxu0 0.0
    %4543 = vmatprep.subr.mxu0 0.0
    %4544 = vmatpush1.msra.mxu0 0.0
    %4545 = vmatprep.subr.mxu0 0.0
    %4546 = vmatpush1.msra.mxu0 0.0
    %4547 = vmatprep.subr.mxu0 0.0
    %4548 = vmatpush1.msra.mxu0 0.0
    %4549 = vmatprep.subr.mxu0 0.0
    %4550 = vmatpush1.msra.mxu0 0.0
    %4551 = vmatprep.subr.mxu0 0.0
    %4552 = vmatpush1.msra.mxu0 0.0
    %4553 = vmatprep.subr.mxu0 0.0
    %4554 = vmatpush1.msra.mxu0 0.0
    %4555 = vmatprep.subr.mxu0 0.0
    %4556 = vmatpush1.msra.mxu0 0.0
    %4557 = vmatprep.subr.mxu0 0.0
    %4558 = vmatpush1.msra.mxu0 0.0
    %4559 = vmatprep.subr.mxu0 0.0
    %4560 = vmatpush1.msra.mxu0 0.0
    %4561 = vmatprep.subr.mxu0 0.0
    %4562 = vmatpush1.msra.mxu0 0.0
    %4563 = vmatprep.subr.mxu0 0.0
    %4564 = vmatpush1.msra.mxu0 0.0
    %4565 = vmatprep.subr.mxu0 0.0
    %4566 = vmatpush1.msra.mxu0 0.0
    %4567 = vmatprep.mubr.f32.mxu0 0.0
    %4568 = vmatmul.mubr.f32.gmra.mrb[0].mxu0 %v4498
    %v4569 = vpop.f32.mrb[0].mxu0
    %v4570 = vadd.f32 %v4496, %v4569
    %v4571 = vpop.f32.mrb[0].mxu0
    %4572 = vmatprep.mubr.f32.mxu0 0.0
    %4573 = vmatmul.mubr.f32.gmra.mrb[0].mxu0 %v4501
    %v4574 = vpop.f32.mrb[0].mxu0
    %v4575 = vadd.f32 %v4496, %v4574
    %v4576 = vpop.f32.mrb[0].mxu0
    %4577 = vdwg.mxu0
    %v4578 = vadd.f32 %v4390, %v4570
    %v4579 = vadd.f32 %v4391, %v4575
    %v4580 = vsel %vm159, %v4578, 0.0
    %4581 = vadd.xlane.f32.xlu0 %v4580
    %v4582 = vpop.xlane.xlu0 %4581
    %v4583 = vsel %vm159, %v4579, 0.0
    %4584 = vadd.xlane.f32.xlu0 %v4583
    %v4585 = vpop.xlane.xlu0 %4584
    %v4586 = vmul.f32 %v4582, %v1018
    %v4587 = vmul.f32 %v4585, %v1018
    %v4588 = vmul.f32 %v4578, %v4578
    %v4589 = vmul.f32 %v4579, %v4579
    %v4590 = vsel %vm159, %v4588, 0.0
    %4591 = vadd.xlane.f32.xlu0 %v4590
    %v4592 = vpop.xlane.xlu0 %4591
    %v4593 = vsel %vm159, %v4589, 0.0
    %4594 = vadd.xlane.f32.xlu0 %v4593
    %v4595 = vpop.xlane.xlu0 %4594
    %v4596 = vmul.f32 %v4592, %v1018
    %v4597 = vmul.f32 %v4595, %v1018
    %v4598 = vmul.f32 %v4586, %v4586
    %v4599 = vmul.f32 %v4587, %v4587
    %v4600 = vsub.f32 %v4596, %v4598
    %v4601 = vsub.f32 %v4597, %v4599
    %v4602 = vsub.f32 %v4578, %v4586
    %v4603 = vsub.f32 %v4579, %v4587
    %v4604 = vadd.f32 %v4600, 1e-05
    %v4605 = vadd.f32 %v4601, 1e-05
    %v4606 = vrsqrt.pop %v4604
    %v4607 = vrsqrt.pop %v4605
    %v4608 = vmul.f32 %v4602, %v4606
    %v4609 = vmul.f32 %v4603, %v4607
    %v4610 = vlaneseq
    %v4611 = vshrl.u32 %v4610, 7
    %v4612 = vsub.s32 0, %v4611
    %v4613 = vrot.slane %v3511, %v4612
    %v4614 = vmul.f32 %v4608, %v4613
    %v4615 = vmul.f32 %v4609, %v4613
    %v4616 = vlaneseq
    %v4617 = vshrl.u32 %v4616, 7
    %v4618 = vsub.s32 1, %v4617
    %v4619 = vrot.slane %v3511, %v4618
    %v4620 = vadd.f32 %v4614, %v4619
    %v4621 = vadd.f32 %v4615, %v4619
    %v4623 = vsel %vm241, %v114, 0
    %4625 = vmatprep.subr.mxu0 0.0
    %4626 = vmatpush1.msra.mxu0 %v4620
    %4627 = vmatprep.subr.mxu0 0.0
    %4628 = vmatpush1.msra.mxu0 %v4621
    %4629 = vmatprep.subr.mxu0 0.0
    %4630 = vmatpush1.msra.mxu0 0.0
    %4631 = vmatprep.subr.mxu0 0.0
    %4632 = vmatpush1.msra.mxu0 0.0
    %4633 = vmatprep.subr.mxu0 0.0
    %4634 = vmatpush1.msra.mxu0 0.0
    %4635 = vmatprep.subr.mxu0 0.0
    %4636 = vmatpush1.msra.mxu0 0.0
    %4637 = vmatprep.subr.mxu0 0.0
    %4638 = vmatpush1.msra.mxu0 0.0
    %4639 = vmatprep.subr.mxu0 0.0
    %4640 = vmatpush1.msra.mxu0 0.0
    %4641 = vmatprep.subr.mxu0 0.0
    %4642 = vmatpush1.msra.mxu0 0.0
    %4643 = vmatprep.subr.mxu0 0.0
    %4644 = vmatpush1.msra.mxu0 0.0
    %4645 = vmatprep.subr.mxu0 0.0
    %4646 = vmatpush1.msra.mxu0 0.0
    %4647 = vmatprep.subr.mxu0 0.0
    %4648 = vmatpush1.msra.mxu0 0.0
    %4649 = vmatprep.subr.mxu0 0.0
    %4650 = vmatpush1.msra.mxu0 0.0
    %4651 = vmatprep.subr.mxu0 0.0
    %4652 = vmatpush1.msra.mxu0 0.0
    %4653 = vmatprep.subr.mxu0 0.0
    %4654 = vmatpush1.msra.mxu0 0.0
    %4655 = vmatprep.subr.mxu0 0.0
    %4656 = vmatpush1.msra.mxu0 0.0
    %4657 = vmatprep.subr.mxu0 0.0
    %4658 = vmatpush1.msra.mxu0 0.0
    %4659 = vmatprep.subr.mxu0 0.0
    %4660 = vmatpush1.msra.mxu0 0.0
    %4661 = vmatprep.subr.mxu0 0.0
    %4662 = vmatpush1.msra.mxu0 0.0
    %4663 = vmatprep.subr.mxu0 0.0
    %4664 = vmatpush1.msra.mxu0 0.0
    %4665 = vmatprep.subr.mxu0 0.0
    %4666 = vmatpush1.msra.mxu0 0.0
    %4667 = vmatprep.subr.mxu0 0.0
    %4668 = vmatpush1.msra.mxu0 0.0
    %4669 = vmatprep.subr.mxu0 0.0
    %4670 = vmatpush1.msra.mxu0 0.0
    %4671 = vmatprep.subr.mxu0 0.0
    %4672 = vmatpush1.msra.mxu0 0.0
    %4673 = vmatprep.subr.mxu0 0.0
    %4674 = vmatpush1.msra.mxu0 0.0
    %4675 = vmatprep.subr.mxu0 0.0
    %4676 = vmatpush1.msra.mxu0 0.0
    %4677 = vmatprep.subr.mxu0 0.0
    %4678 = vmatpush1.msra.mxu0 0.0
    %4679 = vmatprep.subr.mxu0 0.0
    %4680 = vmatpush1.msra.mxu0 0.0
    %4681 = vmatprep.subr.mxu0 0.0
    %4682 = vmatpush1.msra.mxu0 0.0
    %4683 = vmatprep.subr.mxu0 0.0
    %4684 = vmatpush1.msra.mxu0 0.0
    %4685 = vmatprep.subr.mxu0 0.0
    %4686 = vmatpush1.msra.mxu0 0.0
    %4687 = vmatprep.subr.mxu0 0.0
    %4688 = vmatpush1.msra.mxu0 0.0
    %4689 = vmatprep.mubr.f32.mxu0 0.0
    %4690 = vmatmul.mubr.f32.gmra.mrb[0].mxu0 %v4623
    %v4691 = vpop.f32.mrb[0].mxu0
    %v4692 = vadd.f32 0.0, %v4691
    %v4693 = vpop.f32.mrb[0].mxu0
    %4694 = vdwg.mxu0
    %v4695 = vlaneseq
    %v4696 = vshrl.u32 %v4695, 7
    %v4697 = vsub.s32 0, %v4696
    %v4698 = vrot.slane %v123, %v4697
    %v4699 = vlaneseq
    %v4700 = vshrl.u32 %v4699, 7
    %v4701 = vsub.s32 0, %v4700
    %v4702 = vrot.slane %v124, %v4701
    %v4704 = vsel %vm159, %v4692, 0
    %4706 = vmatprep.subr.mxu0 %v116
    %4707 = vmatpush1.msra.mxu0 %v115
    %4708 = vmatprep.subr.mxu0 %v118
    %4709 = vmatpush1.msra.mxu0 %v117
    %4710 = vmatprep.subr.mxu0 %v120
    %4711 = vmatpush1.msra.mxu0 %v119
    %4712 = vmatprep.subr.mxu0 %v122
    %4713 = vmatpush1.msra.mxu0 %v121
    %4714 = vmatprep.subr.mxu0 0.0
    %4715 = vmatpush1.msra.mxu0 0.0
    %4716 = vmatprep.subr.mxu0 0.0
    %4717 = vmatpush1.msra.mxu0 0.0
    %4718 = vmatprep.subr.mxu0 0.0
    %4719 = vmatpush1.msra.mxu0 0.0
    %4720 = vmatprep.subr.mxu0 0.0
    %4721 = vmatpush1.msra.mxu0 0.0
    %4722 = vmatprep.subr.mxu0 0.0
    %4723 = vmatpush1.msra.mxu0 0.0
    %4724 = vmatprep.subr.mxu0 0.0
    %4725 = vmatpush1.msra.mxu0 0.0
    %4726 = vmatprep.subr.mxu0 0.0
    %4727 = vmatpush1.msra.mxu0 0.0
    %4728 = vmatprep.subr.mxu0 0.0
    %4729 = vmatpush1.msra.mxu0 0.0
    %4730 = vmatprep.subr.mxu0 0.0
    %4731 = vmatpush1.msra.mxu0 0.0
    %4732 = vmatprep.subr.mxu0 0.0
    %4733 = vmatpush1.msra.mxu0 0.0
    %4734 = vmatprep.subr.mxu0 0.0
    %4735 = vmatpush1.msra.mxu0 0.0
    %4736 = vmatprep.subr.mxu0 0.0
    %4737 = vmatpush1.msra.mxu0 0.0
    %4738 = vmatprep.subr.mxu0 0.0
    %4739 = vmatpush1.msra.mxu0 0.0
    %4740 = vmatprep.subr.mxu0 0.0
    %4741 = vmatpush1.msra.mxu0 0.0
    %4742 = vmatprep.subr.mxu0 0.0
    %4743 = vmatpush1.msra.mxu0 0.0
    %4744 = vmatprep.subr.mxu0 0.0
    %4745 = vmatpush1.msra.mxu0 0.0
    %4746 = vmatprep.subr.mxu0 0.0
    %4747 = vmatpush1.msra.mxu0 0.0
    %4748 = vmatprep.subr.mxu0 0.0
    %4749 = vmatpush1.msra.mxu0 0.0
    %4750 = vmatprep.subr.mxu0 0.0
    %4751 = vmatpush1.msra.mxu0 0.0
    %4752 = vmatprep.subr.mxu0 0.0
    %4753 = vmatpush1.msra.mxu0 0.0
    %4754 = vmatprep.subr.mxu0 0.0
    %4755 = vmatpush1.msra.mxu0 0.0
    %4756 = vmatprep.subr.mxu0 0.0
    %4757 = vmatpush1.msra.mxu0 0.0
    %4758 = vmatprep.subr.mxu0 0.0
    %4759 = vmatpush1.msra.mxu0 0.0
    %4760 = vmatprep.subr.mxu0 0.0
    %4761 = vmatpush1.msra.mxu0 0.0
    %4762 = vmatprep.subr.mxu0 0.0
    %4763 = vmatpush1.msra.mxu0 0.0
    %4764 = vmatprep.subr.mxu0 0.0
    %4765 = vmatpush1.msra.mxu0 0.0
    %4766 = vmatprep.subr.mxu0 0.0
    %4767 = vmatpush1.msra.mxu0 0.0
    %4768 = vmatprep.subr.mxu0 0.0
    %4769 = vmatpush1.msra.mxu0 0.0
    %4770 = vmatprep.mubr.f32.mxu0 0.0
    %4771 = vmatmul.mubr.f32.gmra.mrb[0].mxu0 %v4704
    %v4772 = vpop.f32.mrb[0].mxu0
    %v4773 = vadd.f32 %v4698, %v4772
    %v4774 = vpop.f32.mrb[0].mxu0
    %v4775 = vadd.f32 %v4702, %v4774
    %4776 = vdwg.mxu0
    %v4777 = vmax.f32 %v4773, 0.0
    %v4778 = vmax.f32 %v4775, 0.0
    %v4779 = vlaneseq
    %v4780 = vshrl.u32 %v4779, 7
    %v4781 = vsub.s32 1, %v4780
    %v4782 = vrot.slane %v123, %v4781
    %v4783 = vlaneseq
    %v4784 = vshrl.u32 %v4783, 7
    %v4785 = vsub.s32 1, %v4784
    %v4786 = vrot.slane %v124, %v4785
    %v4787 = vmul.f32 %v4777, %v4782
    %v4788 = vmul.f32 %v4778, %v4786
    %vm4789 = vcmask 1041408
    %v4790 = vsel %vm4789, %v4787, 0.0
    %v4791 = vsel %vm4789, %v4788, 0.0
    %v4792 = vadd.f32 %v4790, %v4791
    %4793 = vadd.xlane.f32.xlu0 %v4792
    %v4794 = vpop.xlane.xlu0 %4793
    %v4795 = vadd.f32 %v4794, %v140
    %4797 = vrot.lane.b32.xlu0 %v4795, 96
    %v4798 = vpop.permute.xlu0 %4797
    %vm4800 = vcmask 1024
    %4801 = vst.msk [vmem:[%s14] sm:$0x3] %vm4800, %v4798
    // Predicated region
    $region70: #{tst_forward.1} parent=1 // pred_check
      _
    $region71: #{tst_forward.1} parent=1 // pred_check_branch
      %4803 = sbr.rel (0) target = $region73
    $region72: #{tst_forward.1} parent=1 // pred_region
      _
    $region73: #{tst_forward.1} parent=1 // pred_fallthru
      _
    // Predicated region
    $region74: #{tst_forward.1} parent=1 // pred_check
      _
    $region75: #{tst_forward.1} parent=1 // pred_check_branch
      %4805 = sbr.rel (0) target = $region77
    $region76: #{tst_forward.1} parent=1 // pred_region
      _
    $region77: #{tst_forward.1} parent=1 // pred_fallthru
      _
    %4806 = vsyncpa [#allocation3], 1
    %4807 = vsyncpa [#allocation5], 1

</llo_original>
